<compile_context>
chip_gen: v6e
topology: v6e:2x2x1
jax: 0.10.0
libtpu: 0.0.40
codegen_flags: <defaults>
</compile_context>

<pallas_src>
import functools
import math

import jax
import jax.numpy as jnp
from jax import lax
from jax.experimental import pallas as pl
from jax.experimental.pallas import tpu as pltpu

LANE = 128


def _round_up(x, m):
    return ((x + m - 1) // m) * m


# ----------------------------------------------------------------------------
# Pallas kernels
# ----------------------------------------------------------------------------
def _conv_pool_relu_kernel(p00_ref, p01_ref, p10_ref, p11_ref, w_ref, b_ref,
                           o_ref):
    """Fused conv-as-matmul + bias + 2x2 max-pool + ReLU.

    p??_ref : [TM, K] bf16 im2col patches of one pooling quadrant.
    w_ref   : [K, Npad] bf16 (output channels zero-padded to 128 lanes).
    b_ref   : [1, Npad] f32.
    o_ref   : [TM, Npad] bf16 pooled+ReLU'd activations (lane dense).
    """
    w = w_ref[...]
    a00 = jnp.dot(p00_ref[...], w, preferred_element_type=jnp.float32)
    a01 = jnp.dot(p01_ref[...], w, preferred_element_type=jnp.float32)
    a10 = jnp.dot(p10_ref[...], w, preferred_element_type=jnp.float32)
    a11 = jnp.dot(p11_ref[...], w, preferred_element_type=jnp.float32)
    m = jnp.maximum(jnp.maximum(a00, a01), jnp.maximum(a10, a11))
    o_ref[...] = jnp.maximum(m + b_ref[...], 0.0).astype(o_ref.dtype)


def _mlp_kernel(x_ref, w1_ref, b1_ref, w2_ref, b2_ref, o_ref):
    """Fused fc1 + ReLU + fc2 (dropout is identity in eval mode)."""
    h = jnp.dot(x_ref[...], w1_ref[...], preferred_element_type=jnp.float32)
    h = jnp.maximum(h + b1_ref[...], 0.0)
    out = jnp.dot(h.astype(w2_ref.dtype), w2_ref[...],
                  preferred_element_type=jnp.float32)
    o_ref[...] = (out + b2_ref[...]).astype(o_ref.dtype)


# ----------------------------------------------------------------------------
# Pallas wrappers (M-tiled, parallel grid)
# ----------------------------------------------------------------------------
def conv_pool_relu(quads, w, b, *, tile_m=512, out_dtype=jnp.bfloat16):
    M, K = quads[0].shape
    Kw, Npad = w.shape
    assert K == Kw and Npad % LANE == 0
    TM = min(tile_m, _round_up(M, 8))
    Mp = _round_up(M, TM)
    if Mp != M:
        quads = [jnp.pad(q, ((0, Mp - M), (0, 0))) for q in quads]

    data_spec = pl.BlockSpec((TM, K), lambda i: (i, 0))
    out = pl.pallas_call(
        _conv_pool_relu_kernel,
        out_shape=jax.ShapeDtypeStruct((Mp, Npad), out_dtype),
        grid=(Mp // TM,),
        in_specs=[data_spec, data_spec, data_spec, data_spec,
                  pl.BlockSpec((K, Npad), lambda i: (0, 0)),
                  pl.BlockSpec((1, Npad), lambda i: (0, 0))],
        out_specs=pl.BlockSpec((TM, Npad), lambda i: (i, 0)),
        compiler_params=pltpu.CompilerParams(
            dimension_semantics=("parallel",)),
    )(*quads, w, b)
    return out[:M] if Mp != M else out


def mlp(x, w1, b1, w2, b2, *, tile_m=512):
    M, K1 = x.shape
    _, N1 = w1.shape
    _, N2 = w2.shape
    TM = min(tile_m, _round_up(M, 8))
    Mp = _round_up(M, TM)
    if Mp != M:
        x = jnp.pad(x, ((0, Mp - M), (0, 0)))

    out = pl.pallas_call(
        _mlp_kernel,
        out_shape=jax.ShapeDtypeStruct((Mp, N2), jnp.float32),
        grid=(Mp // TM,),
        in_specs=[pl.BlockSpec((TM, K1), lambda i: (i, 0)),
                  pl.BlockSpec((K1, N1), lambda i: (0, 0)),
                  pl.BlockSpec((1, N1), lambda i: (0, 0)),
                  pl.BlockSpec((N1, N2), lambda i: (0, 0)),
                  pl.BlockSpec((1, N2), lambda i: (0, 0))],
        out_specs=pl.BlockSpec((TM, N2), lambda i: (i, 0)),
        compiler_params=pltpu.CompilerParams(
            dimension_semantics=("parallel",)),
    )(x, w1, b1, w2, b2)
    return out[:M] if Mp != M else out


# ----------------------------------------------------------------------------
# JAX-side glue: quadrant-grouped im2col + one-time weight preparation
# ----------------------------------------------------------------------------
def pooled_quadrant_patches(x, k):
    """x: [B, H, W, C] (NHWC).  Returns four im2col matrices, one per 2x2
    max-pool quadrant, each [B*Hp*Wp, k*k*C]; features ordered (ki, kj) outer,
    input-channel inner (matches the prepared weight matrices)."""
    B, H, W, C = x.shape
    Ho, Wo = H - k + 1, W - k + 1
    Hp, Wp = Ho // 2, Wo // 2
    quads = []
    for a in (0, 1):
        for c in (0, 1):
            taps = []
            for di in range(k):
                for dj in range(k):
                    taps.append(x[:, a + di: a + di + 2 * Hp: 2,
                                     c + dj: c + dj + 2 * Wp: 2, :])
            q = jnp.concatenate(taps, axis=-1)           # [B, Hp, Wp, k*k*C]
            quads.append(q.reshape(B * Hp * Wp, k * k * C))
    return quads, (Hp, Wp)


def prepare_params(params, num_classes):
    """One-time conversion of PyTorch-layout weights to kernel layout
    (im2col matrices, 128-lane zero padding, bf16 operands, and the NCHW
    flatten permutation folded into fc1)."""
    f32, bf16 = jnp.float32, jnp.bfloat16

    def conv_mat(w, b):
        cout, cin, kh, kw = w.shape
        n_pad = _round_up(cout, LANE)
        wm = jnp.transpose(w, (2, 3, 1, 0)).reshape(kh * kw * cin, cout)
        wm = jnp.pad(wm, ((0, 0), (0, n_pad - cout))).astype(bf16)
        bm = jnp.pad(b, (0, n_pad - cout)).astype(f32).reshape(1, n_pad)
        return wm, bm

    w1m, b1m = conv_mat(params["w_conv1"], params["b_conv1"])
    w2m, b2m = conv_mat(params["w_conv2"], params["b_conv2"])

    # fc1: PyTorch flattens [B, 20, 4, 4] channel-major; the conv2 kernel
    # output is [B, 4, 4, 128] (NHWC, channels zero-padded) flattened to
    # [B, 2048].  Fold permutation + channel padding into the fc1 weight.
    nf_out, nf_in = params["w_fc1"].shape                  # (50, 320)
    c2 = params["w_conv2"].shape[0]                        # 20
    hp2 = wp2 = int(round(math.sqrt(nf_in // c2)))         # 4
    c2_pad = _round_up(c2, LANE)                           # 128
    h_pad = _round_up(nf_out, LANE)                        # 128
    wf1 = params["w_fc1"].reshape(nf_out, c2, hp2, wp2)
    wf1 = jnp.transpose(wf1, (2, 3, 1, 0))                 # [i, j, c, out]
    wf1 = jnp.pad(wf1, ((0, 0), (0, 0),
                        (0, c2_pad - c2), (0, h_pad - nf_out)))
    wf1 = wf1.reshape(hp2 * wp2 * c2_pad, h_pad).astype(bf16)   # [2048, 128]
    bf1 = jnp.pad(params["b_fc1"],
                  (0, h_pad - nf_out)).astype(f32).reshape(1, h_pad)

    n_cls_pad = _round_up(num_classes, LANE)
    wf2 = jnp.pad(params["w_fc2"].T,
                  ((0, h_pad - nf_out),
                   (0, n_cls_pad - num_classes))).astype(bf16)  # [128, 128]
    bf2 = jnp.pad(params["b_fc2"],
                  (0, n_cls_pad - num_classes)).astype(f32).reshape(1, n_cls_pad)

    return {"conv1": (w1m, b1m), "conv2": (w2m, b2m),
            "fc": (wf1, bf1, wf2, bf2)}


# ----------------------------------------------------------------------------
# Forward pass
# ----------------------------------------------------------------------------
@functools.partial(jax.jit, static_argnames=("c_conv1", "num_classes"))
def classifier_forward(x_nchw, prep, *, c_conv1, num_classes):
    """Inference forward of the PyTorch Classifier (dropout = identity)."""
    w1m, b1m = prep["conv1"]
    w2m, b2m = prep["conv2"]
    wf1, bf1, wf2, bf2 = prep["fc"]

    # NCHW -> NHWC, bf16 activations (f32 accumulation inside the kernels).
    x = jnp.transpose(x_nchw, (0, 2, 3, 1)).astype(jnp.bfloat16)  # [B,28,28,1]
    B = x.shape[0]

    # conv1 + maxpool(2) + ReLU, fused into one Pallas call.
    q1, (hp1, wp1) = pooled_quadrant_patches(x, 5)       # 4 x [B*144, 25]
    y1 = conv_pool_relu(q1, w1m, b1m)                    # [B*144, 128] bf16

    # conv2 (Dropout2d == identity in eval) + maxpool(2) + ReLU, fused.
    y1 = y1[:, :c_conv1].reshape(B, hp1, wp1, c_conv1)   # [B,12,12,10]
    q2, (hp2, wp2) = pooled_quadrant_patches(y1, 5)      # 4 x [B*16, 250]
    y2 = conv_pool_relu(q2, w2m, b2m)                    # [B*16, 128] bf16

    # flatten (NCHW permutation folded into wf1) + fc1 + ReLU + fc2, fused.
    flat = y2.reshape(B, hp2 * wp2 * y2.shape[-1])       # [B, 2048] (free)
    logits = mlp(flat, wf1, bf1, wf2, bf2)               # [B, 128] f32
    return logits[:, :num_classes]


# ----------------------------------------------------------------------------
# Pure-JAX f32 reference and parameter init
# ----------------------------------------------------------------------------
def reference_forward(x, params):
    def conv(y, w, b):
        y = lax.conv_general_dilated(
            y, w, (1, 1), "VALID",
            dimension_numbers=("NCHW", "OIHW", "NCHW"))
        return y + b.reshape(1, -1, 1, 1)

    def pool2_relu(y):
        m = jnp.maximum(jnp.maximum(y[:, :, 0::2, 0::2], y[:, :, 0::2, 1::2]),
                        jnp.maximum(y[:, :, 1::2, 0::2], y[:, :, 1::2, 1::2]))
        return jnp.maximum(m, 0.0)

    y = pool2_relu(conv(x.astype(jnp.float32), params["w_conv1"],
                        params["b_conv1"]))
    y = pool2_relu(conv(y, params["w_conv2"], params["b_conv2"]))
    flat = y.reshape(y.shape[0], -1)
    h = jnp.maximum(flat @ params["w_fc1"].T + params["b_fc1"], 0.0)
    return h @ params["w_fc2"].T + params["b_fc2"]


def init_params(key, num_classes):
    ks = jax.random.split(key, 8)
    s = 0.05
    return {
        "w_conv1": s * jax.random.normal(ks[0], (10, 1, 5, 5), jnp.float32),
        "b_conv1": s * jax.random.normal(ks[1], (10,), jnp.float32),
        "w_conv2": s * jax.random.normal(ks[2], (20, 10, 5, 5), jnp.float32),
        "b_conv2": s * jax.random.normal(ks[3], (20,), jnp.float32),
        "w_fc1": s * jax.random.normal(ks[4], (50, 320), jnp.float32),
        "b_fc1": s * jax.random.normal(ks[5], (50,), jnp.float32),
        "w_fc2": s * jax.random.normal(ks[6], (num_classes, 50), jnp.float32),
        "b_fc2": s * jax.random.normal(ks[7], (num_classes,), jnp.float32),
    }


if __name__ == "__main__":
    num_classes = 10
    key = jax.random.PRNGKey(0)
    k_params, k_x = jax.random.split(key)

    params = init_params(k_params, num_classes)
    prep = prepare_params(params, num_classes)        # one-time weight layout
    # fc1 expects 320 = 20*4*4 features => 1-channel 28x28 input.
    x = jax.random.normal(k_x, (2, 1, 28, 28), jnp.float32)

    logits = classifier_forward(x, prep,
                                c_conv1=params["w_conv1"].shape[0],
                                num_classes=num_classes)
    logits = jax.block_until_ready(logits)

    ref = jax.block_until_ready(reference_forward(x, params))
    err = float(jnp.max(jnp.abs(logits - ref)))

    assert logits.shape == (2, num_classes)
    assert bool(jnp.all(jnp.isfinite(logits)))
    assert err < 5e-2, f"max abs error vs f32 reference too large: {err}"
    print("KERNEL_OK")
</pallas_src>

<mosaic_0001>
module attributes {stable_mosaic.version = 11 : i64} {
  func.func @_conv_pool_relu_kernel(%arg0: i32, %arg1: memref<288x25xbf16, #tpu.memory_space<vmem>>, %arg2: memref<288x25xbf16, #tpu.memory_space<vmem>>, %arg3: memref<288x25xbf16, #tpu.memory_space<vmem>>, %arg4: memref<288x25xbf16, #tpu.memory_space<vmem>>, %arg5: memref<25x128xbf16, #tpu.memory_space<vmem>>, %arg6: memref<1x128xf32, #tpu.memory_space<vmem>>, %arg7: memref<288x128xbf16, #tpu.memory_space<vmem>>) attributes {dimension_semantics = [#tpu.dimension_semantics<parallel>], iteration_bounds = array<i64: 1>, scalar_prefetch = 0 : i64, scratch_operands = 0 : i64, tpu.core_type = #tpu.core_type<tc>, window_params = [{transform_indices = @transform_0, window_bounds = array<i64: 288, 25>}, {transform_indices = @transform_1, window_bounds = array<i64: 288, 25>}, {transform_indices = @transform_2, window_bounds = array<i64: 288, 25>}, {transform_indices = @transform_3, window_bounds = array<i64: 288, 25>}, {pipeline_mode = #tpu.pipeline_mode<synchronous>, transform_indices = @transform_4, window_bounds = array<i64: 25, 128>}, {pipeline_mode = #tpu.pipeline_mode<synchronous>, transform_indices = @transform_5, window_bounds = array<i64: 1, 128>}, {transform_indices = @transform_6, window_bounds = array<i64: 288, 128>}]} {
    %c0 = arith.constant 0 : index
    %c0_0 = arith.constant 0 : index
    %0 = vector.load %arg5[%c0, %c0_0] : memref<25x128xbf16, #tpu.memory_space<vmem>>, vector<25x128xbf16>
    %c0_1 = arith.constant 0 : index
    %c0_2 = arith.constant 0 : index
    %1 = vector.load %arg1[%c0_1, %c0_2] : memref<288x25xbf16, #tpu.memory_space<vmem>>, vector<288x25xbf16>
    %cst = arith.constant dense<0.000000e+00> : vector<288x128xf32>
    %2 = tpu.matmul %1, %0, %cst {dimension_numbers = #tpu.dot_dimension_numbers<[1], [0], [0], [1], [0, 0, 1, 1], [], []>} : vector<288x25xbf16>, vector<25x128xbf16>, vector<288x128xf32> -> vector<288x128xf32>
    %c0_3 = arith.constant 0 : index
    %c0_4 = arith.constant 0 : index
    %3 = vector.load %arg2[%c0_3, %c0_4] : memref<288x25xbf16, #tpu.memory_space<vmem>>, vector<288x25xbf16>
    %cst_5 = arith.constant dense<0.000000e+00> : vector<288x128xf32>
    %4 = tpu.matmul %3, %0, %cst_5 {dimension_numbers = #tpu.dot_dimension_numbers<[1], [0], [0], [1], [0, 0, 1, 1], [], []>} : vector<288x25xbf16>, vector<25x128xbf16>, vector<288x128xf32> -> vector<288x128xf32>
    %c0_6 = arith.constant 0 : index
    %c0_7 = arith.constant 0 : index
    %5 = vector.load %arg3[%c0_6, %c0_7] : memref<288x25xbf16, #tpu.memory_space<vmem>>, vector<288x25xbf16>
    %cst_8 = arith.constant dense<0.000000e+00> : vector<288x128xf32>
    %6 = tpu.matmul %5, %0, %cst_8 {dimension_numbers = #tpu.dot_dimension_numbers<[1], [0], [0], [1], [0, 0, 1, 1], [], []>} : vector<288x25xbf16>, vector<25x128xbf16>, vector<288x128xf32> -> vector<288x128xf32>
    %c0_9 = arith.constant 0 : index
    %c0_10 = arith.constant 0 : index
    %7 = vector.load %arg4[%c0_9, %c0_10] : memref<288x25xbf16, #tpu.memory_space<vmem>>, vector<288x25xbf16>
    %cst_11 = arith.constant dense<0.000000e+00> : vector<288x128xf32>
    %8 = tpu.matmul %7, %0, %cst_11 {dimension_numbers = #tpu.dot_dimension_numbers<[1], [0], [0], [1], [0, 0, 1, 1], [], []>} : vector<288x25xbf16>, vector<25x128xbf16>, vector<288x128xf32> -> vector<288x128xf32>
    %9 = arith.maximumf %2, %4 : vector<288x128xf32>
    %10 = arith.maximumf %6, %8 : vector<288x128xf32>
    %11 = arith.maximumf %9, %10 : vector<288x128xf32>
    %c0_12 = arith.constant 0 : index
    %c0_13 = arith.constant 0 : index
    %12 = vector.load %arg6[%c0_12, %c0_13] : memref<1x128xf32, #tpu.memory_space<vmem>>, vector<1x128xf32>
    %13 = vector.broadcast %12 : vector<1x128xf32> to vector<288x128xf32>
    %14 = arith.addf %11, %13 : vector<288x128xf32>
    %cst_14 = arith.constant 0.000000e+00 : f32
    %15 = vector.broadcast %cst_14 : f32 to vector<288x128xf32>
    %16 = arith.maximumf %14, %15 : vector<288x128xf32>
    %17 = arith.truncf %16 : vector<288x128xf32> to vector<288x128xbf16>
    %c0_15 = arith.constant 0 : index
    %c0_16 = arith.constant 0 : index
    %18 = vector.load %arg7[%c0_15, %c0_16] : memref<288x128xbf16, #tpu.memory_space<vmem>>, vector<288x128xbf16>
    tpu.vector_store %arg7[%c0_15, %c0_16], %17 {strides = array<i32>} : memref<288x128xbf16, #tpu.memory_space<vmem>>, vector<288x128xbf16>,
    return
  }
  func.func @transform_0(%arg0: i32) -> (i32, i32) {
    %c0_i32 = arith.constant 0 : i32
    %c0_i32_0 = arith.constant 0 : i32
    return %arg0, %c0_i32 : i32, i32
  }
  func.func @transform_1(%arg0: i32) -> (i32, i32) {
    %c0_i32 = arith.constant 0 : i32
    %c0_i32_0 = arith.constant 0 : i32
    return %arg0, %c0_i32 : i32, i32
  }
  func.func @transform_2(%arg0: i32) -> (i32, i32) {
    %c0_i32 = arith.constant 0 : i32
    %c0_i32_0 = arith.constant 0 : i32
    return %arg0, %c0_i32 : i32, i32
  }
  func.func @transform_3(%arg0: i32) -> (i32, i32) {
    %c0_i32 = arith.constant 0 : i32
    %c0_i32_0 = arith.constant 0 : i32
    return %arg0, %c0_i32 : i32, i32
  }
  func.func @transform_4(%arg0: i32) -> (i32, i32) {
    %c0_i32 = arith.constant 0 : i32
    %c0_i32_0 = arith.constant 0 : i32
    %c0_i32_1 = arith.constant 0 : i32
    return %c0_i32, %c0_i32_0 : i32, i32
  }
  func.func @transform_5(%arg0: i32) -> (i32, i32) {
    %c0_i32 = arith.constant 0 : i32
    %c0_i32_0 = arith.constant 0 : i32
    %c0_i32_1 = arith.constant 0 : i32
    return %c0_i32, %c0_i32_0 : i32, i32
  }
  func.func @transform_6(%arg0: i32) -> (i32, i32) {
    %c0_i32 = arith.constant 0 : i32
    %c0_i32_0 = arith.constant 0 : i32
    return %arg0, %c0_i32 : i32, i32
  }
}

module attributes {stable_mosaic.version = 11 : i64} {
  func.func @_conv_pool_relu_kernel(%arg0: i32, %arg1: memref<32x250xbf16, #tpu.memory_space<vmem>>, %arg2: memref<32x250xbf16, #tpu.memory_space<vmem>>, %arg3: memref<32x250xbf16, #tpu.memory_space<vmem>>, %arg4: memref<32x250xbf16, #tpu.memory_space<vmem>>, %arg5: memref<250x128xbf16, #tpu.memory_space<vmem>>, %arg6: memref<1x128xf32, #tpu.memory_space<vmem>>, %arg7: memref<32x128xbf16, #tpu.memory_space<vmem>>) attributes {dimension_semantics = [#tpu.dimension_semantics<parallel>], iteration_bounds = array<i64: 1>, scalar_prefetch = 0 : i64, scratch_operands = 0 : i64, tpu.core_type = #tpu.core_type<tc>, window_params = [{transform_indices = @transform_0, window_bounds = array<i64: 32, 250>}, {transform_indices = @transform_1, window_bounds = array<i64: 32, 250>}, {transform_indices = @transform_2, window_bounds = array<i64: 32, 250>}, {transform_indices = @transform_3, window_bounds = array<i64: 32, 250>}, {pipeline_mode = #tpu.pipeline_mode<synchronous>, transform_indices = @transform_4, window_bounds = array<i64: 250, 128>}, {pipeline_mode = #tpu.pipeline_mode<synchronous>, transform_indices = @transform_5, window_bounds = array<i64: 1, 128>}, {transform_indices = @transform_6, window_bounds = array<i64: 32, 128>}]} {
    %c0 = arith.constant 0 : index
    %c0_0 = arith.constant 0 : index
    %0 = vector.load %arg5[%c0, %c0_0] : memref<250x128xbf16, #tpu.memory_space<vmem>>, vector<250x128xbf16>
    %c0_1 = arith.constant 0 : index
    %c0_2 = arith.constant 0 : index
    %1 = vector.load %arg1[%c0_1, %c0_2] : memref<32x250xbf16, #tpu.memory_space<vmem>>, vector<32x250xbf16>
    %cst = arith.constant dense<0.000000e+00> : vector<32x128xf32>
    %2 = tpu.matmul %1, %0, %cst {dimension_numbers = #tpu.dot_dimension_numbers<[1], [0], [0], [1], [0, 0, 1, 1], [], []>} : vector<32x250xbf16>, vector<250x128xbf16>, vector<32x128xf32> -> vector<32x128xf32>
    %c0_3 = arith.constant 0 : index
    %c0_4 = arith.constant 0 : index
    %3 = vector.load %arg2[%c0_3, %c0_4] : memref<32x250xbf16, #tpu.memory_space<vmem>>, vector<32x250xbf16>
    %cst_5 = arith.constant dense<0.000000e+00> : vector<32x128xf32>
    %4 = tpu.matmul %3, %0, %cst_5 {dimension_numbers = #tpu.dot_dimension_numbers<[1], [0], [0], [1], [0, 0, 1, 1], [], []>} : vector<32x250xbf16>, vector<250x128xbf16>, vector<32x128xf32> -> vector<32x128xf32>
    %c0_6 = arith.constant 0 : index
    %c0_7 = arith.constant 0 : index
    %5 = vector.load %arg3[%c0_6, %c0_7] : memref<32x250xbf16, #tpu.memory_space<vmem>>, vector<32x250xbf16>
    %cst_8 = arith.constant dense<0.000000e+00> : vector<32x128xf32>
    %6 = tpu.matmul %5, %0, %cst_8 {dimension_numbers = #tpu.dot_dimension_numbers<[1], [0], [0], [1], [0, 0, 1, 1], [], []>} : vector<32x250xbf16>, vector<250x128xbf16>, vector<32x128xf32> -> vector<32x128xf32>
    %c0_9 = arith.constant 0 : index
    %c0_10 = arith.constant 0 : index
    %7 = vector.load %arg4[%c0_9, %c0_10] : memref<32x250xbf16, #tpu.memory_space<vmem>>, vector<32x250xbf16>
    %cst_11 = arith.constant dense<0.000000e+00> : vector<32x128xf32>
    %8 = tpu.matmul %7, %0, %cst_11 {dimension_numbers = #tpu.dot_dimension_numbers<[1], [0], [0], [1], [0, 0, 1, 1], [], []>} : vector<32x250xbf16>, vector<250x128xbf16>, vector<32x128xf32> -> vector<32x128xf32>
    %9 = arith.maximumf %2, %4 : vector<32x128xf32>
    %10 = arith.maximumf %6, %8 : vector<32x128xf32>
    %11 = arith.maximumf %9, %10 : vector<32x128xf32>
    %c0_12 = arith.constant 0 : index
    %c0_13 = arith.constant 0 : index
    %12 = vector.load %arg6[%c0_12, %c0_13] : memref<1x128xf32, #tpu.memory_space<vmem>>, vector<1x128xf32>
    %13 = vector.broadcast %12 : vector<1x128xf32> to vector<32x128xf32>
    %14 = arith.addf %11, %13 : vector<32x128xf32>
    %cst_14 = arith.constant 0.000000e+00 : f32
    %15 = vector.broadcast %cst_14 : f32 to vector<32x128xf32>
    %16 = arith.maximumf %14, %15 : vector<32x128xf32>
    %17 = arith.truncf %16 : vector<32x128xf32> to vector<32x128xbf16>
    %c0_15 = arith.constant 0 : index
    %c0_16 = arith.constant 0 : index
    %18 = vector.load %arg7[%c0_15, %c0_16] : memref<32x128xbf16, #tpu.memory_space<vmem>>, vector<32x128xbf16>
    tpu.vector_store %arg7[%c0_15, %c0_16], %17 {strides = array<i32>} : memref<32x128xbf16, #tpu.memory_space<vmem>>, vector<32x128xbf16>,
    return
  }
  func.func @transform_0(%arg0: i32) -> (i32, i32) {
    %c0_i32 = arith.constant 0 : i32
    %c0_i32_0 = arith.constant 0 : i32
    return %arg0, %c0_i32 : i32, i32
  }
  func.func @transform_1(%arg0: i32) -> (i32, i32) {
    %c0_i32 = arith.constant 0 : i32
    %c0_i32_0 = arith.constant 0 : i32
    return %arg0, %c0_i32 : i32, i32
  }
  func.func @transform_2(%arg0: i32) -> (i32, i32) {
    %c0_i32 = arith.constant 0 : i32
    %c0_i32_0 = arith.constant 0 : i32
    return %arg0, %c0_i32 : i32, i32
  }
  func.func @transform_3(%arg0: i32) -> (i32, i32) {
    %c0_i32 = arith.constant 0 : i32
    %c0_i32_0 = arith.constant 0 : i32
    return %arg0, %c0_i32 : i32, i32
  }
  func.func @transform_4(%arg0: i32) -> (i32, i32) {
    %c0_i32 = arith.constant 0 : i32
    %c0_i32_0 = arith.constant 0 : i32
    %c0_i32_1 = arith.constant 0 : i32
    return %c0_i32, %c0_i32_0 : i32, i32
  }
  func.func @transform_5(%arg0: i32) -> (i32, i32) {
    %c0_i32 = arith.constant 0 : i32
    %c0_i32_0 = arith.constant 0 : i32
    %c0_i32_1 = arith.constant 0 : i32
    return %c0_i32, %c0_i32_0 : i32, i32
  }
  func.func @transform_6(%arg0: i32) -> (i32, i32) {
    %c0_i32 = arith.constant 0 : i32
    %c0_i32_0 = arith.constant 0 : i32
    return %arg0, %c0_i32 : i32, i32
  }
}

module attributes {stable_mosaic.version = 11 : i64} {
  func.func @_mlp_kernel(%arg0: i32, %arg1: memref<8x2048xbf16, #tpu.memory_space<vmem>>, %arg2: memref<2048x128xbf16, #tpu.memory_space<vmem>>, %arg3: memref<1x128xf32, #tpu.memory_space<vmem>>, %arg4: memref<128x128xbf16, #tpu.memory_space<vmem>>, %arg5: memref<1x128xf32, #tpu.memory_space<vmem>>, %arg6: memref<8x128xf32, #tpu.memory_space<vmem>>) attributes {dimension_semantics = [#tpu.dimension_semantics<parallel>], iteration_bounds = array<i64: 1>, scalar_prefetch = 0 : i64, scratch_operands = 0 : i64, tpu.core_type = #tpu.core_type<tc>, window_params = [{transform_indices = @transform_0, window_bounds = array<i64: 8, 2048>}, {pipeline_mode = #tpu.pipeline_mode<synchronous>, transform_indices = @transform_1, window_bounds = array<i64: 2048, 128>}, {pipeline_mode = #tpu.pipeline_mode<synchronous>, transform_indices = @transform_2, window_bounds = array<i64: 1, 128>}, {pipeline_mode = #tpu.pipeline_mode<synchronous>, transform_indices = @transform_3, window_bounds = array<i64: 128, 128>}, {pipeline_mode = #tpu.pipeline_mode<synchronous>, transform_indices = @transform_4, window_bounds = array<i64: 1, 128>}, {transform_indices = @transform_5, window_bounds = array<i64: 8, 128>}]} {
    %c0 = arith.constant 0 : index
    %c0_0 = arith.constant 0 : index
    %0 = vector.load %arg1[%c0, %c0_0] : memref<8x2048xbf16, #tpu.memory_space<vmem>>, vector<8x2048xbf16>
    %c0_1 = arith.constant 0 : index
    %c0_2 = arith.constant 0 : index
    %1 = vector.load %arg2[%c0_1, %c0_2] : memref<2048x128xbf16, #tpu.memory_space<vmem>>, vector<2048x128xbf16>
    %cst = arith.constant dense<0.000000e+00> : vector<8x128xf32>
    %2 = tpu.matmul %0, %1, %cst {dimension_numbers = #tpu.dot_dimension_numbers<[1], [0], [0], [1], [0, 0, 1, 1], [], []>} : vector<8x2048xbf16>, vector<2048x128xbf16>, vector<8x128xf32> -> vector<8x128xf32>
    %c0_3 = arith.constant 0 : index
    %c0_4 = arith.constant 0 : index
    %3 = vector.load %arg3[%c0_3, %c0_4] : memref<1x128xf32, #tpu.memory_space<vmem>>, vector<1x128xf32>
    %4 = vector.broadcast %3 : vector<1x128xf32> to vector<8x128xf32>
    %5 = arith.addf %2, %4 : vector<8x128xf32>
    %cst_5 = arith.constant 0.000000e+00 : f32
    %6 = vector.broadcast %cst_5 : f32 to vector<8x128xf32>
    %7 = arith.maximumf %5, %6 : vector<8x128xf32>
    %8 = arith.truncf %7 : vector<8x128xf32> to vector<8x128xbf16>
    %c0_6 = arith.constant 0 : index
    %c0_7 = arith.constant 0 : index
    %9 = vector.load %arg4[%c0_6, %c0_7] : memref<128x128xbf16, #tpu.memory_space<vmem>>, vector<128x128xbf16>
    %cst_8 = arith.constant dense<0.000000e+00> : vector<8x128xf32>
    %10 = tpu.matmul %8, %9, %cst_8 {dimension_numbers = #tpu.dot_dimension_numbers<[1], [0], [0], [1], [0, 0, 1, 1], [], []>} : vector<8x128xbf16>, vector<128x128xbf16>, vector<8x128xf32> -> vector<8x128xf32>
    %c0_9 = arith.constant 0 : index
    %c0_10 = arith.constant 0 : index
    %11 = vector.load %arg5[%c0_9, %c0_10] : memref<1x128xf32, #tpu.memory_space<vmem>>, vector<1x128xf32>
    %12 = vector.broadcast %11 : vector<1x128xf32> to vector<8x128xf32>
    %13 = arith.addf %10, %12 : vector<8x128xf32>
    %c0_11 = arith.constant 0 : index
    %c0_12 = arith.constant 0 : index
    %14 = vector.load %arg6[%c0_11, %c0_12] : memref<8x128xf32, #tpu.memory_space<vmem>>, vector<8x128xf32>
    tpu.vector_store %arg6[%c0_11, %c0_12], %13 {strides = array<i32>} : memref<8x128xf32, #tpu.memory_space<vmem>>, vector<8x128xf32>,
    return
  }
  func.func @transform_0(%arg0: i32) -> (i32, i32) {
    %c0_i32 = arith.constant 0 : i32
    %c0_i32_0 = arith.constant 0 : i32
    return %arg0, %c0_i32 : i32, i32
  }
  func.func @transform_1(%arg0: i32) -> (i32, i32) {
    %c0_i32 = arith.constant 0 : i32
    %c0_i32_0 = arith.constant 0 : i32
    %c0_i32_1 = arith.constant 0 : i32
    return %c0_i32, %c0_i32_0 : i32, i32
  }
  func.func @transform_2(%arg0: i32) -> (i32, i32) {
    %c0_i32 = arith.constant 0 : i32
    %c0_i32_0 = arith.constant 0 : i32
    %c0_i32_1 = arith.constant 0 : i32
    return %c0_i32, %c0_i32_0 : i32, i32
  }
  func.func @transform_3(%arg0: i32) -> (i32, i32) {
    %c0_i32 = arith.constant 0 : i32
    %c0_i32_0 = arith.constant 0 : i32
    %c0_i32_1 = arith.constant 0 : i32
    return %c0_i32, %c0_i32_0 : i32, i32
  }
  func.func @transform_4(%arg0: i32) -> (i32, i32) {
    %c0_i32 = arith.constant 0 : i32
    %c0_i32_0 = arith.constant 0 : i32
    %c0_i32_1 = arith.constant 0 : i32
    return %c0_i32, %c0_i32_0 : i32, i32
  }
  func.func @transform_5(%arg0: i32) -> (i32, i32) {
    %c0_i32 = arith.constant 0 : i32
    %c0_i32_0 = arith.constant 0 : i32
    return %arg0, %c0_i32 : i32, i32
  }
}

</mosaic_0001>

<llo_original>
// kernel: classifier_forward.3
$region0: #{classifier_forward.3}
  #allocation0 [shape = 'u32[]', space=smem, size = 0x4, offset = 0x4, fixed_abs, tag = 'smem constant byte address 0x4 - core index']
  #allocation1 [shape = 'u32[144,128]{1,0:T(1,128)}', space=vmem, size = 0x12000, scoped, tag = 'internal scratch']
  %s0 = inlined_call_operand.vmem [shape: bf16[288,25], index: 0, kind: input, shape index: {}]
  %s1 = inlined_call_operand.vmem [shape: bf16[288,25], index: 1, kind: input, shape index: {}]
  %s2 = inlined_call_operand.vmem [shape: bf16[288,25], index: 2, kind: input, shape index: {}]
  %s3 = inlined_call_operand.vmem [shape: bf16[288,25], index: 3, kind: input, shape index: {}]
  %s4 = inlined_call_operand.vmem [shape: bf16[25,128], index: 4, kind: input, shape index: {}]
  %s5 = inlined_call_operand.vmem [shape: f32[1,128], index: 5, kind: input, shape index: {}]
  %s6 = inlined_call_operand.vmem [shape: bf16[288,128], index: 6, kind: output, shape index: {}]
  %s7 = sld [smem:[#allocation0]]
  $region34: #{classifier_forward.3} parent=0
    _
  %s9 = ssub.s32 1, %s7
  %s10 = scalar_select 0, %s9, %s7
  // Predicated region
  $region2: #{classifier_forward.3} parent=0 // pred_check
    _
  $region3: #{classifier_forward.3} parent=0 // pred_check_branch
    %12 = sbr.rel (0) target = $region5
  $region4: #{classifier_forward.3} parent=0 // pred_region
    _
  $region5: #{classifier_forward.3} parent=0 // pred_fallthru
    _
  // Predicated region
  $region6: #{classifier_forward.3} parent=0 // pred_check
    _
  $region7: #{classifier_forward.3} parent=0 // pred_check_branch
    %14 = sbr.rel (0) target = $region9
  $region8: #{classifier_forward.3} parent=0 // pred_region
    _
  $region9: #{classifier_forward.3} parent=0 // pred_fallthru
    _
  // Predicated region
  $region10: #{classifier_forward.3} parent=0 // pred_check
    _
  $region11: #{classifier_forward.3} parent=0 // pred_check_branch
    %16 = sbr.rel (0) target = $region13
  $region12: #{classifier_forward.3} parent=0 // pred_region
    _
  $region13: #{classifier_forward.3} parent=0 // pred_fallthru
    _
  // Predicated region
  $region14: #{classifier_forward.3} parent=0 // pred_check
    _
  $region15: #{classifier_forward.3} parent=0 // pred_check_branch
    %18 = sbr.rel (0) target = $region17
  $region16: #{classifier_forward.3} parent=0 // pred_region
    _
  $region17: #{classifier_forward.3} parent=0 // pred_fallthru
    _
  // Predicated region
  $region18: #{classifier_forward.3} parent=0 // pred_check
    _
  $region19: #{classifier_forward.3} parent=0 // pred_check_branch
    %20 = sbr.rel (0) target = $region21
  $region20: #{classifier_forward.3} parent=0 // pred_region
    _
  $region21: #{classifier_forward.3} parent=0 // pred_fallthru
    _
  // Predicated region
  $region22: #{classifier_forward.3} parent=0 // pred_check
    _
  $region23: #{classifier_forward.3} parent=0 // pred_check_branch
    %22 = sbr.rel (0) target = $region25
  $region24: #{classifier_forward.3} parent=0 // pred_region
    _
  $region25: #{classifier_forward.3} parent=0 // pred_fallthru
    _
  %v24 = vld [vmem:[%s4] sm:$0xf]
  %v25 = vld [vmem:[%s4 + $0x4] sm:$0xf]
  %v26 = vld [vmem:[%s4 + $0x8] sm:$0xf]
  %v27 = vld [vmem:[%s4 + $0xc] sm:$0x1]
  %v28 = vld [vmem:[%s0] sm:$0xf]
  %v29 = vld [vmem:[%s0 + $0x4] sm:$0xf]
  %v30 = vld [vmem:[%s0 + $0x8] sm:$0xf]
  %v31 = vld [vmem:[%s0 + $0xc] sm:$0xf]
  %v32 = vld [vmem:[%s0 + $0x10] sm:$0xf]
  %v33 = vld [vmem:[%s0 + $0x14] sm:$0xf]
  %v34 = vld [vmem:[%s0 + $0x18] sm:$0xf]
  %v35 = vld [vmem:[%s0 + $0x1c] sm:$0xf]
  %v36 = vld [vmem:[%s0 + $0x20] sm:$0xf]
  %v37 = vld [vmem:[%s0 + $0x24] sm:$0xf]
  %v38 = vld [vmem:[%s0 + $0x28] sm:$0xf]
  %v39 = vld [vmem:[%s0 + $0x2c] sm:$0xf]
  %v40 = vld [vmem:[%s0 + $0x30] sm:$0xf]
  %v41 = vld [vmem:[%s0 + $0x34] sm:$0xf]
  %v42 = vld [vmem:[%s0 + $0x38] sm:$0xf]
  %v43 = vld [vmem:[%s0 + $0x3c] sm:$0xf]
  %v44 = vld [vmem:[%s0 + $0x40] sm:$0xf]
  %v45 = vld [vmem:[%s0 + $0x44] sm:$0xf]
  %v46 = vld [vmem:[%s0 + $0x48] sm:$0xf]
  %v47 = vld [vmem:[%s0 + $0x4c] sm:$0xf]
  %v48 = vld [vmem:[%s0 + $0x50] sm:$0xf]
  %v49 = vld [vmem:[%s0 + $0x54] sm:$0xf]
  %v50 = vld [vmem:[%s0 + $0x58] sm:$0xf]
  %v51 = vld [vmem:[%s0 + $0x5c] sm:$0xf]
  %v52 = vld [vmem:[%s0 + $0x60] sm:$0xf]
  %v53 = vld [vmem:[%s0 + $0x64] sm:$0xf]
  %v54 = vld [vmem:[%s0 + $0x68] sm:$0xf]
  %v55 = vld [vmem:[%s0 + $0x6c] sm:$0xf]
  %v56 = vld [vmem:[%s0 + $0x70] sm:$0xf]
  %v57 = vld [vmem:[%s0 + $0x74] sm:$0xf]
  %v58 = vld [vmem:[%s0 + $0x78] sm:$0xf]
  %v59 = vld [vmem:[%s0 + $0x7c] sm:$0xf]
  %v60 = vld [vmem:[%s0 + $0x80] sm:$0xf]
  %v61 = vld [vmem:[%s0 + $0x84] sm:$0xf]
  %v62 = vld [vmem:[%s0 + $0x88] sm:$0xf]
  %v63 = vld [vmem:[%s0 + $0x8c] sm:$0xf]
  %v100 = vunpack.c.l.b16 %v28
  %v101 = vunpack.c.l.b16 %v29
  %v102 = vunpack.c.l.b16 %v30
  %v103 = vunpack.c.l.b16 %v31
  %v104 = vunpack.c.l.b16 %v32
  %v105 = vunpack.c.l.b16 %v33
  %v106 = vunpack.c.l.b16 %v34
  %v107 = vunpack.c.l.b16 %v35
  %v108 = vunpack.c.l.b16 %v36
  %v109 = vunpack.c.l.b16 %v37
  %v110 = vunpack.c.l.b16 %v38
  %v111 = vunpack.c.l.b16 %v39
  %v112 = vunpack.c.l.b16 %v40
  %v113 = vunpack.c.l.b16 %v41
  %v114 = vunpack.c.l.b16 %v42
  %v115 = vunpack.c.l.b16 %v43
  %v116 = vunpack.c.l.b16 %v44
  %v117 = vunpack.c.l.b16 %v45
  %v118 = vunpack.c.l.b16 %v46
  %v119 = vunpack.c.l.b16 %v47
  %v120 = vunpack.c.l.b16 %v48
  %v121 = vunpack.c.l.b16 %v49
  %v122 = vunpack.c.l.b16 %v50
  %v123 = vunpack.c.l.b16 %v51
  %v124 = vunpack.c.l.b16 %v52
  %v125 = vunpack.c.l.b16 %v53
  %v126 = vunpack.c.l.b16 %v54
  %v127 = vunpack.c.l.b16 %v55
  %v128 = vunpack.c.l.b16 %v56
  %v129 = vunpack.c.l.b16 %v57
  %v130 = vunpack.c.l.b16 %v58
  %v131 = vunpack.c.l.b16 %v59
  %v132 = vunpack.c.l.b16 %v60
  %v133 = vunpack.c.l.b16 %v61
  %v134 = vunpack.c.l.b16 %v62
  %v135 = vunpack.c.l.b16 %v63
  %v136 = vpack.c.b16 %v101, %v100
  %v137 = vpack.c.b16 %v103, %v102
  %v138 = vpack.c.b16 %v105, %v104
  %v139 = vpack.c.b16 %v107, %v106
  %v140 = vpack.c.b16 %v109, %v108
  %v141 = vpack.c.b16 %v111, %v110
  %v142 = vpack.c.b16 %v113, %v112
  %v143 = vpack.c.b16 %v115, %v114
  %v144 = vpack.c.b16 %v117, %v116
  %v145 = vpack.c.b16 %v119, %v118
  %v146 = vpack.c.b16 %v121, %v120
  %v147 = vpack.c.b16 %v123, %v122
  %v148 = vpack.c.b16 %v125, %v124
  %v149 = vpack.c.b16 %v127, %v126
  %v150 = vpack.c.b16 %v129, %v128
  %v151 = vpack.c.b16 %v131, %v130
  %v152 = vpack.c.b16 %v133, %v132
  %v153 = vpack.c.b16 %v135, %v134
  %v158 = vunpack.c.l.b16 %v24
  %v159 = vunpack.c.l.b16 %v25
  %v160 = vunpack.c.l.b16 %v26
  %v161 = vunpack.c.l.b16 %v27
  %v162 = vpack.c.b16 %v159, %v158
  %v163 = vpack.c.b16 %v161, %v160
  %vm165 = vcmask 203776
  %v167 = vsel %vm165, %v136, 0
  %v170 = vsel %vm165, %v137, 0
  %v173 = vsel %vm165, %v138, 0
  %v176 = vsel %vm165, %v139, 0
  %v179 = vsel %vm165, %v140, 0
  %v182 = vsel %vm165, %v141, 0
  %v185 = vsel %vm165, %v142, 0
  %v188 = vsel %vm165, %v143, 0
  %v191 = vsel %vm165, %v144, 0
  %v194 = vsel %vm165, %v145, 0
  %v197 = vsel %vm165, %v146, 0
  %v200 = vsel %vm165, %v147, 0
  %v203 = vsel %vm165, %v148, 0
  %v206 = vsel %vm165, %v149, 0
  %v209 = vsel %vm165, %v150, 0
  %v212 = vsel %vm165, %v151, 0
  %v215 = vsel %vm165, %v152, 0
  %v218 = vsel %vm165, %v153, 0
  %vm220 = vcmask 1043456
  %vm221 = vcmask 1044480
  %v222 = vsel %vm220, 4294967295, 65535
  %v223 = vsel %vm221, %v222, 0
  %v225 = vand.u32 %v163, %v223
  %227 = vmatprep.subr.bf16.mxu0 0
  %228 = vmatpush1.bf16.msra.mxu0 0
  %229 = vmatprep.subr.bf16.mxu0 0
  %230 = vmatpush1.bf16.msra.mxu0 0
  %231 = vmatprep.subr.bf16.mxu0 0
  %232 = vmatpush1.bf16.msra.mxu0 0
  %233 = vmatprep.subr.bf16.mxu0 0
  %234 = vmatpush1.bf16.msra.mxu0 0
  %235 = vmatprep.subr.bf16.mxu0 0
  %236 = vmatpush1.bf16.msra.mxu0 0
  %237 = vmatprep.subr.bf16.mxu0 0
  %238 = vmatpush1.bf16.msra.mxu0 0
  %239 = vmatprep.subr.bf16.mxu0 0
  %240 = vmatpush1.bf16.msra.mxu0 %v225
  %241 = vmatprep.subr.bf16.mxu0 0
  %242 = vmatpush1.bf16.msra.mxu0 %v162
  %243 = vmatprep.subr.bf16.mxu0 0
  %244 = vmatpush2.bf16.msra.mxu0 0
  %245 = vmatprep.subr.bf16.mxu0 0
  %246 = vmatpush2.bf16.msra.mxu0 0
  %247 = vmatprep.subr.bf16.mxu0 0
  %248 = vmatpush2.bf16.msra.mxu0 0
  %249 = vmatprep.subr.bf16.mxu0 0
  %250 = vmatpush2.bf16.msra.mxu0 0
  %251 = vmatprep.subr.bf16.mxu0 0
  %252 = vmatpush2.bf16.msra.mxu0 0
  %253 = vmatprep.subr.bf16.mxu0 0
  %254 = vmatpush2.bf16.msra.mxu0 0
  %255 = vmatprep.subr.bf16.mxu0 0
  %256 = vmatpush2.bf16.msra.mxu0 0
  %257 = vmatprep.subr.bf16.mxu0 0
  %258 = vmatpush2.bf16.msra.mxu0 0
  %259 = vmatprep.mubr.bf16.mxu0 0
  %260 = vmatmul.mubr.bf16.gmra.mxu0 %v167
  %v261 = vpop.f32.mrf.mxu0
  %v262 = vadd.f32 0.0, %v261
  %v263 = vpop.f32.mrf.mxu0
  %v264 = vpop.f32.mrf.mxu0
  %v265 = vadd.f32 0.0, %v264
  %v266 = vpop.f32.mrf.mxu0
  %267 = vmatprep.mubr.bf16.mxu0 0
  %268 = vmatmul.mubr.bf16.gmra.mxu0 %v170
  %v269 = vpop.f32.mrf.mxu0
  %v270 = vadd.f32 0.0, %v269
  %v271 = vpop.f32.mrf.mxu0
  %v272 = vpop.f32.mrf.mxu0
  %v273 = vadd.f32 0.0, %v272
  %v274 = vpop.f32.mrf.mxu0
  %275 = vmatprep.mubr.bf16.mxu0 0
  %276 = vmatmul.mubr.bf16.gmra.mxu0 %v173
  %v277 = vpop.f32.mrf.mxu0
  %v278 = vadd.f32 0.0, %v277
  %v279 = vpop.f32.mrf.mxu0
  %v280 = vpop.f32.mrf.mxu0
  %v281 = vadd.f32 0.0, %v280
  %v282 = vpop.f32.mrf.mxu0
  %283 = vmatprep.mubr.bf16.mxu0 0
  %284 = vmatmul.mubr.bf16.gmra.mxu0 %v176
  %v285 = vpop.f32.mrf.mxu0
  %v286 = vadd.f32 0.0, %v285
  %v287 = vpop.f32.mrf.mxu0
  %v288 = vpop.f32.mrf.mxu0
  %v289 = vadd.f32 0.0, %v288
  %v290 = vpop.f32.mrf.mxu0
  %291 = vmatprep.mubr.bf16.mxu0 0
  %292 = vmatmul.mubr.bf16.gmra.mxu0 %v179
  %v293 = vpop.f32.mrf.mxu0
  %v294 = vadd.f32 0.0, %v293
  %v295 = vpop.f32.mrf.mxu0
  %v296 = vpop.f32.mrf.mxu0
  %v297 = vadd.f32 0.0, %v296
  %v298 = vpop.f32.mrf.mxu0
  %299 = vmatprep.mubr.bf16.mxu0 0
  %300 = vmatmul.mubr.bf16.gmra.mxu0 %v182
  %v301 = vpop.f32.mrf.mxu0
  %v302 = vadd.f32 0.0, %v301
  %v303 = vpop.f32.mrf.mxu0
  %v304 = vpop.f32.mrf.mxu0
  %v305 = vadd.f32 0.0, %v304
  %v306 = vpop.f32.mrf.mxu0
  %307 = vmatprep.mubr.bf16.mxu0 0
  %308 = vmatmul.mubr.bf16.gmra.mxu0 %v185
  %v309 = vpop.f32.mrf.mxu0
  %v310 = vadd.f32 0.0, %v309
  %v311 = vpop.f32.mrf.mxu0
  %v312 = vpop.f32.mrf.mxu0
  %v313 = vadd.f32 0.0, %v312
  %v314 = vpop.f32.mrf.mxu0
  %315 = vmatprep.mubr.bf16.mxu0 0
  %316 = vmatmul.mubr.bf16.gmra.mxu0 %v188
  %v317 = vpop.f32.mrf.mxu0
  %v318 = vadd.f32 0.0, %v317
  %v319 = vpop.f32.mrf.mxu0
  %v320 = vpop.f32.mrf.mxu0
  %v321 = vadd.f32 0.0, %v320
  %v322 = vpop.f32.mrf.mxu0
  %323 = vmatprep.mubr.bf16.mxu0 0
  %324 = vmatmul.mubr.bf16.gmra.mxu0 %v191
  %v325 = vpop.f32.mrf.mxu0
  %v326 = vadd.f32 0.0, %v325
  %v327 = vpop.f32.mrf.mxu0
  %v328 = vpop.f32.mrf.mxu0
  %v329 = vadd.f32 0.0, %v328
  %v330 = vpop.f32.mrf.mxu0
  %331 = vmatprep.mubr.bf16.mxu0 0
  %332 = vmatmul.mubr.bf16.gmra.mxu0 %v194
  %v333 = vpop.f32.mrf.mxu0
  %v334 = vadd.f32 0.0, %v333
  %v335 = vpop.f32.mrf.mxu0
  %v336 = vpop.f32.mrf.mxu0
  %v337 = vadd.f32 0.0, %v336
  %v338 = vpop.f32.mrf.mxu0
  %339 = vmatprep.mubr.bf16.mxu0 0
  %340 = vmatmul.mubr.bf16.gmra.mxu0 %v197
  %v341 = vpop.f32.mrf.mxu0
  %v342 = vadd.f32 0.0, %v341
  %v343 = vpop.f32.mrf.mxu0
  %v344 = vpop.f32.mrf.mxu0
  %v345 = vadd.f32 0.0, %v344
  %v346 = vpop.f32.mrf.mxu0
  %347 = vmatprep.mubr.bf16.mxu0 0
  %348 = vmatmul.mubr.bf16.gmra.mxu0 %v200
  %v349 = vpop.f32.mrf.mxu0
  %v350 = vadd.f32 0.0, %v349
  %v351 = vpop.f32.mrf.mxu0
  %v352 = vpop.f32.mrf.mxu0
  %v353 = vadd.f32 0.0, %v352
  %v354 = vpop.f32.mrf.mxu0
  %355 = vmatprep.mubr.bf16.mxu0 0
  %356 = vmatmul.mubr.bf16.gmra.mxu0 %v203
  %v357 = vpop.f32.mrf.mxu0
  %v358 = vadd.f32 0.0, %v357
  %v359 = vpop.f32.mrf.mxu0
  %v360 = vpop.f32.mrf.mxu0
  %v361 = vadd.f32 0.0, %v360
  %v362 = vpop.f32.mrf.mxu0
  %363 = vmatprep.mubr.bf16.mxu0 0
  %364 = vmatmul.mubr.bf16.gmra.mxu0 %v206
  %v365 = vpop.f32.mrf.mxu0
  %v366 = vadd.f32 0.0, %v365
  %v367 = vpop.f32.mrf.mxu0
  %v368 = vpop.f32.mrf.mxu0
  %v369 = vadd.f32 0.0, %v368
  %v370 = vpop.f32.mrf.mxu0
  %371 = vmatprep.mubr.bf16.mxu0 0
  %372 = vmatmul.mubr.bf16.gmra.mxu0 %v209
  %v373 = vpop.f32.mrf.mxu0
  %v374 = vadd.f32 0.0, %v373
  %v375 = vpop.f32.mrf.mxu0
  %v376 = vpop.f32.mrf.mxu0
  %v377 = vadd.f32 0.0, %v376
  %v378 = vpop.f32.mrf.mxu0
  %379 = vmatprep.mubr.bf16.mxu0 0
  %380 = vmatmul.mubr.bf16.gmra.mxu0 %v212
  %v381 = vpop.f32.mrf.mxu0
  %v382 = vadd.f32 0.0, %v381
  %v383 = vpop.f32.mrf.mxu0
  %v384 = vpop.f32.mrf.mxu0
  %v385 = vadd.f32 0.0, %v384
  %v386 = vpop.f32.mrf.mxu0
  %387 = vmatprep.mubr.bf16.mxu0 0
  %388 = vmatmul.mubr.bf16.gmra.mxu0 %v215
  %v389 = vpop.f32.mrf.mxu0
  %v390 = vadd.f32 0.0, %v389
  %v391 = vpop.f32.mrf.mxu0
  %v392 = vpop.f32.mrf.mxu0
  %v393 = vadd.f32 0.0, %v392
  %v394 = vpop.f32.mrf.mxu0
  %395 = vmatprep.mubr.bf16.mxu0 0
  %396 = vmatmul.mubr.bf16.gmra.mxu0 %v218
  %v397 = vpop.f32.mrf.mxu0
  %v398 = vadd.f32 0.0, %v397
  %v399 = vpop.f32.mrf.mxu0
  %v400 = vpop.f32.mrf.mxu0
  %v401 = vadd.f32 0.0, %v400
  %v402 = vpop.f32.mrf.mxu0
  %403 = vdwg.mxu0
  %v404 = vld [vmem:[%s1] sm:$0xf]
  %v405 = vld [vmem:[%s1 + $0x4] sm:$0xf]
  %v406 = vld [vmem:[%s1 + $0x8] sm:$0xf]
  %v407 = vld [vmem:[%s1 + $0xc] sm:$0xf]
  %v408 = vld [vmem:[%s1 + $0x10] sm:$0xf]
  %v409 = vld [vmem:[%s1 + $0x14] sm:$0xf]
  %v410 = vld [vmem:[%s1 + $0x18] sm:$0xf]
  %v411 = vld [vmem:[%s1 + $0x1c] sm:$0xf]
  %v412 = vld [vmem:[%s1 + $0x20] sm:$0xf]
  %v413 = vld [vmem:[%s1 + $0x24] sm:$0xf]
  %v414 = vld [vmem:[%s1 + $0x28] sm:$0xf]
  %v415 = vld [vmem:[%s1 + $0x2c] sm:$0xf]
  %v416 = vld [vmem:[%s1 + $0x30] sm:$0xf]
  %v417 = vld [vmem:[%s1 + $0x34] sm:$0xf]
  %v418 = vld [vmem:[%s1 + $0x38] sm:$0xf]
  %v419 = vld [vmem:[%s1 + $0x3c] sm:$0xf]
  %v420 = vld [vmem:[%s1 + $0x40] sm:$0xf]
  %v421 = vld [vmem:[%s1 + $0x44] sm:$0xf]
  %v422 = vld [vmem:[%s1 + $0x48] sm:$0xf]
  %v423 = vld [vmem:[%s1 + $0x4c] sm:$0xf]
  %v424 = vld [vmem:[%s1 + $0x50] sm:$0xf]
  %v425 = vld [vmem:[%s1 + $0x54] sm:$0xf]
  %v426 = vld [vmem:[%s1 + $0x58] sm:$0xf]
  %v427 = vld [vmem:[%s1 + $0x5c] sm:$0xf]
  %v428 = vld [vmem:[%s1 + $0x60] sm:$0xf]
  %v429 = vld [vmem:[%s1 + $0x64] sm:$0xf]
  %v430 = vld [vmem:[%s1 + $0x68] sm:$0xf]
  %v431 = vld [vmem:[%s1 + $0x6c] sm:$0xf]
  %v432 = vld [vmem:[%s1 + $0x70] sm:$0xf]
  %v433 = vld [vmem:[%s1 + $0x74] sm:$0xf]
  %v434 = vld [vmem:[%s1 + $0x78] sm:$0xf]
  %v435 = vld [vmem:[%s1 + $0x7c] sm:$0xf]
  %v436 = vld [vmem:[%s1 + $0x80] sm:$0xf]
  %v437 = vld [vmem:[%s1 + $0x84] sm:$0xf]
  %v438 = vld [vmem:[%s1 + $0x88] sm:$0xf]
  %v439 = vld [vmem:[%s1 + $0x8c] sm:$0xf]
  %v476 = vunpack.c.l.b16 %v404
  %v477 = vunpack.c.l.b16 %v405
  %v478 = vunpack.c.l.b16 %v406
  %v479 = vunpack.c.l.b16 %v407
  %v480 = vunpack.c.l.b16 %v408
  %v481 = vunpack.c.l.b16 %v409
  %v482 = vunpack.c.l.b16 %v410
  %v483 = vunpack.c.l.b16 %v411
  %v484 = vunpack.c.l.b16 %v412
  %v485 = vunpack.c.l.b16 %v413
  %v486 = vunpack.c.l.b16 %v414
  %v487 = vunpack.c.l.b16 %v415
  %v488 = vunpack.c.l.b16 %v416
  %v489 = vunpack.c.l.b16 %v417
  %v490 = vunpack.c.l.b16 %v418
  %v491 = vunpack.c.l.b16 %v419
  %v492 = vunpack.c.l.b16 %v420
  %v493 = vunpack.c.l.b16 %v421
  %v494 = vunpack.c.l.b16 %v422
  %v495 = vunpack.c.l.b16 %v423
  %v496 = vunpack.c.l.b16 %v424
  %v497 = vunpack.c.l.b16 %v425
  %v498 = vunpack.c.l.b16 %v426
  %v499 = vunpack.c.l.b16 %v427
  %v500 = vunpack.c.l.b16 %v428
  %v501 = vunpack.c.l.b16 %v429
  %v502 = vunpack.c.l.b16 %v430
  %v503 = vunpack.c.l.b16 %v431
  %v504 = vunpack.c.l.b16 %v432
  %v505 = vunpack.c.l.b16 %v433
  %v506 = vunpack.c.l.b16 %v434
  %v507 = vunpack.c.l.b16 %v435
  %v508 = vunpack.c.l.b16 %v436
  %v509 = vunpack.c.l.b16 %v437
  %v510 = vunpack.c.l.b16 %v438
  %v511 = vunpack.c.l.b16 %v439
  %v512 = vpack.c.b16 %v477, %v476
  %v513 = vpack.c.b16 %v479, %v478
  %v514 = vpack.c.b16 %v481, %v480
  %v515 = vpack.c.b16 %v483, %v482
  %v516 = vpack.c.b16 %v485, %v484
  %v517 = vpack.c.b16 %v487, %v486
  %v518 = vpack.c.b16 %v489, %v488
  %v519 = vpack.c.b16 %v491, %v490
  %v520 = vpack.c.b16 %v493, %v492
  %v521 = vpack.c.b16 %v495, %v494
  %v522 = vpack.c.b16 %v497, %v496
  %v523 = vpack.c.b16 %v499, %v498
  %v524 = vpack.c.b16 %v501, %v500
  %v525 = vpack.c.b16 %v503, %v502
  %v526 = vpack.c.b16 %v505, %v504
  %v527 = vpack.c.b16 %v507, %v506
  %v528 = vpack.c.b16 %v509, %v508
  %v529 = vpack.c.b16 %v511, %v510
  %v531 = vsel %vm165, %v512, 0
  %v534 = vsel %vm165, %v513, 0
  %v537 = vsel %vm165, %v514, 0
  %v540 = vsel %vm165, %v515, 0
  %v543 = vsel %vm165, %v516, 0
  %v546 = vsel %vm165, %v517, 0
  %v549 = vsel %vm165, %v518, 0
  %v552 = vsel %vm165, %v519, 0
  %v555 = vsel %vm165, %v520, 0
  %v558 = vsel %vm165, %v521, 0
  %v561 = vsel %vm165, %v522, 0
  %v564 = vsel %vm165, %v523, 0
  %v567 = vsel %vm165, %v524, 0
  %v570 = vsel %vm165, %v525, 0
  %v573 = vsel %vm165, %v526, 0
  %v576 = vsel %vm165, %v527, 0
  %v579 = vsel %vm165, %v528, 0
  %v582 = vsel %vm165, %v529, 0
  %584 = vmatprep.subr.bf16.mxu0 0
  %585 = vmatpush1.bf16.msra.mxu0 0
  %586 = vmatprep.subr.bf16.mxu0 0
  %587 = vmatpush1.bf16.msra.mxu0 0
  %588 = vmatprep.subr.bf16.mxu0 0
  %589 = vmatpush1.bf16.msra.mxu0 0
  %590 = vmatprep.subr.bf16.mxu0 0
  %591 = vmatpush1.bf16.msra.mxu0 0
  %592 = vmatprep.subr.bf16.mxu0 0
  %593 = vmatpush1.bf16.msra.mxu0 0
  %594 = vmatprep.subr.bf16.mxu0 0
  %595 = vmatpush1.bf16.msra.mxu0 0
  %596 = vmatprep.subr.bf16.mxu0 0
  %597 = vmatpush1.bf16.msra.mxu0 %v225
  %598 = vmatprep.subr.bf16.mxu0 0
  %599 = vmatpush1.bf16.msra.mxu0 %v162
  %600 = vmatprep.subr.bf16.mxu0 0
  %601 = vmatpush2.bf16.msra.mxu0 0
  %602 = vmatprep.subr.bf16.mxu0 0
  %603 = vmatpush2.bf16.msra.mxu0 0
  %604 = vmatprep.subr.bf16.mxu0 0
  %605 = vmatpush2.bf16.msra.mxu0 0
  %606 = vmatprep.subr.bf16.mxu0 0
  %607 = vmatpush2.bf16.msra.mxu0 0
  %608 = vmatprep.subr.bf16.mxu0 0
  %609 = vmatpush2.bf16.msra.mxu0 0
  %610 = vmatprep.subr.bf16.mxu0 0
  %611 = vmatpush2.bf16.msra.mxu0 0
  %612 = vmatprep.subr.bf16.mxu0 0
  %613 = vmatpush2.bf16.msra.mxu0 0
  %614 = vmatprep.subr.bf16.mxu0 0
  %615 = vmatpush2.bf16.msra.mxu0 0
  %616 = vmatprep.mubr.bf16.mxu0 0
  %617 = vmatmul.mubr.bf16.gmra.mxu0 %v531
  %v618 = vpop.f32.mrf.mxu0
  %v619 = vadd.f32 0.0, %v618
  %v620 = vpop.f32.mrf.mxu0
  %v621 = vpop.f32.mrf.mxu0
  %v622 = vadd.f32 0.0, %v621
  %v623 = vpop.f32.mrf.mxu0
  %624 = vmatprep.mubr.bf16.mxu0 0
  %625 = vmatmul.mubr.bf16.gmra.mxu0 %v534
  %v626 = vpop.f32.mrf.mxu0
  %v627 = vadd.f32 0.0, %v626
  %v628 = vpop.f32.mrf.mxu0
  %v629 = vpop.f32.mrf.mxu0
  %v630 = vadd.f32 0.0, %v629
  %v631 = vpop.f32.mrf.mxu0
  %632 = vmatprep.mubr.bf16.mxu0 0
  %633 = vmatmul.mubr.bf16.gmra.mxu0 %v537
  %v634 = vpop.f32.mrf.mxu0
  %v635 = vadd.f32 0.0, %v634
  %v636 = vpop.f32.mrf.mxu0
  %v637 = vpop.f32.mrf.mxu0
  %v638 = vadd.f32 0.0, %v637
  %v639 = vpop.f32.mrf.mxu0
  %640 = vmatprep.mubr.bf16.mxu0 0
  %641 = vmatmul.mubr.bf16.gmra.mxu0 %v540
  %v642 = vpop.f32.mrf.mxu0
  %v643 = vadd.f32 0.0, %v642
  %v644 = vpop.f32.mrf.mxu0
  %v645 = vpop.f32.mrf.mxu0
  %v646 = vadd.f32 0.0, %v645
  %v647 = vpop.f32.mrf.mxu0
  %648 = vmatprep.mubr.bf16.mxu0 0
  %649 = vmatmul.mubr.bf16.gmra.mxu0 %v543
  %v650 = vpop.f32.mrf.mxu0
  %v651 = vadd.f32 0.0, %v650
  %v652 = vpop.f32.mrf.mxu0
  %v653 = vpop.f32.mrf.mxu0
  %v654 = vadd.f32 0.0, %v653
  %v655 = vpop.f32.mrf.mxu0
  %656 = vmatprep.mubr.bf16.mxu0 0
  %657 = vmatmul.mubr.bf16.gmra.mxu0 %v546
  %v658 = vpop.f32.mrf.mxu0
  %v659 = vadd.f32 0.0, %v658
  %v660 = vpop.f32.mrf.mxu0
  %v661 = vpop.f32.mrf.mxu0
  %v662 = vadd.f32 0.0, %v661
  %v663 = vpop.f32.mrf.mxu0
  %664 = vmatprep.mubr.bf16.mxu0 0
  %665 = vmatmul.mubr.bf16.gmra.mxu0 %v549
  %v666 = vpop.f32.mrf.mxu0
  %v667 = vadd.f32 0.0, %v666
  %v668 = vpop.f32.mrf.mxu0
  %v669 = vpop.f32.mrf.mxu0
  %v670 = vadd.f32 0.0, %v669
  %v671 = vpop.f32.mrf.mxu0
  %672 = vmatprep.mubr.bf16.mxu0 0
  %673 = vmatmul.mubr.bf16.gmra.mxu0 %v552
  %v674 = vpop.f32.mrf.mxu0
  %v675 = vadd.f32 0.0, %v674
  %v676 = vpop.f32.mrf.mxu0
  %v677 = vpop.f32.mrf.mxu0
  %v678 = vadd.f32 0.0, %v677
  %v679 = vpop.f32.mrf.mxu0
  %680 = vmatprep.mubr.bf16.mxu0 0
  %681 = vmatmul.mubr.bf16.gmra.mxu0 %v555
  %v682 = vpop.f32.mrf.mxu0
  %v683 = vadd.f32 0.0, %v682
  %v684 = vpop.f32.mrf.mxu0
  %v685 = vpop.f32.mrf.mxu0
  %v686 = vadd.f32 0.0, %v685
  %v687 = vpop.f32.mrf.mxu0
  %688 = vmatprep.mubr.bf16.mxu0 0
  %689 = vmatmul.mubr.bf16.gmra.mxu0 %v558
  %v690 = vpop.f32.mrf.mxu0
  %v691 = vadd.f32 0.0, %v690
  %v692 = vpop.f32.mrf.mxu0
  %v693 = vpop.f32.mrf.mxu0
  %v694 = vadd.f32 0.0, %v693
  %v695 = vpop.f32.mrf.mxu0
  %696 = vmatprep.mubr.bf16.mxu0 0
  %697 = vmatmul.mubr.bf16.gmra.mxu0 %v561
  %v698 = vpop.f32.mrf.mxu0
  %v699 = vadd.f32 0.0, %v698
  %v700 = vpop.f32.mrf.mxu0
  %v701 = vpop.f32.mrf.mxu0
  %v702 = vadd.f32 0.0, %v701
  %v703 = vpop.f32.mrf.mxu0
  %704 = vmatprep.mubr.bf16.mxu0 0
  %705 = vmatmul.mubr.bf16.gmra.mxu0 %v564
  %v706 = vpop.f32.mrf.mxu0
  %v707 = vadd.f32 0.0, %v706
  %v708 = vpop.f32.mrf.mxu0
  %v709 = vpop.f32.mrf.mxu0
  %v710 = vadd.f32 0.0, %v709
  %v711 = vpop.f32.mrf.mxu0
  %712 = vmatprep.mubr.bf16.mxu0 0
  %713 = vmatmul.mubr.bf16.gmra.mxu0 %v567
  %v714 = vpop.f32.mrf.mxu0
  %v715 = vadd.f32 0.0, %v714
  %v716 = vpop.f32.mrf.mxu0
  %v717 = vpop.f32.mrf.mxu0
  %v718 = vadd.f32 0.0, %v717
  %v719 = vpop.f32.mrf.mxu0
  %720 = vmatprep.mubr.bf16.mxu0 0
  %721 = vmatmul.mubr.bf16.gmra.mxu0 %v570
  %v722 = vpop.f32.mrf.mxu0
  %v723 = vadd.f32 0.0, %v722
  %v724 = vpop.f32.mrf.mxu0
  %v725 = vpop.f32.mrf.mxu0
  %v726 = vadd.f32 0.0, %v725
  %v727 = vpop.f32.mrf.mxu0
  %728 = vmatprep.mubr.bf16.mxu0 0
  %729 = vmatmul.mubr.bf16.gmra.mxu0 %v573
  %v730 = vpop.f32.mrf.mxu0
  %v731 = vadd.f32 0.0, %v730
  %v732 = vpop.f32.mrf.mxu0
  %v733 = vpop.f32.mrf.mxu0
  %v734 = vadd.f32 0.0, %v733
  %v735 = vpop.f32.mrf.mxu0
  %736 = vmatprep.mubr.bf16.mxu0 0
  %737 = vmatmul.mubr.bf16.gmra.mxu0 %v576
  %v738 = vpop.f32.mrf.mxu0
  %v739 = vadd.f32 0.0, %v738
  %v740 = vpop.f32.mrf.mxu0
  %v741 = vpop.f32.mrf.mxu0
  %v742 = vadd.f32 0.0, %v741
  %v743 = vpop.f32.mrf.mxu0
  %744 = vmatprep.mubr.bf16.mxu0 0
  %745 = vmatmul.mubr.bf16.gmra.mxu0 %v579
  %v746 = vpop.f32.mrf.mxu0
  %v747 = vadd.f32 0.0, %v746
  %v748 = vpop.f32.mrf.mxu0
  %v749 = vpop.f32.mrf.mxu0
  %v750 = vadd.f32 0.0, %v749
  %v751 = vpop.f32.mrf.mxu0
  %752 = vmatprep.mubr.bf16.mxu0 0
  %753 = vmatmul.mubr.bf16.gmra.mxu0 %v582
  %v754 = vpop.f32.mrf.mxu0
  %v755 = vadd.f32 0.0, %v754
  %v756 = vpop.f32.mrf.mxu0
  %v757 = vpop.f32.mrf.mxu0
  %v758 = vadd.f32 0.0, %v757
  %v759 = vpop.f32.mrf.mxu0
  %760 = vdwg.mxu0
  %v761 = vld [vmem:[%s2] sm:$0xf]
  %v762 = vld [vmem:[%s2 + $0x4] sm:$0xf]
  %v763 = vld [vmem:[%s2 + $0x8] sm:$0xf]
  %v764 = vld [vmem:[%s2 + $0xc] sm:$0xf]
  %v765 = vld [vmem:[%s2 + $0x10] sm:$0xf]
  %v766 = vld [vmem:[%s2 + $0x14] sm:$0xf]
  %v767 = vld [vmem:[%s2 + $0x18] sm:$0xf]
  %v768 = vld [vmem:[%s2 + $0x1c] sm:$0xf]
  %v769 = vld [vmem:[%s2 + $0x20] sm:$0xf]
  %v770 = vld [vmem:[%s2 + $0x24] sm:$0xf]
  %v771 = vld [vmem:[%s2 + $0x28] sm:$0xf]
  %v772 = vld [vmem:[%s2 + $0x2c] sm:$0xf]
  %v773 = vld [vmem:[%s2 + $0x30] sm:$0xf]
  %v774 = vld [vmem:[%s2 + $0x34] sm:$0xf]
  %v775 = vld [vmem:[%s2 + $0x38] sm:$0xf]
  %v776 = vld [vmem:[%s2 + $0x3c] sm:$0xf]
  %v777 = vld [vmem:[%s2 + $0x40] sm:$0xf]
  %v778 = vld [vmem:[%s2 + $0x44] sm:$0xf]
  %v779 = vld [vmem:[%s2 + $0x48] sm:$0xf]
  %v780 = vld [vmem:[%s2 + $0x4c] sm:$0xf]
  %v781 = vld [vmem:[%s2 + $0x50] sm:$0xf]
  %v782 = vld [vmem:[%s2 + $0x54] sm:$0xf]
  %v783 = vld [vmem:[%s2 + $0x58] sm:$0xf]
  %v784 = vld [vmem:[%s2 + $0x5c] sm:$0xf]
  %v785 = vld [vmem:[%s2 + $0x60] sm:$0xf]
  %v786 = vld [vmem:[%s2 + $0x64] sm:$0xf]
  %v787 = vld [vmem:[%s2 + $0x68] sm:$0xf]
  %v788 = vld [vmem:[%s2 + $0x6c] sm:$0xf]
  %v789 = vld [vmem:[%s2 + $0x70] sm:$0xf]
  %v790 = vld [vmem:[%s2 + $0x74] sm:$0xf]
  %v791 = vld [vmem:[%s2 + $0x78] sm:$0xf]
  %v792 = vld [vmem:[%s2 + $0x7c] sm:$0xf]
  %v793 = vld [vmem:[%s2 + $0x80] sm:$0xf]
  %v794 = vld [vmem:[%s2 + $0x84] sm:$0xf]
  %v795 = vld [vmem:[%s2 + $0x88] sm:$0xf]
  %v796 = vld [vmem:[%s2 + $0x8c] sm:$0xf]
  %v833 = vunpack.c.l.b16 %v761
  %v834 = vunpack.c.l.b16 %v762
  %v835 = vunpack.c.l.b16 %v763
  %v836 = vunpack.c.l.b16 %v764
  %v837 = vunpack.c.l.b16 %v765
  %v838 = vunpack.c.l.b16 %v766
  %v839 = vunpack.c.l.b16 %v767
  %v840 = vunpack.c.l.b16 %v768
  %v841 = vunpack.c.l.b16 %v769
  %v842 = vunpack.c.l.b16 %v770
  %v843 = vunpack.c.l.b16 %v771
  %v844 = vunpack.c.l.b16 %v772
  %v845 = vunpack.c.l.b16 %v773
  %v846 = vunpack.c.l.b16 %v774
  %v847 = vunpack.c.l.b16 %v775
  %v848 = vunpack.c.l.b16 %v776
  %v849 = vunpack.c.l.b16 %v777
  %v850 = vunpack.c.l.b16 %v778
  %v851 = vunpack.c.l.b16 %v779
  %v852 = vunpack.c.l.b16 %v780
  %v853 = vunpack.c.l.b16 %v781
  %v854 = vunpack.c.l.b16 %v782
  %v855 = vunpack.c.l.b16 %v783
  %v856 = vunpack.c.l.b16 %v784
  %v857 = vunpack.c.l.b16 %v785
  %v858 = vunpack.c.l.b16 %v786
  %v859 = vunpack.c.l.b16 %v787
  %v860 = vunpack.c.l.b16 %v788
  %v861 = vunpack.c.l.b16 %v789
  %v862 = vunpack.c.l.b16 %v790
  %v863 = vunpack.c.l.b16 %v791
  %v864 = vunpack.c.l.b16 %v792
  %v865 = vunpack.c.l.b16 %v793
  %v866 = vunpack.c.l.b16 %v794
  %v867 = vunpack.c.l.b16 %v795
  %v868 = vunpack.c.l.b16 %v796
  %v869 = vpack.c.b16 %v834, %v833
  %v870 = vpack.c.b16 %v836, %v835
  %v871 = vpack.c.b16 %v838, %v837
  %v872 = vpack.c.b16 %v840, %v839
  %v873 = vpack.c.b16 %v842, %v841
  %v874 = vpack.c.b16 %v844, %v843
  %v875 = vpack.c.b16 %v846, %v845
  %v876 = vpack.c.b16 %v848, %v847
  %v877 = vpack.c.b16 %v850, %v849
  %v878 = vpack.c.b16 %v852, %v851
  %v879 = vpack.c.b16 %v854, %v853
  %v880 = vpack.c.b16 %v856, %v855
  %v881 = vpack.c.b16 %v858, %v857
  %v882 = vpack.c.b16 %v860, %v859
  %v883 = vpack.c.b16 %v862, %v861
  %v884 = vpack.c.b16 %v864, %v863
  %v885 = vpack.c.b16 %v866, %v865
  %v886 = vpack.c.b16 %v868, %v867
  %v888 = vsel %vm165, %v869, 0
  %v891 = vsel %vm165, %v870, 0
  %v894 = vsel %vm165, %v871, 0
  %v897 = vsel %vm165, %v872, 0
  %v900 = vsel %vm165, %v873, 0
  %v903 = vsel %vm165, %v874, 0
  %v906 = vsel %vm165, %v875, 0
  %v909 = vsel %vm165, %v876, 0
  %v912 = vsel %vm165, %v877, 0
  %v915 = vsel %vm165, %v878, 0
  %v918 = vsel %vm165, %v879, 0
  %v921 = vsel %vm165, %v880, 0
  %v924 = vsel %vm165, %v881, 0
  %v927 = vsel %vm165, %v882, 0
  %v930 = vsel %vm165, %v883, 0
  %v933 = vsel %vm165, %v884, 0
  %v936 = vsel %vm165, %v885, 0
  %v939 = vsel %vm165, %v886, 0
  %941 = vmatprep.subr.bf16.mxu0 0
  %942 = vmatpush1.bf16.msra.mxu0 0
  %943 = vmatprep.subr.bf16.mxu0 0
  %944 = vmatpush1.bf16.msra.mxu0 0
  %945 = vmatprep.subr.bf16.mxu0 0
  %946 = vmatpush1.bf16.msra.mxu0 0
  %947 = vmatprep.subr.bf16.mxu0 0
  %948 = vmatpush1.bf16.msra.mxu0 0
  %949 = vmatprep.subr.bf16.mxu0 0
  %950 = vmatpush1.bf16.msra.mxu0 0
  %951 = vmatprep.subr.bf16.mxu0 0
  %952 = vmatpush1.bf16.msra.mxu0 0
  %953 = vmatprep.subr.bf16.mxu0 0
  %954 = vmatpush1.bf16.msra.mxu0 %v225
  %955 = vmatprep.subr.bf16.mxu0 0
  %956 = vmatpush1.bf16.msra.mxu0 %v162
  %957 = vmatprep.subr.bf16.mxu0 0
  %958 = vmatpush2.bf16.msra.mxu0 0
  %959 = vmatprep.subr.bf16.mxu0 0
  %960 = vmatpush2.bf16.msra.mxu0 0
  %961 = vmatprep.subr.bf16.mxu0 0
  %962 = vmatpush2.bf16.msra.mxu0 0
  %963 = vmatprep.subr.bf16.mxu0 0
  %964 = vmatpush2.bf16.msra.mxu0 0
  %965 = vmatprep.subr.bf16.mxu0 0
  %966 = vmatpush2.bf16.msra.mxu0 0
  %967 = vmatprep.subr.bf16.mxu0 0
  %968 = vmatpush2.bf16.msra.mxu0 0
  %969 = vmatprep.subr.bf16.mxu0 0
  %970 = vmatpush2.bf16.msra.mxu0 0
  %971 = vmatprep.subr.bf16.mxu0 0
  %972 = vmatpush2.bf16.msra.mxu0 0
  %973 = vmatprep.mubr.bf16.mxu0 0
  %974 = vmatmul.mubr.bf16.gmra.mxu0 %v888
  %v975 = vpop.f32.mrf.mxu0
  %v976 = vadd.f32 0.0, %v975
  %v977 = vpop.f32.mrf.mxu0
  %v978 = vpop.f32.mrf.mxu0
  %v979 = vadd.f32 0.0, %v978
  %v980 = vpop.f32.mrf.mxu0
  %981 = vmatprep.mubr.bf16.mxu0 0
  %982 = vmatmul.mubr.bf16.gmra.mxu0 %v891
  %v983 = vpop.f32.mrf.mxu0
  %v984 = vadd.f32 0.0, %v983
  %v985 = vpop.f32.mrf.mxu0
  %v986 = vpop.f32.mrf.mxu0
  %v987 = vadd.f32 0.0, %v986
  %v988 = vpop.f32.mrf.mxu0
  %989 = vmatprep.mubr.bf16.mxu0 0
  %990 = vmatmul.mubr.bf16.gmra.mxu0 %v894
  %v991 = vpop.f32.mrf.mxu0
  %v992 = vadd.f32 0.0, %v991
  %v993 = vpop.f32.mrf.mxu0
  %v994 = vpop.f32.mrf.mxu0
  %v995 = vadd.f32 0.0, %v994
  %v996 = vpop.f32.mrf.mxu0
  %997 = vmatprep.mubr.bf16.mxu0 0
  %998 = vmatmul.mubr.bf16.gmra.mxu0 %v897
  %v999 = vpop.f32.mrf.mxu0
  %v1000 = vadd.f32 0.0, %v999
  %v1001 = vpop.f32.mrf.mxu0
  %v1002 = vpop.f32.mrf.mxu0
  %v1003 = vadd.f32 0.0, %v1002
  %v1004 = vpop.f32.mrf.mxu0
  %1005 = vmatprep.mubr.bf16.mxu0 0
  %1006 = vmatmul.mubr.bf16.gmra.mxu0 %v900
  %v1007 = vpop.f32.mrf.mxu0
  %v1008 = vadd.f32 0.0, %v1007
  %v1009 = vpop.f32.mrf.mxu0
  %v1010 = vpop.f32.mrf.mxu0
  %v1011 = vadd.f32 0.0, %v1010
  %v1012 = vpop.f32.mrf.mxu0
  %1013 = vmatprep.mubr.bf16.mxu0 0
  %1014 = vmatmul.mubr.bf16.gmra.mxu0 %v903
  %v1015 = vpop.f32.mrf.mxu0
  %v1016 = vadd.f32 0.0, %v1015
  %v1017 = vpop.f32.mrf.mxu0
  %v1018 = vpop.f32.mrf.mxu0
  %v1019 = vadd.f32 0.0, %v1018
  %v1020 = vpop.f32.mrf.mxu0
  %1021 = vmatprep.mubr.bf16.mxu0 0
  %1022 = vmatmul.mubr.bf16.gmra.mxu0 %v906
  %v1023 = vpop.f32.mrf.mxu0
  %v1024 = vadd.f32 0.0, %v1023
  %v1025 = vpop.f32.mrf.mxu0
  %v1026 = vpop.f32.mrf.mxu0
  %v1027 = vadd.f32 0.0, %v1026
  %v1028 = vpop.f32.mrf.mxu0
  %1029 = vmatprep.mubr.bf16.mxu0 0
  %1030 = vmatmul.mubr.bf16.gmra.mxu0 %v909
  %v1031 = vpop.f32.mrf.mxu0
  %v1032 = vadd.f32 0.0, %v1031
  %v1033 = vpop.f32.mrf.mxu0
  %v1034 = vpop.f32.mrf.mxu0
  %v1035 = vadd.f32 0.0, %v1034
  %v1036 = vpop.f32.mrf.mxu0
  %1037 = vmatprep.mubr.bf16.mxu0 0
  %1038 = vmatmul.mubr.bf16.gmra.mxu0 %v912
  %v1039 = vpop.f32.mrf.mxu0
  %v1040 = vadd.f32 0.0, %v1039
  %v1041 = vpop.f32.mrf.mxu0
  %v1042 = vpop.f32.mrf.mxu0
  %v1043 = vadd.f32 0.0, %v1042
  %v1044 = vpop.f32.mrf.mxu0
  %1045 = vmatprep.mubr.bf16.mxu0 0
  %1046 = vmatmul.mubr.bf16.gmra.mxu0 %v915
  %v1047 = vpop.f32.mrf.mxu0
  %v1048 = vadd.f32 0.0, %v1047
  %v1049 = vpop.f32.mrf.mxu0
  %v1050 = vpop.f32.mrf.mxu0
  %v1051 = vadd.f32 0.0, %v1050
  %v1052 = vpop.f32.mrf.mxu0
  %1053 = vmatprep.mubr.bf16.mxu0 0
  %1054 = vmatmul.mubr.bf16.gmra.mxu0 %v918
  %v1055 = vpop.f32.mrf.mxu0
  %v1056 = vadd.f32 0.0, %v1055
  %v1057 = vpop.f32.mrf.mxu0
  %v1058 = vpop.f32.mrf.mxu0
  %v1059 = vadd.f32 0.0, %v1058
  %v1060 = vpop.f32.mrf.mxu0
  %1061 = vmatprep.mubr.bf16.mxu0 0
  %1062 = vmatmul.mubr.bf16.gmra.mxu0 %v921
  %v1063 = vpop.f32.mrf.mxu0
  %v1064 = vadd.f32 0.0, %v1063
  %v1065 = vpop.f32.mrf.mxu0
  %v1066 = vpop.f32.mrf.mxu0
  %v1067 = vadd.f32 0.0, %v1066
  %v1068 = vpop.f32.mrf.mxu0
  %1069 = vmatprep.mubr.bf16.mxu0 0
  %1070 = vmatmul.mubr.bf16.gmra.mxu0 %v924
  %v1071 = vpop.f32.mrf.mxu0
  %v1072 = vadd.f32 0.0, %v1071
  %v1073 = vpop.f32.mrf.mxu0
  %v1074 = vpop.f32.mrf.mxu0
  %v1075 = vadd.f32 0.0, %v1074
  %v1076 = vpop.f32.mrf.mxu0
  %1077 = vmatprep.mubr.bf16.mxu0 0
  %1078 = vmatmul.mubr.bf16.gmra.mxu0 %v927
  %v1079 = vpop.f32.mrf.mxu0
  %v1080 = vadd.f32 0.0, %v1079
  %v1081 = vpop.f32.mrf.mxu0
  %v1082 = vpop.f32.mrf.mxu0
  %v1083 = vadd.f32 0.0, %v1082
  %v1084 = vpop.f32.mrf.mxu0
  %1085 = vmatprep.mubr.bf16.mxu0 0
  %1086 = vmatmul.mubr.bf16.gmra.mxu0 %v930
  %v1087 = vpop.f32.mrf.mxu0
  %v1088 = vadd.f32 0.0, %v1087
  %v1089 = vpop.f32.mrf.mxu0
  %v1090 = vpop.f32.mrf.mxu0
  %v1091 = vadd.f32 0.0, %v1090
  %v1092 = vpop.f32.mrf.mxu0
  %1093 = vmatprep.mubr.bf16.mxu0 0
  %1094 = vmatmul.mubr.bf16.gmra.mxu0 %v933
  %v1095 = vpop.f32.mrf.mxu0
  %v1096 = vadd.f32 0.0, %v1095
  %v1097 = vpop.f32.mrf.mxu0
  %v1098 = vpop.f32.mrf.mxu0
  %v1099 = vadd.f32 0.0, %v1098
  %v1100 = vpop.f32.mrf.mxu0
  %1101 = vmatprep.mubr.bf16.mxu0 0
  %1102 = vmatmul.mubr.bf16.gmra.mxu0 %v936
  %v1103 = vpop.f32.mrf.mxu0
  %v1104 = vadd.f32 0.0, %v1103
  %v1105 = vpop.f32.mrf.mxu0
  %v1106 = vpop.f32.mrf.mxu0
  %v1107 = vadd.f32 0.0, %v1106
  %v1108 = vpop.f32.mrf.mxu0
  %1109 = vmatprep.mubr.bf16.mxu0 0
  %1110 = vmatmul.mubr.bf16.gmra.mxu0 %v939
  %v1111 = vpop.f32.mrf.mxu0
  %v1112 = vadd.f32 0.0, %v1111
  %v1113 = vpop.f32.mrf.mxu0
  %v1114 = vpop.f32.mrf.mxu0
  %v1115 = vadd.f32 0.0, %v1114
  %v1116 = vpop.f32.mrf.mxu0
  %1117 = vdwg.mxu0
  %v1118 = vld [vmem:[%s3] sm:$0xf]
  %v1119 = vld [vmem:[%s3 + $0x4] sm:$0xf]
  %v1120 = vld [vmem:[%s3 + $0x8] sm:$0xf]
  %v1121 = vld [vmem:[%s3 + $0xc] sm:$0xf]
  %v1122 = vld [vmem:[%s3 + $0x10] sm:$0xf]
  %v1123 = vld [vmem:[%s3 + $0x14] sm:$0xf]
  %v1124 = vld [vmem:[%s3 + $0x18] sm:$0xf]
  %v1125 = vld [vmem:[%s3 + $0x1c] sm:$0xf]
  %v1126 = vld [vmem:[%s3 + $0x20] sm:$0xf]
  %v1127 = vld [vmem:[%s3 + $0x24] sm:$0xf]
  %v1128 = vld [vmem:[%s3 + $0x28] sm:$0xf]
  %v1129 = vld [vmem:[%s3 + $0x2c] sm:$0xf]
  %v1130 = vld [vmem:[%s3 + $0x30] sm:$0xf]
  %v1131 = vld [vmem:[%s3 + $0x34] sm:$0xf]
  %v1132 = vld [vmem:[%s3 + $0x38] sm:$0xf]
  %v1133 = vld [vmem:[%s3 + $0x3c] sm:$0xf]
  %v1134 = vld [vmem:[%s3 + $0x40] sm:$0xf]
  %v1135 = vld [vmem:[%s3 + $0x44] sm:$0xf]
  %v1136 = vld [vmem:[%s3 + $0x48] sm:$0xf]
  %v1137 = vld [vmem:[%s3 + $0x4c] sm:$0xf]
  %v1138 = vld [vmem:[%s3 + $0x50] sm:$0xf]
  %v1139 = vld [vmem:[%s3 + $0x54] sm:$0xf]
  %v1140 = vld [vmem:[%s3 + $0x58] sm:$0xf]
  %v1141 = vld [vmem:[%s3 + $0x5c] sm:$0xf]
  %v1142 = vld [vmem:[%s3 + $0x60] sm:$0xf]
  %v1143 = vld [vmem:[%s3 + $0x64] sm:$0xf]
  %v1144 = vld [vmem:[%s3 + $0x68] sm:$0xf]
  %v1145 = vld [vmem:[%s3 + $0x6c] sm:$0xf]
  %v1146 = vld [vmem:[%s3 + $0x70] sm:$0xf]
  %v1147 = vld [vmem:[%s3 + $0x74] sm:$0xf]
  %v1148 = vld [vmem:[%s3 + $0x78] sm:$0xf]
  %v1149 = vld [vmem:[%s3 + $0x7c] sm:$0xf]
  %v1150 = vld [vmem:[%s3 + $0x80] sm:$0xf]
  %v1151 = vld [vmem:[%s3 + $0x84] sm:$0xf]
  %v1152 = vld [vmem:[%s3 + $0x88] sm:$0xf]
  %v1153 = vld [vmem:[%s3 + $0x8c] sm:$0xf]
  %v1190 = vunpack.c.l.b16 %v1118
  %v1191 = vunpack.c.l.b16 %v1119
  %v1192 = vunpack.c.l.b16 %v1120
  %v1193 = vunpack.c.l.b16 %v1121
  %v1194 = vunpack.c.l.b16 %v1122
  %v1195 = vunpack.c.l.b16 %v1123
  %v1196 = vunpack.c.l.b16 %v1124
  %v1197 = vunpack.c.l.b16 %v1125
  %v1198 = vunpack.c.l.b16 %v1126
  %v1199 = vunpack.c.l.b16 %v1127
  %v1200 = vunpack.c.l.b16 %v1128
  %v1201 = vunpack.c.l.b16 %v1129
  %v1202 = vunpack.c.l.b16 %v1130
  %v1203 = vunpack.c.l.b16 %v1131
  %v1204 = vunpack.c.l.b16 %v1132
  %v1205 = vunpack.c.l.b16 %v1133
  %v1206 = vunpack.c.l.b16 %v1134
  %v1207 = vunpack.c.l.b16 %v1135
  %v1208 = vunpack.c.l.b16 %v1136
  %v1209 = vunpack.c.l.b16 %v1137
  %v1210 = vunpack.c.l.b16 %v1138
  %v1211 = vunpack.c.l.b16 %v1139
  %v1212 = vunpack.c.l.b16 %v1140
  %v1213 = vunpack.c.l.b16 %v1141
  %v1214 = vunpack.c.l.b16 %v1142
  %v1215 = vunpack.c.l.b16 %v1143
  %v1216 = vunpack.c.l.b16 %v1144
  %v1217 = vunpack.c.l.b16 %v1145
  %v1218 = vunpack.c.l.b16 %v1146
  %v1219 = vunpack.c.l.b16 %v1147
  %v1220 = vunpack.c.l.b16 %v1148
  %v1221 = vunpack.c.l.b16 %v1149
  %v1222 = vunpack.c.l.b16 %v1150
  %v1223 = vunpack.c.l.b16 %v1151
  %v1224 = vunpack.c.l.b16 %v1152
  %v1225 = vunpack.c.l.b16 %v1153
  %v1226 = vpack.c.b16 %v1191, %v1190
  %v1227 = vpack.c.b16 %v1193, %v1192
  %v1228 = vpack.c.b16 %v1195, %v1194
  %v1229 = vpack.c.b16 %v1197, %v1196
  %v1230 = vpack.c.b16 %v1199, %v1198
  %v1231 = vpack.c.b16 %v1201, %v1200
  %v1232 = vpack.c.b16 %v1203, %v1202
  %v1233 = vpack.c.b16 %v1205, %v1204
  %v1234 = vpack.c.b16 %v1207, %v1206
  %v1235 = vpack.c.b16 %v1209, %v1208
  %v1236 = vpack.c.b16 %v1211, %v1210
  %v1237 = vpack.c.b16 %v1213, %v1212
  %v1238 = vpack.c.b16 %v1215, %v1214
  %v1239 = vpack.c.b16 %v1217, %v1216
  %v1240 = vpack.c.b16 %v1219, %v1218
  %v1241 = vpack.c.b16 %v1221, %v1220
  %v1242 = vpack.c.b16 %v1223, %v1222
  %v1243 = vpack.c.b16 %v1225, %v1224
  %v1245 = vsel %vm165, %v1226, 0
  %v1248 = vsel %vm165, %v1227, 0
  %v1251 = vsel %vm165, %v1228, 0
  %v1254 = vsel %vm165, %v1229, 0
  %v1257 = vsel %vm165, %v1230, 0
  %v1260 = vsel %vm165, %v1231, 0
  %v1263 = vsel %vm165, %v1232, 0
  %v1266 = vsel %vm165, %v1233, 0
  %v1269 = vsel %vm165, %v1234, 0
  %v1272 = vsel %vm165, %v1235, 0
  %v1275 = vsel %vm165, %v1236, 0
  %v1278 = vsel %vm165, %v1237, 0
  %v1281 = vsel %vm165, %v1238, 0
  %v1284 = vsel %vm165, %v1239, 0
  %v1287 = vsel %vm165, %v1240, 0
  %v1290 = vsel %vm165, %v1241, 0
  %v1293 = vsel %vm165, %v1242, 0
  %v1296 = vsel %vm165, %v1243, 0
  %1298 = vmatprep.subr.bf16.mxu0 0
  %1299 = vmatpush1.bf16.msra.mxu0 0
  %1300 = vmatprep.subr.bf16.mxu0 0
  %1301 = vmatpush1.bf16.msra.mxu0 0
  %1302 = vmatprep.subr.bf16.mxu0 0
  %1303 = vmatpush1.bf16.msra.mxu0 0
  %1304 = vmatprep.subr.bf16.mxu0 0
  %1305 = vmatpush1.bf16.msra.mxu0 0
  %1306 = vmatprep.subr.bf16.mxu0 0
  %1307 = vmatpush1.bf16.msra.mxu0 0
  %1308 = vmatprep.subr.bf16.mxu0 0
  %1309 = vmatpush1.bf16.msra.mxu0 0
  %1310 = vmatprep.subr.bf16.mxu0 0
  %1311 = vmatpush1.bf16.msra.mxu0 %v225
  %1312 = vmatprep.subr.bf16.mxu0 0
  %1313 = vmatpush1.bf16.msra.mxu0 %v162
  %1314 = vmatprep.subr.bf16.mxu0 0
  %1315 = vmatpush2.bf16.msra.mxu0 0
  %1316 = vmatprep.subr.bf16.mxu0 0
  %1317 = vmatpush2.bf16.msra.mxu0 0
  %1318 = vmatprep.subr.bf16.mxu0 0
  %1319 = vmatpush2.bf16.msra.mxu0 0
  %1320 = vmatprep.subr.bf16.mxu0 0
  %1321 = vmatpush2.bf16.msra.mxu0 0
  %1322 = vmatprep.subr.bf16.mxu0 0
  %1323 = vmatpush2.bf16.msra.mxu0 0
  %1324 = vmatprep.subr.bf16.mxu0 0
  %1325 = vmatpush2.bf16.msra.mxu0 0
  %1326 = vmatprep.subr.bf16.mxu0 0
  %1327 = vmatpush2.bf16.msra.mxu0 0
  %1328 = vmatprep.subr.bf16.mxu0 0
  %1329 = vmatpush2.bf16.msra.mxu0 0
  %1330 = vmatprep.mubr.bf16.mxu0 0
  %1331 = vmatmul.mubr.bf16.gmra.mxu0 %v1245
  %v1332 = vpop.f32.mrf.mxu0
  %v1333 = vadd.f32 0.0, %v1332
  %v1334 = vpop.f32.mrf.mxu0
  %v1335 = vpop.f32.mrf.mxu0
  %v1336 = vadd.f32 0.0, %v1335
  %v1337 = vpop.f32.mrf.mxu0
  %1338 = vmatprep.mubr.bf16.mxu0 0
  %1339 = vmatmul.mubr.bf16.gmra.mxu0 %v1248
  %v1340 = vpop.f32.mrf.mxu0
  %v1341 = vadd.f32 0.0, %v1340
  %v1342 = vpop.f32.mrf.mxu0
  %v1343 = vpop.f32.mrf.mxu0
  %v1344 = vadd.f32 0.0, %v1343
  %v1345 = vpop.f32.mrf.mxu0
  %1346 = vmatprep.mubr.bf16.mxu0 0
  %1347 = vmatmul.mubr.bf16.gmra.mxu0 %v1251
  %v1348 = vpop.f32.mrf.mxu0
  %v1349 = vadd.f32 0.0, %v1348
  %v1350 = vpop.f32.mrf.mxu0
  %v1351 = vpop.f32.mrf.mxu0
  %v1352 = vadd.f32 0.0, %v1351
  %v1353 = vpop.f32.mrf.mxu0
  %1354 = vmatprep.mubr.bf16.mxu0 0
  %1355 = vmatmul.mubr.bf16.gmra.mxu0 %v1254
  %v1356 = vpop.f32.mrf.mxu0
  %v1357 = vadd.f32 0.0, %v1356
  %v1358 = vpop.f32.mrf.mxu0
  %v1359 = vpop.f32.mrf.mxu0
  %v1360 = vadd.f32 0.0, %v1359
  %v1361 = vpop.f32.mrf.mxu0
  %1362 = vmatprep.mubr.bf16.mxu0 0
  %1363 = vmatmul.mubr.bf16.gmra.mxu0 %v1257
  %v1364 = vpop.f32.mrf.mxu0
  %v1365 = vadd.f32 0.0, %v1364
  %v1366 = vpop.f32.mrf.mxu0
  %v1367 = vpop.f32.mrf.mxu0
  %v1368 = vadd.f32 0.0, %v1367
  %v1369 = vpop.f32.mrf.mxu0
  %1370 = vmatprep.mubr.bf16.mxu0 0
  %1371 = vmatmul.mubr.bf16.gmra.mxu0 %v1260
  %v1372 = vpop.f32.mrf.mxu0
  %v1373 = vadd.f32 0.0, %v1372
  %v1374 = vpop.f32.mrf.mxu0
  %v1375 = vpop.f32.mrf.mxu0
  %v1376 = vadd.f32 0.0, %v1375
  %v1377 = vpop.f32.mrf.mxu0
  %1378 = vmatprep.mubr.bf16.mxu0 0
  %1379 = vmatmul.mubr.bf16.gmra.mxu0 %v1263
  %v1380 = vpop.f32.mrf.mxu0
  %v1381 = vadd.f32 0.0, %v1380
  %v1382 = vpop.f32.mrf.mxu0
  %v1383 = vpop.f32.mrf.mxu0
  %v1384 = vadd.f32 0.0, %v1383
  %v1385 = vpop.f32.mrf.mxu0
  %1386 = vmatprep.mubr.bf16.mxu0 0
  %1387 = vmatmul.mubr.bf16.gmra.mxu0 %v1266
  %v1388 = vpop.f32.mrf.mxu0
  %v1389 = vadd.f32 0.0, %v1388
  %v1390 = vpop.f32.mrf.mxu0
  %v1391 = vpop.f32.mrf.mxu0
  %v1392 = vadd.f32 0.0, %v1391
  %v1393 = vpop.f32.mrf.mxu0
  %1394 = vmatprep.mubr.bf16.mxu0 0
  %1395 = vmatmul.mubr.bf16.gmra.mxu0 %v1269
  %v1396 = vpop.f32.mrf.mxu0
  %v1397 = vadd.f32 0.0, %v1396
  %v1398 = vpop.f32.mrf.mxu0
  %v1399 = vpop.f32.mrf.mxu0
  %v1400 = vadd.f32 0.0, %v1399
  %v1401 = vpop.f32.mrf.mxu0
  %1402 = vmatprep.mubr.bf16.mxu0 0
  %1403 = vmatmul.mubr.bf16.gmra.mxu0 %v1272
  %v1404 = vpop.f32.mrf.mxu0
  %v1405 = vadd.f32 0.0, %v1404
  %v1406 = vpop.f32.mrf.mxu0
  %v1407 = vpop.f32.mrf.mxu0
  %v1408 = vadd.f32 0.0, %v1407
  %v1409 = vpop.f32.mrf.mxu0
  %1410 = vmatprep.mubr.bf16.mxu0 0
  %1411 = vmatmul.mubr.bf16.gmra.mxu0 %v1275
  %v1412 = vpop.f32.mrf.mxu0
  %v1413 = vadd.f32 0.0, %v1412
  %v1414 = vpop.f32.mrf.mxu0
  %v1415 = vpop.f32.mrf.mxu0
  %v1416 = vadd.f32 0.0, %v1415
  %v1417 = vpop.f32.mrf.mxu0
  %1418 = vmatprep.mubr.bf16.mxu0 0
  %1419 = vmatmul.mubr.bf16.gmra.mxu0 %v1278
  %v1420 = vpop.f32.mrf.mxu0
  %v1421 = vadd.f32 0.0, %v1420
  %v1422 = vpop.f32.mrf.mxu0
  %v1423 = vpop.f32.mrf.mxu0
  %v1424 = vadd.f32 0.0, %v1423
  %v1425 = vpop.f32.mrf.mxu0
  %1426 = vmatprep.mubr.bf16.mxu0 0
  %1427 = vmatmul.mubr.bf16.gmra.mxu0 %v1281
  %v1428 = vpop.f32.mrf.mxu0
  %v1429 = vadd.f32 0.0, %v1428
  %v1430 = vpop.f32.mrf.mxu0
  %v1431 = vpop.f32.mrf.mxu0
  %v1432 = vadd.f32 0.0, %v1431
  %v1433 = vpop.f32.mrf.mxu0
  %1434 = vmatprep.mubr.bf16.mxu0 0
  %1435 = vmatmul.mubr.bf16.gmra.mxu0 %v1284
  %v1436 = vpop.f32.mrf.mxu0
  %v1437 = vadd.f32 0.0, %v1436
  %v1438 = vpop.f32.mrf.mxu0
  %v1439 = vpop.f32.mrf.mxu0
  %v1440 = vadd.f32 0.0, %v1439
  %v1441 = vpop.f32.mrf.mxu0
  %1442 = vmatprep.mubr.bf16.mxu0 0
  %1443 = vmatmul.mubr.bf16.gmra.mxu0 %v1287
  %v1444 = vpop.f32.mrf.mxu0
  %v1445 = vadd.f32 0.0, %v1444
  %v1446 = vpop.f32.mrf.mxu0
  %v1447 = vpop.f32.mrf.mxu0
  %v1448 = vadd.f32 0.0, %v1447
  %v1449 = vpop.f32.mrf.mxu0
  %1450 = vmatprep.mubr.bf16.mxu0 0
  %1451 = vmatmul.mubr.bf16.gmra.mxu0 %v1290
  %v1452 = vpop.f32.mrf.mxu0
  %v1453 = vadd.f32 0.0, %v1452
  %v1454 = vpop.f32.mrf.mxu0
  %v1455 = vpop.f32.mrf.mxu0
  %v1456 = vadd.f32 0.0, %v1455
  %v1457 = vpop.f32.mrf.mxu0
  %1458 = vmatprep.mubr.bf16.mxu0 0
  %1459 = vmatmul.mubr.bf16.gmra.mxu0 %v1293
  %v1460 = vpop.f32.mrf.mxu0
  %v1461 = vadd.f32 0.0, %v1460
  %v1462 = vpop.f32.mrf.mxu0
  %v1463 = vpop.f32.mrf.mxu0
  %v1464 = vadd.f32 0.0, %v1463
  %v1465 = vpop.f32.mrf.mxu0
  %1466 = vmatprep.mubr.bf16.mxu0 0
  %1467 = vmatmul.mubr.bf16.gmra.mxu0 %v1296
  %v1468 = vpop.f32.mrf.mxu0
  %v1469 = vadd.f32 0.0, %v1468
  %v1470 = vpop.f32.mrf.mxu0
  %v1471 = vpop.f32.mrf.mxu0
  %v1472 = vadd.f32 0.0, %v1471
  %v1473 = vpop.f32.mrf.mxu0
  %1474 = vdwg.mxu0
  %v1475 = vmax.f32 %v262, %v619
  %v1476 = vmax.f32 %v265, %v622
  %v1477 = vmax.f32 %v270, %v627
  %v1478 = vmax.f32 %v273, %v630
  %v1479 = vmax.f32 %v278, %v635
  %v1480 = vmax.f32 %v281, %v638
  %v1481 = vmax.f32 %v286, %v643
  %v1482 = vmax.f32 %v289, %v646
  %v1483 = vmax.f32 %v294, %v651
  %v1484 = vmax.f32 %v297, %v654
  %v1485 = vmax.f32 %v302, %v659
  %v1486 = vmax.f32 %v305, %v662
  %v1487 = vmax.f32 %v310, %v667
  %v1488 = vmax.f32 %v313, %v670
  %v1489 = vmax.f32 %v318, %v675
  %v1490 = vmax.f32 %v321, %v678
  %v1491 = vmax.f32 %v326, %v683
  %v1492 = vmax.f32 %v329, %v686
  %v1493 = vmax.f32 %v334, %v691
  %v1494 = vmax.f32 %v337, %v694
  %v1495 = vmax.f32 %v342, %v699
  %v1496 = vmax.f32 %v345, %v702
  %v1497 = vmax.f32 %v350, %v707
  %v1498 = vmax.f32 %v353, %v710
  %v1499 = vmax.f32 %v358, %v715
  %v1500 = vmax.f32 %v361, %v718
  %v1501 = vmax.f32 %v366, %v723
  %v1502 = vmax.f32 %v369, %v726
  %v1503 = vmax.f32 %v374, %v731
  %v1504 = vmax.f32 %v377, %v734
  %v1505 = vmax.f32 %v382, %v739
  %v1506 = vmax.f32 %v385, %v742
  %v1507 = vmax.f32 %v390, %v747
  %v1508 = vmax.f32 %v393, %v750
  %v1509 = vmax.f32 %v398, %v755
  %v1510 = vmax.f32 %v401, %v758
  %v1511 = vmax.f32 %v976, %v1333
  %v1512 = vmax.f32 %v979, %v1336
  %v1513 = vmax.f32 %v984, %v1341
  %v1514 = vmax.f32 %v987, %v1344
  %v1515 = vmax.f32 %v992, %v1349
  %v1516 = vmax.f32 %v995, %v1352
  %v1517 = vmax.f32 %v1000, %v1357
  %v1518 = vmax.f32 %v1003, %v1360
  %v1519 = vmax.f32 %v1008, %v1365
  %v1520 = vmax.f32 %v1011, %v1368
  %v1521 = vmax.f32 %v1016, %v1373
  %v1522 = vmax.f32 %v1019, %v1376
  %v1523 = vmax.f32 %v1024, %v1381
  %v1524 = vmax.f32 %v1027, %v1384
  %v1525 = vmax.f32 %v1032, %v1389
  %v1526 = vmax.f32 %v1035, %v1392
  %v1527 = vmax.f32 %v1040, %v1397
  %v1528 = vmax.f32 %v1043, %v1400
  %v1529 = vmax.f32 %v1048, %v1405
  %v1530 = vmax.f32 %v1051, %v1408
  %v1531 = vmax.f32 %v1056, %v1413
  %v1532 = vmax.f32 %v1059, %v1416
  %v1533 = vmax.f32 %v1064, %v1421
  %v1534 = vmax.f32 %v1067, %v1424
  %v1535 = vmax.f32 %v1072, %v1429
  %v1536 = vmax.f32 %v1075, %v1432
  %v1537 = vmax.f32 %v1080, %v1437
  %v1538 = vmax.f32 %v1083, %v1440
  %v1539 = vmax.f32 %v1088, %v1445
  %v1540 = vmax.f32 %v1091, %v1448
  %v1541 = vmax.f32 %v1096, %v1453
  %v1542 = vmax.f32 %v1099, %v1456
  %v1543 = vmax.f32 %v1104, %v1461
  %v1544 = vmax.f32 %v1107, %v1464
  %v1545 = vmax.f32 %v1112, %v1469
  %v1546 = vmax.f32 %v1115, %v1472
  %v1547 = vmax.f32 %v1475, %v1511
  %v1548 = vmax.f32 %v1476, %v1512
  %v1549 = vmax.f32 %v1477, %v1513
  %v1550 = vmax.f32 %v1478, %v1514
  %v1551 = vmax.f32 %v1479, %v1515
  %v1552 = vmax.f32 %v1480, %v1516
  %v1553 = vmax.f32 %v1481, %v1517
  %v1554 = vmax.f32 %v1482, %v1518
  %v1555 = vmax.f32 %v1483, %v1519
  %v1556 = vmax.f32 %v1484, %v1520
  %v1557 = vmax.f32 %v1485, %v1521
  %v1558 = vmax.f32 %v1486, %v1522
  %v1559 = vmax.f32 %v1487, %v1523
  %v1560 = vmax.f32 %v1488, %v1524
  %v1561 = vmax.f32 %v1489, %v1525
  %v1562 = vmax.f32 %v1490, %v1526
  %v1563 = vmax.f32 %v1491, %v1527
  %v1564 = vmax.f32 %v1492, %v1528
  %v1565 = vmax.f32 %v1493, %v1529
  %v1566 = vmax.f32 %v1494, %v1530
  %v1567 = vmax.f32 %v1495, %v1531
  %v1568 = vmax.f32 %v1496, %v1532
  %v1569 = vmax.f32 %v1497, %v1533
  %v1570 = vmax.f32 %v1498, %v1534
  %v1571 = vmax.f32 %v1499, %v1535
  %v1572 = vmax.f32 %v1500, %v1536
  %v1573 = vmax.f32 %v1501, %v1537
  %v1574 = vmax.f32 %v1502, %v1538
  %v1575 = vmax.f32 %v1503, %v1539
  %v1576 = vmax.f32 %v1504, %v1540
  %v1577 = vmax.f32 %v1505, %v1541
  %v1578 = vmax.f32 %v1506, %v1542
  %v1579 = vmax.f32 %v1507, %v1543
  %v1580 = vmax.f32 %v1508, %v1544
  %v1581 = vmax.f32 %v1509, %v1545
  %v1582 = vmax.f32 %v1510, %v1546
  %v1583 = vld [vmem:[%s5] sm:$0x1]
  %v1585 = vlaneseq
  %v1586 = vshrl.u32 %v1585, 7
  %v1587 = vsub.s32 0, %v1586
  %v1588 = vrot.slane %v1583, %v1587
  %v1590 = vadd.f32 %v1547, %v1588
  %v1591 = vadd.f32 %v1548, %v1588
  %v1592 = vadd.f32 %v1549, %v1588
  %v1593 = vadd.f32 %v1550, %v1588
  %v1594 = vadd.f32 %v1551, %v1588
  %v1595 = vadd.f32 %v1552, %v1588
  %v1596 = vadd.f32 %v1553, %v1588
  %v1597 = vadd.f32 %v1554, %v1588
  %v1598 = vadd.f32 %v1555, %v1588
  %v1599 = vadd.f32 %v1556, %v1588
  %v1600 = vadd.f32 %v1557, %v1588
  %v1601 = vadd.f32 %v1558, %v1588
  %v1602 = vadd.f32 %v1559, %v1588
  %v1603 = vadd.f32 %v1560, %v1588
  %v1604 = vadd.f32 %v1561, %v1588
  %v1605 = vadd.f32 %v1562, %v1588
  %v1606 = vadd.f32 %v1563, %v1588
  %v1607 = vadd.f32 %v1564, %v1588
  %v1608 = vadd.f32 %v1565, %v1588
  %v1609 = vadd.f32 %v1566, %v1588
  %v1610 = vadd.f32 %v1567, %v1588
  %v1611 = vadd.f32 %v1568, %v1588
  %v1612 = vadd.f32 %v1569, %v1588
  %v1613 = vadd.f32 %v1570, %v1588
  %v1614 = vadd.f32 %v1571, %v1588
  %v1615 = vadd.f32 %v1572, %v1588
  %v1616 = vadd.f32 %v1573, %v1588
  %v1617 = vadd.f32 %v1574, %v1588
  %v1618 = vadd.f32 %v1575, %v1588
  %v1619 = vadd.f32 %v1576, %v1588
  %v1620 = vadd.f32 %v1577, %v1588
  %v1621 = vadd.f32 %v1578, %v1588
  %v1622 = vadd.f32 %v1579, %v1588
  %v1623 = vadd.f32 %v1580, %v1588
  %v1624 = vadd.f32 %v1581, %v1588
  %v1625 = vadd.f32 %v1582, %v1588
  %v1626 = vmax.f32 %v1590, 0.0
  %v1627 = vmax.f32 %v1591, 0.0
  %v1628 = vmax.f32 %v1592, 0.0
  %v1629 = vmax.f32 %v1593, 0.0
  %v1630 = vmax.f32 %v1594, 0.0
  %v1631 = vmax.f32 %v1595, 0.0
  %v1632 = vmax.f32 %v1596, 0.0
  %v1633 = vmax.f32 %v1597, 0.0
  %v1634 = vmax.f32 %v1598, 0.0
  %v1635 = vmax.f32 %v1599, 0.0
  %v1636 = vmax.f32 %v1600, 0.0
  %v1637 = vmax.f32 %v1601, 0.0
  %v1638 = vmax.f32 %v1602, 0.0
  %v1639 = vmax.f32 %v1603, 0.0
  %v1640 = vmax.f32 %v1604, 0.0
  %v1641 = vmax.f32 %v1605, 0.0
  %v1642 = vmax.f32 %v1606, 0.0
  %v1643 = vmax.f32 %v1607, 0.0
  %v1644 = vmax.f32 %v1608, 0.0
  %v1645 = vmax.f32 %v1609, 0.0
  %v1646 = vmax.f32 %v1610, 0.0
  %v1647 = vmax.f32 %v1611, 0.0
  %v1648 = vmax.f32 %v1612, 0.0
  %v1649 = vmax.f32 %v1613, 0.0
  %v1650 = vmax.f32 %v1614, 0.0
  %v1651 = vmax.f32 %v1615, 0.0
  %v1652 = vmax.f32 %v1616, 0.0
  %v1653 = vmax.f32 %v1617, 0.0
  %v1654 = vmax.f32 %v1618, 0.0
  %v1655 = vmax.f32 %v1619, 0.0
  %v1656 = vmax.f32 %v1620, 0.0
  %v1657 = vmax.f32 %v1621, 0.0
  %v1658 = vmax.f32 %v1622, 0.0
  %v1659 = vmax.f32 %v1623, 0.0
  %v1660 = vmax.f32 %v1624, 0.0
  %v1661 = vmax.f32 %v1625, 0.0
  %v1662 = vpack.c.bf16 %v1627, %v1626
  %v1663 = vpack.c.bf16 %v1629, %v1628
  %v1664 = vpack.c.bf16 %v1631, %v1630
  %v1665 = vpack.c.bf16 %v1633, %v1632
  %v1666 = vpack.c.bf16 %v1635, %v1634
  %v1667 = vpack.c.bf16 %v1637, %v1636
  %v1668 = vpack.c.bf16 %v1639, %v1638
  %v1669 = vpack.c.bf16 %v1641, %v1640
  %v1670 = vpack.c.bf16 %v1643, %v1642
  %v1671 = vpack.c.bf16 %v1645, %v1644
  %v1672 = vpack.c.bf16 %v1647, %v1646
  %v1673 = vpack.c.bf16 %v1649, %v1648
  %v1674 = vpack.c.bf16 %v1651, %v1650
  %v1675 = vpack.c.bf16 %v1653, %v1652
  %v1676 = vpack.c.bf16 %v1655, %v1654
  %v1677 = vpack.c.bf16 %v1657, %v1656
  %v1678 = vpack.c.bf16 %v1659, %v1658
  %v1679 = vpack.c.bf16 %v1661, %v1660
  %v1698 = vunpack.c.l.b16 %v1662
  %v1699 = vunpack.c.h.b16 %v1662
  %v1700 = vunpack.c.l.b16 %v1663
  %v1701 = vunpack.c.h.b16 %v1663
  %v1702 = vunpack.c.l.b16 %v1664
  %v1703 = vunpack.c.h.b16 %v1664
  %v1704 = vunpack.c.l.b16 %v1665
  %v1705 = vunpack.c.h.b16 %v1665
  %v1706 = vunpack.c.l.b16 %v1666
  %v1707 = vunpack.c.h.b16 %v1666
  %v1708 = vunpack.c.l.b16 %v1667
  %v1709 = vunpack.c.h.b16 %v1667
  %v1710 = vunpack.c.l.b16 %v1668
  %v1711 = vunpack.c.h.b16 %v1668
  %v1712 = vunpack.c.l.b16 %v1669
  %v1713 = vunpack.c.h.b16 %v1669
  %v1714 = vunpack.c.l.b16 %v1670
  %v1715 = vunpack.c.h.b16 %v1670
  %v1716 = vunpack.c.l.b16 %v1671
  %v1717 = vunpack.c.h.b16 %v1671
  %v1718 = vunpack.c.l.b16 %v1672
  %v1719 = vunpack.c.h.b16 %v1672
  %v1720 = vunpack.c.l.b16 %v1673
  %v1721 = vunpack.c.h.b16 %v1673
  %v1722 = vunpack.c.l.b16 %v1674
  %v1723 = vunpack.c.h.b16 %v1674
  %v1724 = vunpack.c.l.b16 %v1675
  %v1725 = vunpack.c.h.b16 %v1675
  %v1726 = vunpack.c.l.b16 %v1676
  %v1727 = vunpack.c.h.b16 %v1676
  %v1728 = vunpack.c.l.b16 %v1677
  %v1729 = vunpack.c.h.b16 %v1677
  %v1730 = vunpack.c.l.b16 %v1678
  %v1731 = vunpack.c.h.b16 %v1678
  %v1732 = vunpack.c.l.b16 %v1679
  %v1733 = vunpack.c.h.b16 %v1679
  %v1734 = vpack.c.b16 %v1698, %v1698
  %v1735 = vpack.c.b16 %v1699, %v1699
  %v1736 = vpack.c.b16 %v1700, %v1700
  %v1737 = vpack.c.b16 %v1701, %v1701
  %v1738 = vpack.c.b16 %v1702, %v1702
  %v1739 = vpack.c.b16 %v1703, %v1703
  %v1740 = vpack.c.b16 %v1704, %v1704
  %v1741 = vpack.c.b16 %v1705, %v1705
  %v1742 = vpack.c.b16 %v1706, %v1706
  %v1743 = vpack.c.b16 %v1707, %v1707
  %v1744 = vpack.c.b16 %v1708, %v1708
  %v1745 = vpack.c.b16 %v1709, %v1709
  %v1746 = vpack.c.b16 %v1710, %v1710
  %v1747 = vpack.c.b16 %v1711, %v1711
  %v1748 = vpack.c.b16 %v1712, %v1712
  %v1749 = vpack.c.b16 %v1713, %v1713
  %v1750 = vpack.c.b16 %v1714, %v1714
  %v1751 = vpack.c.b16 %v1715, %v1715
  %v1752 = vpack.c.b16 %v1716, %v1716
  %v1753 = vpack.c.b16 %v1717, %v1717
  %v1754 = vpack.c.b16 %v1718, %v1718
  %v1755 = vpack.c.b16 %v1719, %v1719
  %v1756 = vpack.c.b16 %v1720, %v1720
  %v1757 = vpack.c.b16 %v1721, %v1721
  %v1758 = vpack.c.b16 %v1722, %v1722
  %v1759 = vpack.c.b16 %v1723, %v1723
  %v1760 = vpack.c.b16 %v1724, %v1724
  %v1761 = vpack.c.b16 %v1725, %v1725
  %v1762 = vpack.c.b16 %v1726, %v1726
  %v1763 = vpack.c.b16 %v1727, %v1727
  %v1764 = vpack.c.b16 %v1728, %v1728
  %v1765 = vpack.c.b16 %v1729, %v1729
  %v1766 = vpack.c.b16 %v1730, %v1730
  %v1767 = vpack.c.b16 %v1731, %v1731
  %v1768 = vpack.c.b16 %v1732, %v1732
  %v1769 = vpack.c.b16 %v1733, %v1733
  %1806 = vst [vmem:[%s6] sm:$0xf] %v1734
  %1807 = vst [vmem:[%s6 + $0x4] sm:$0xf] %v1735
  %1808 = vst [vmem:[%s6 + $0x8] sm:$0xf] %v1736
  %1809 = vst [vmem:[%s6 + $0xc] sm:$0xf] %v1737
  %1810 = vst [vmem:[%s6 + $0x10] sm:$0xf] %v1738
  %1811 = vst [vmem:[%s6 + $0x14] sm:$0xf] %v1739
  %1812 = vst [vmem:[%s6 + $0x18] sm:$0xf] %v1740
  %1813 = vst [vmem:[%s6 + $0x1c] sm:$0xf] %v1741
  %1814 = vst [vmem:[%s6 + $0x20] sm:$0xf] %v1742
  %1815 = vst [vmem:[%s6 + $0x24] sm:$0xf] %v1743
  %1816 = vst [vmem:[%s6 + $0x28] sm:$0xf] %v1744
  %1817 = vst [vmem:[%s6 + $0x2c] sm:$0xf] %v1745
  %1818 = vst [vmem:[%s6 + $0x30] sm:$0xf] %v1746
  %1819 = vst [vmem:[%s6 + $0x34] sm:$0xf] %v1747
  %1820 = vst [vmem:[%s6 + $0x38] sm:$0xf] %v1748
  %1821 = vst [vmem:[%s6 + $0x3c] sm:$0xf] %v1749
  %1822 = vst [vmem:[%s6 + $0x40] sm:$0xf] %v1750
  %1823 = vst [vmem:[%s6 + $0x44] sm:$0xf] %v1751
  %1824 = vst [vmem:[%s6 + $0x48] sm:$0xf] %v1752
  %1825 = vst [vmem:[%s6 + $0x4c] sm:$0xf] %v1753
  %1826 = vst [vmem:[%s6 + $0x50] sm:$0xf] %v1754
  %1827 = vst [vmem:[%s6 + $0x54] sm:$0xf] %v1755
  %1828 = vst [vmem:[%s6 + $0x58] sm:$0xf] %v1756
  %1829 = vst [vmem:[%s6 + $0x5c] sm:$0xf] %v1757
  %1830 = vst [vmem:[%s6 + $0x60] sm:$0xf] %v1758
  %1831 = vst [vmem:[%s6 + $0x64] sm:$0xf] %v1759
  %1832 = vst [vmem:[%s6 + $0x68] sm:$0xf] %v1760
  %1833 = vst [vmem:[%s6 + $0x6c] sm:$0xf] %v1761
  %1834 = vst [vmem:[%s6 + $0x70] sm:$0xf] %v1762
  %1835 = vst [vmem:[%s6 + $0x74] sm:$0xf] %v1763
  %1836 = vst [vmem:[%s6 + $0x78] sm:$0xf] %v1764
  %1837 = vst [vmem:[%s6 + $0x7c] sm:$0xf] %v1765
  %1838 = vst [vmem:[%s6 + $0x80] sm:$0xf] %v1766
  %1839 = vst [vmem:[%s6 + $0x84] sm:$0xf] %v1767
  %1840 = vst [vmem:[%s6 + $0x88] sm:$0xf] %v1768
  %1841 = vst [vmem:[%s6 + $0x8c] sm:$0xf] %v1769
  // Predicated region
  $region26: #{classifier_forward.3} parent=0 // pred_check
    _
  $region27: #{classifier_forward.3} parent=0 // pred_check_branch
    %1843 = sbr.rel (0) target = $region29
  $region28: #{classifier_forward.3} parent=0 // pred_region
    _
  $region29: #{classifier_forward.3} parent=0 // pred_fallthru
    _
  // Predicated region
  $region30: #{classifier_forward.3} parent=0 // pred_check
    _
  $region31: #{classifier_forward.3} parent=0 // pred_check_branch
    %1845 = sbr.rel (0) target = $region33
  $region32: #{classifier_forward.3} parent=0 // pred_region
    _
  $region33: #{classifier_forward.3} parent=0 // pred_fallthru
    _

// kernel: classifier_forward.4
$region0: #{classifier_forward.4}
  #allocation0 [shape = 'u32[]', space=smem, size = 0x4, offset = 0x4, fixed_abs, tag = 'smem constant byte address 0x4 - core index']
  #allocation1 [shape = 'u32[144,128]{1,0:T(1,128)}', space=vmem, size = 0x12000, scoped, tag = 'internal scratch']
  %s0 = inlined_call_operand.vmem [shape: bf16[32,250], index: 0, kind: input, shape index: {}]
  %s1 = inlined_call_operand.vmem [shape: bf16[32,250], index: 1, kind: input, shape index: {}]
  %s2 = inlined_call_operand.vmem [shape: bf16[32,250], index: 2, kind: input, shape index: {}]
  %s3 = inlined_call_operand.vmem [shape: bf16[32,250], index: 3, kind: input, shape index: {}]
  %s4 = inlined_call_operand.vmem [shape: bf16[250,128], index: 4, kind: input, shape index: {}]
  %s5 = inlined_call_operand.vmem [shape: f32[1,128], index: 5, kind: input, shape index: {}]
  %s6 = inlined_call_operand.vmem [shape: bf16[32,128], index: 6, kind: output, shape index: {}]
  %s7 = sld [smem:[#allocation0]]
  $region34: #{classifier_forward.4} parent=0
    _
  %s9 = ssub.s32 1, %s7
  %s10 = scalar_select 0, %s9, %s7
  // Predicated region
  $region2: #{classifier_forward.4} parent=0 // pred_check
    _
  $region3: #{classifier_forward.4} parent=0 // pred_check_branch
    %12 = sbr.rel (0) target = $region5
  $region4: #{classifier_forward.4} parent=0 // pred_region
    _
  $region5: #{classifier_forward.4} parent=0 // pred_fallthru
    _
  // Predicated region
  $region6: #{classifier_forward.4} parent=0 // pred_check
    _
  $region7: #{classifier_forward.4} parent=0 // pred_check_branch
    %14 = sbr.rel (0) target = $region9
  $region8: #{classifier_forward.4} parent=0 // pred_region
    _
  $region9: #{classifier_forward.4} parent=0 // pred_fallthru
    _
  // Predicated region
  $region10: #{classifier_forward.4} parent=0 // pred_check
    _
  $region11: #{classifier_forward.4} parent=0 // pred_check_branch
    %16 = sbr.rel (0) target = $region13
  $region12: #{classifier_forward.4} parent=0 // pred_region
    _
  $region13: #{classifier_forward.4} parent=0 // pred_fallthru
    _
  // Predicated region
  $region14: #{classifier_forward.4} parent=0 // pred_check
    _
  $region15: #{classifier_forward.4} parent=0 // pred_check_branch
    %18 = sbr.rel (0) target = $region17
  $region16: #{classifier_forward.4} parent=0 // pred_region
    _
  $region17: #{classifier_forward.4} parent=0 // pred_fallthru
    _
  // Predicated region
  $region18: #{classifier_forward.4} parent=0 // pred_check
    _
  $region19: #{classifier_forward.4} parent=0 // pred_check_branch
    %20 = sbr.rel (0) target = $region21
  $region20: #{classifier_forward.4} parent=0 // pred_region
    _
  $region21: #{classifier_forward.4} parent=0 // pred_fallthru
    _
  // Predicated region
  $region22: #{classifier_forward.4} parent=0 // pred_check
    _
  $region23: #{classifier_forward.4} parent=0 // pred_check_branch
    %22 = sbr.rel (0) target = $region25
  $region24: #{classifier_forward.4} parent=0 // pred_region
    _
  $region25: #{classifier_forward.4} parent=0 // pred_fallthru
    _
  %v24 = vld [vmem:[%s4] sm:$0xf]
  %v25 = vld [vmem:[%s4 + $0x4] sm:$0xf]
  %v26 = vld [vmem:[%s4 + $0x8] sm:$0xf]
  %v27 = vld [vmem:[%s4 + $0xc] sm:$0xf]
  %v28 = vld [vmem:[%s4 + $0x10] sm:$0xf]
  %v29 = vld [vmem:[%s4 + $0x14] sm:$0xf]
  %v30 = vld [vmem:[%s4 + $0x18] sm:$0xf]
  %v31 = vld [vmem:[%s4 + $0x1c] sm:$0xf]
  %v32 = vld [vmem:[%s4 + $0x20] sm:$0xf]
  %v33 = vld [vmem:[%s4 + $0x24] sm:$0xf]
  %v34 = vld [vmem:[%s4 + $0x28] sm:$0xf]
  %v35 = vld [vmem:[%s4 + $0x2c] sm:$0xf]
  %v36 = vld [vmem:[%s4 + $0x30] sm:$0xf]
  %v37 = vld [vmem:[%s4 + $0x34] sm:$0xf]
  %v38 = vld [vmem:[%s4 + $0x38] sm:$0xf]
  %v39 = vld [vmem:[%s4 + $0x3c] sm:$0xf]
  %v40 = vld [vmem:[%s4 + $0x40] sm:$0xf]
  %v41 = vld [vmem:[%s4 + $0x44] sm:$0xf]
  %v42 = vld [vmem:[%s4 + $0x48] sm:$0xf]
  %v43 = vld [vmem:[%s4 + $0x4c] sm:$0xf]
  %v44 = vld [vmem:[%s4 + $0x50] sm:$0xf]
  %v45 = vld [vmem:[%s4 + $0x54] sm:$0xf]
  %v46 = vld [vmem:[%s4 + $0x58] sm:$0xf]
  %v47 = vld [vmem:[%s4 + $0x5c] sm:$0xf]
  %v48 = vld [vmem:[%s4 + $0x60] sm:$0xf]
  %v49 = vld [vmem:[%s4 + $0x64] sm:$0xf]
  %v50 = vld [vmem:[%s4 + $0x68] sm:$0xf]
  %v51 = vld [vmem:[%s4 + $0x6c] sm:$0xf]
  %v52 = vld [vmem:[%s4 + $0x70] sm:$0xf]
  %v53 = vld [vmem:[%s4 + $0x74] sm:$0xf]
  %v54 = vld [vmem:[%s4 + $0x78] sm:$0xf]
  %v55 = vld [vmem:[%s4 + $0x7c] sm:$0x1]
  %v56 = vld [vmem:[%s0] sm:$0xff]
  %v57 = vld [vmem:[%s0 + $0x8] sm:$0xff]
  %v58 = vld [vmem:[%s0 + $0x10] sm:$0xff]
  %v59 = vld [vmem:[%s0 + $0x18] sm:$0xff]
  %v64 = vunpack.c.l.b16 %v56
  %v65 = vunpack.c.h.b16 %v56
  %v66 = vunpack.c.l.b16 %v57
  %v67 = vunpack.c.h.b16 %v57
  %v68 = vunpack.c.l.b16 %v58
  %v69 = vunpack.c.h.b16 %v58
  %v70 = vunpack.c.l.b16 %v59
  %v71 = vunpack.c.h.b16 %v59
  %v72 = vpack.c.b16 %v66, %v64
  %v73 = vpack.c.b16 %v67, %v65
  %v74 = vpack.c.b16 %v70, %v68
  %v75 = vpack.c.b16 %v71, %v69
  %v110 = vunpack.c.l.b16 %v24
  %v111 = vunpack.c.l.b16 %v25
  %v112 = vunpack.c.l.b16 %v26
  %v113 = vunpack.c.l.b16 %v27
  %v114 = vunpack.c.l.b16 %v28
  %v115 = vunpack.c.l.b16 %v29
  %v116 = vunpack.c.l.b16 %v30
  %v117 = vunpack.c.l.b16 %v31
  %v118 = vunpack.c.l.b16 %v32
  %v119 = vunpack.c.l.b16 %v33
  %v120 = vunpack.c.l.b16 %v34
  %v121 = vunpack.c.l.b16 %v35
  %v122 = vunpack.c.l.b16 %v36
  %v123 = vunpack.c.l.b16 %v37
  %v124 = vunpack.c.l.b16 %v38
  %v125 = vunpack.c.l.b16 %v39
  %v126 = vunpack.c.l.b16 %v40
  %v127 = vunpack.c.l.b16 %v41
  %v128 = vunpack.c.l.b16 %v42
  %v129 = vunpack.c.l.b16 %v43
  %v130 = vunpack.c.l.b16 %v44
  %v131 = vunpack.c.l.b16 %v45
  %v132 = vunpack.c.l.b16 %v46
  %v133 = vunpack.c.l.b16 %v47
  %v134 = vunpack.c.l.b16 %v48
  %v135 = vunpack.c.l.b16 %v49
  %v136 = vunpack.c.l.b16 %v50
  %v137 = vunpack.c.l.b16 %v51
  %v138 = vunpack.c.l.b16 %v52
  %v139 = vunpack.c.l.b16 %v53
  %v140 = vunpack.c.l.b16 %v54
  %v141 = vunpack.c.l.b16 %v55
  %v142 = vpack.c.b16 %v111, %v110
  %v143 = vpack.c.b16 %v113, %v112
  %v144 = vpack.c.b16 %v115, %v114
  %v145 = vpack.c.b16 %v117, %v116
  %v146 = vpack.c.b16 %v119, %v118
  %v147 = vpack.c.b16 %v121, %v120
  %v148 = vpack.c.b16 %v123, %v122
  %v149 = vpack.c.b16 %v125, %v124
  %v150 = vpack.c.b16 %v127, %v126
  %v151 = vpack.c.b16 %v129, %v128
  %v152 = vpack.c.b16 %v131, %v130
  %v153 = vpack.c.b16 %v133, %v132
  %v154 = vpack.c.b16 %v135, %v134
  %v155 = vpack.c.b16 %v137, %v136
  %v156 = vpack.c.b16 %v139, %v138
  %v157 = vpack.c.b16 %v141, %v140
  %vm173 = vcmask 998400
  %v175 = vsel %vm173, %v73, 0
  %v178 = vsel %vm173, %v75, 0
  %vm180 = vcmask 1044480
  %v182 = vsel %vm180, %v157, 0
  %184 = vmatprep.subr.bf16.mxu0 0
  %185 = vmatpush1.bf16.msra.mxu0 %v149
  %186 = vmatprep.subr.bf16.mxu0 0
  %187 = vmatpush1.bf16.msra.mxu0 %v148
  %188 = vmatprep.subr.bf16.mxu0 0
  %189 = vmatpush1.bf16.msra.mxu0 %v147
  %190 = vmatprep.subr.bf16.mxu0 0
  %191 = vmatpush1.bf16.msra.mxu0 %v146
  %192 = vmatprep.subr.bf16.mxu0 0
  %193 = vmatpush1.bf16.msra.mxu0 %v145
  %194 = vmatprep.subr.bf16.mxu0 0
  %195 = vmatpush1.bf16.msra.mxu0 %v144
  %196 = vmatprep.subr.bf16.mxu0 0
  %197 = vmatpush1.bf16.msra.mxu0 %v143
  %198 = vmatprep.subr.bf16.mxu0 0
  %199 = vmatpush1.bf16.msra.mxu0 %v142
  %200 = vmatprep.subr.bf16.mxu0 0
  %201 = vmatpush2.bf16.msra.mxu0 %v182
  %202 = vmatprep.subr.bf16.mxu0 0
  %203 = vmatpush2.bf16.msra.mxu0 %v156
  %204 = vmatprep.subr.bf16.mxu0 0
  %205 = vmatpush2.bf16.msra.mxu0 %v155
  %206 = vmatprep.subr.bf16.mxu0 0
  %207 = vmatpush2.bf16.msra.mxu0 %v154
  %208 = vmatprep.subr.bf16.mxu0 0
  %209 = vmatpush2.bf16.msra.mxu0 %v153
  %210 = vmatprep.subr.bf16.mxu0 0
  %211 = vmatpush2.bf16.msra.mxu0 %v152
  %212 = vmatprep.subr.bf16.mxu0 0
  %213 = vmatpush2.bf16.msra.mxu0 %v151
  %214 = vmatprep.subr.bf16.mxu0 0
  %215 = vmatpush2.bf16.msra.mxu0 %v150
  %216 = vmatprep.mubr.bf16.mxu0 %v175
  %217 = vmatmul.mubr.bf16.gmra.mxu0 %v72
  %v218 = vpop.f32.mrf.mxu0
  %v219 = vadd.f32 0.0, %v218
  %v220 = vpop.f32.mrf.mxu0
  %v221 = vpop.f32.mrf.mxu0
  %v222 = vadd.f32 0.0, %v221
  %v223 = vpop.f32.mrf.mxu0
  %224 = vmatprep.mubr.bf16.mxu0 %v178
  %225 = vmatmul.mubr.bf16.gmra.mxu0 %v74
  %v226 = vpop.f32.mrf.mxu0
  %v227 = vadd.f32 0.0, %v226
  %v228 = vpop.f32.mrf.mxu0
  %v229 = vpop.f32.mrf.mxu0
  %v230 = vadd.f32 0.0, %v229
  %v231 = vpop.f32.mrf.mxu0
  %232 = vdwg.mxu0
  %v233 = vld [vmem:[%s1] sm:$0xff]
  %v234 = vld [vmem:[%s1 + $0x8] sm:$0xff]
  %v235 = vld [vmem:[%s1 + $0x10] sm:$0xff]
  %v236 = vld [vmem:[%s1 + $0x18] sm:$0xff]
  %v241 = vunpack.c.l.b16 %v233
  %v242 = vunpack.c.h.b16 %v233
  %v243 = vunpack.c.l.b16 %v234
  %v244 = vunpack.c.h.b16 %v234
  %v245 = vunpack.c.l.b16 %v235
  %v246 = vunpack.c.h.b16 %v235
  %v247 = vunpack.c.l.b16 %v236
  %v248 = vunpack.c.h.b16 %v236
  %v249 = vpack.c.b16 %v243, %v241
  %v250 = vpack.c.b16 %v244, %v242
  %v251 = vpack.c.b16 %v247, %v245
  %v252 = vpack.c.b16 %v248, %v246
  %v256 = vsel %vm173, %v250, 0
  %v259 = vsel %vm173, %v252, 0
  %261 = vmatprep.subr.bf16.mxu0 0
  %262 = vmatpush1.bf16.msra.mxu0 %v149
  %263 = vmatprep.subr.bf16.mxu0 0
  %264 = vmatpush1.bf16.msra.mxu0 %v148
  %265 = vmatprep.subr.bf16.mxu0 0
  %266 = vmatpush1.bf16.msra.mxu0 %v147
  %267 = vmatprep.subr.bf16.mxu0 0
  %268 = vmatpush1.bf16.msra.mxu0 %v146
  %269 = vmatprep.subr.bf16.mxu0 0
  %270 = vmatpush1.bf16.msra.mxu0 %v145
  %271 = vmatprep.subr.bf16.mxu0 0
  %272 = vmatpush1.bf16.msra.mxu0 %v144
  %273 = vmatprep.subr.bf16.mxu0 0
  %274 = vmatpush1.bf16.msra.mxu0 %v143
  %275 = vmatprep.subr.bf16.mxu0 0
  %276 = vmatpush1.bf16.msra.mxu0 %v142
  %277 = vmatprep.subr.bf16.mxu0 0
  %278 = vmatpush2.bf16.msra.mxu0 %v182
  %279 = vmatprep.subr.bf16.mxu0 0
  %280 = vmatpush2.bf16.msra.mxu0 %v156
  %281 = vmatprep.subr.bf16.mxu0 0
  %282 = vmatpush2.bf16.msra.mxu0 %v155
  %283 = vmatprep.subr.bf16.mxu0 0
  %284 = vmatpush2.bf16.msra.mxu0 %v154
  %285 = vmatprep.subr.bf16.mxu0 0
  %286 = vmatpush2.bf16.msra.mxu0 %v153
  %287 = vmatprep.subr.bf16.mxu0 0
  %288 = vmatpush2.bf16.msra.mxu0 %v152
  %289 = vmatprep.subr.bf16.mxu0 0
  %290 = vmatpush2.bf16.msra.mxu0 %v151
  %291 = vmatprep.subr.bf16.mxu0 0
  %292 = vmatpush2.bf16.msra.mxu0 %v150
  %293 = vmatprep.mubr.bf16.mxu0 %v256
  %294 = vmatmul.mubr.bf16.gmra.mxu0 %v249
  %v295 = vpop.f32.mrf.mxu0
  %v296 = vadd.f32 0.0, %v295
  %v297 = vpop.f32.mrf.mxu0
  %v298 = vpop.f32.mrf.mxu0
  %v299 = vadd.f32 0.0, %v298
  %v300 = vpop.f32.mrf.mxu0
  %301 = vmatprep.mubr.bf16.mxu0 %v259
  %302 = vmatmul.mubr.bf16.gmra.mxu0 %v251
  %v303 = vpop.f32.mrf.mxu0
  %v304 = vadd.f32 0.0, %v303
  %v305 = vpop.f32.mrf.mxu0
  %v306 = vpop.f32.mrf.mxu0
  %v307 = vadd.f32 0.0, %v306
  %v308 = vpop.f32.mrf.mxu0
  %309 = vdwg.mxu0
  %v310 = vld [vmem:[%s2] sm:$0xff]
  %v311 = vld [vmem:[%s2 + $0x8] sm:$0xff]
  %v312 = vld [vmem:[%s2 + $0x10] sm:$0xff]
  %v313 = vld [vmem:[%s2 + $0x18] sm:$0xff]
  %v318 = vunpack.c.l.b16 %v310
  %v319 = vunpack.c.h.b16 %v310
  %v320 = vunpack.c.l.b16 %v311
  %v321 = vunpack.c.h.b16 %v311
  %v322 = vunpack.c.l.b16 %v312
  %v323 = vunpack.c.h.b16 %v312
  %v324 = vunpack.c.l.b16 %v313
  %v325 = vunpack.c.h.b16 %v313
  %v326 = vpack.c.b16 %v320, %v318
  %v327 = vpack.c.b16 %v321, %v319
  %v328 = vpack.c.b16 %v324, %v322
  %v329 = vpack.c.b16 %v325, %v323
  %v333 = vsel %vm173, %v327, 0
  %v336 = vsel %vm173, %v329, 0
  %338 = vmatprep.subr.bf16.mxu0 0
  %339 = vmatpush1.bf16.msra.mxu0 %v149
  %340 = vmatprep.subr.bf16.mxu0 0
  %341 = vmatpush1.bf16.msra.mxu0 %v148
  %342 = vmatprep.subr.bf16.mxu0 0
  %343 = vmatpush1.bf16.msra.mxu0 %v147
  %344 = vmatprep.subr.bf16.mxu0 0
  %345 = vmatpush1.bf16.msra.mxu0 %v146
  %346 = vmatprep.subr.bf16.mxu0 0
  %347 = vmatpush1.bf16.msra.mxu0 %v145
  %348 = vmatprep.subr.bf16.mxu0 0
  %349 = vmatpush1.bf16.msra.mxu0 %v144
  %350 = vmatprep.subr.bf16.mxu0 0
  %351 = vmatpush1.bf16.msra.mxu0 %v143
  %352 = vmatprep.subr.bf16.mxu0 0
  %353 = vmatpush1.bf16.msra.mxu0 %v142
  %354 = vmatprep.subr.bf16.mxu0 0
  %355 = vmatpush2.bf16.msra.mxu0 %v182
  %356 = vmatprep.subr.bf16.mxu0 0
  %357 = vmatpush2.bf16.msra.mxu0 %v156
  %358 = vmatprep.subr.bf16.mxu0 0
  %359 = vmatpush2.bf16.msra.mxu0 %v155
  %360 = vmatprep.subr.bf16.mxu0 0
  %361 = vmatpush2.bf16.msra.mxu0 %v154
  %362 = vmatprep.subr.bf16.mxu0 0
  %363 = vmatpush2.bf16.msra.mxu0 %v153
  %364 = vmatprep.subr.bf16.mxu0 0
  %365 = vmatpush2.bf16.msra.mxu0 %v152
  %366 = vmatprep.subr.bf16.mxu0 0
  %367 = vmatpush2.bf16.msra.mxu0 %v151
  %368 = vmatprep.subr.bf16.mxu0 0
  %369 = vmatpush2.bf16.msra.mxu0 %v150
  %370 = vmatprep.mubr.bf16.mxu0 %v333
  %371 = vmatmul.mubr.bf16.gmra.mxu0 %v326
  %v372 = vpop.f32.mrf.mxu0
  %v373 = vadd.f32 0.0, %v372
  %v374 = vpop.f32.mrf.mxu0
  %v375 = vpop.f32.mrf.mxu0
  %v376 = vadd.f32 0.0, %v375
  %v377 = vpop.f32.mrf.mxu0
  %378 = vmatprep.mubr.bf16.mxu0 %v336
  %379 = vmatmul.mubr.bf16.gmra.mxu0 %v328
  %v380 = vpop.f32.mrf.mxu0
  %v381 = vadd.f32 0.0, %v380
  %v382 = vpop.f32.mrf.mxu0
  %v383 = vpop.f32.mrf.mxu0
  %v384 = vadd.f32 0.0, %v383
  %v385 = vpop.f32.mrf.mxu0
  %386 = vdwg.mxu0
  %v387 = vld [vmem:[%s3] sm:$0xff]
  %v388 = vld [vmem:[%s3 + $0x8] sm:$0xff]
  %v389 = vld [vmem:[%s3 + $0x10] sm:$0xff]
  %v390 = vld [vmem:[%s3 + $0x18] sm:$0xff]
  %v395 = vunpack.c.l.b16 %v387
  %v396 = vunpack.c.h.b16 %v387
  %v397 = vunpack.c.l.b16 %v388
  %v398 = vunpack.c.h.b16 %v388
  %v399 = vunpack.c.l.b16 %v389
  %v400 = vunpack.c.h.b16 %v389
  %v401 = vunpack.c.l.b16 %v390
  %v402 = vunpack.c.h.b16 %v390
  %v403 = vpack.c.b16 %v397, %v395
  %v404 = vpack.c.b16 %v398, %v396
  %v405 = vpack.c.b16 %v401, %v399
  %v406 = vpack.c.b16 %v402, %v400
  %v410 = vsel %vm173, %v404, 0
  %v413 = vsel %vm173, %v406, 0
  %415 = vmatprep.subr.bf16.mxu0 0
  %416 = vmatpush1.bf16.msra.mxu0 %v149
  %417 = vmatprep.subr.bf16.mxu0 0
  %418 = vmatpush1.bf16.msra.mxu0 %v148
  %419 = vmatprep.subr.bf16.mxu0 0
  %420 = vmatpush1.bf16.msra.mxu0 %v147
  %421 = vmatprep.subr.bf16.mxu0 0
  %422 = vmatpush1.bf16.msra.mxu0 %v146
  %423 = vmatprep.subr.bf16.mxu0 0
  %424 = vmatpush1.bf16.msra.mxu0 %v145
  %425 = vmatprep.subr.bf16.mxu0 0
  %426 = vmatpush1.bf16.msra.mxu0 %v144
  %427 = vmatprep.subr.bf16.mxu0 0
  %428 = vmatpush1.bf16.msra.mxu0 %v143
  %429 = vmatprep.subr.bf16.mxu0 0
  %430 = vmatpush1.bf16.msra.mxu0 %v142
  %431 = vmatprep.subr.bf16.mxu0 0
  %432 = vmatpush2.bf16.msra.mxu0 %v182
  %433 = vmatprep.subr.bf16.mxu0 0
  %434 = vmatpush2.bf16.msra.mxu0 %v156
  %435 = vmatprep.subr.bf16.mxu0 0
  %436 = vmatpush2.bf16.msra.mxu0 %v155
  %437 = vmatprep.subr.bf16.mxu0 0
  %438 = vmatpush2.bf16.msra.mxu0 %v154
  %439 = vmatprep.subr.bf16.mxu0 0
  %440 = vmatpush2.bf16.msra.mxu0 %v153
  %441 = vmatprep.subr.bf16.mxu0 0
  %442 = vmatpush2.bf16.msra.mxu0 %v152
  %443 = vmatprep.subr.bf16.mxu0 0
  %444 = vmatpush2.bf16.msra.mxu0 %v151
  %445 = vmatprep.subr.bf16.mxu0 0
  %446 = vmatpush2.bf16.msra.mxu0 %v150
  %447 = vmatprep.mubr.bf16.mxu0 %v410
  %448 = vmatmul.mubr.bf16.gmra.mxu0 %v403
  %v449 = vpop.f32.mrf.mxu0
  %v450 = vadd.f32 0.0, %v449
  %v451 = vpop.f32.mrf.mxu0
  %v452 = vpop.f32.mrf.mxu0
  %v453 = vadd.f32 0.0, %v452
  %v454 = vpop.f32.mrf.mxu0
  %455 = vmatprep.mubr.bf16.mxu0 %v413
  %456 = vmatmul.mubr.bf16.gmra.mxu0 %v405
  %v457 = vpop.f32.mrf.mxu0
  %v458 = vadd.f32 0.0, %v457
  %v459 = vpop.f32.mrf.mxu0
  %v460 = vpop.f32.mrf.mxu0
  %v461 = vadd.f32 0.0, %v460
  %v462 = vpop.f32.mrf.mxu0
  %463 = vdwg.mxu0
  %v464 = vmax.f32 %v219, %v296
  %v465 = vmax.f32 %v222, %v299
  %v466 = vmax.f32 %v227, %v304
  %v467 = vmax.f32 %v230, %v307
  %v468 = vmax.f32 %v373, %v450
  %v469 = vmax.f32 %v376, %v453
  %v470 = vmax.f32 %v381, %v458
  %v471 = vmax.f32 %v384, %v461
  %v472 = vmax.f32 %v464, %v468
  %v473 = vmax.f32 %v465, %v469
  %v474 = vmax.f32 %v466, %v470
  %v475 = vmax.f32 %v467, %v471
  %v476 = vld [vmem:[%s5] sm:$0x1]
  %v478 = vlaneseq
  %v479 = vshrl.u32 %v478, 7
  %v480 = vsub.s32 0, %v479
  %v481 = vrot.slane %v476, %v480
  %v483 = vadd.f32 %v472, %v481
  %v484 = vadd.f32 %v473, %v481
  %v485 = vadd.f32 %v474, %v481
  %v486 = vadd.f32 %v475, %v481
  %v487 = vmax.f32 %v483, 0.0
  %v488 = vmax.f32 %v484, 0.0
  %v489 = vmax.f32 %v485, 0.0
  %v490 = vmax.f32 %v486, 0.0
  %v491 = vpack.c.bf16 %v488, %v487
  %v492 = vpack.c.bf16 %v490, %v489
  %v495 = vunpack.c.l.b16 %v491
  %v496 = vunpack.c.h.b16 %v491
  %v497 = vunpack.c.l.b16 %v492
  %v498 = vunpack.c.h.b16 %v492
  %v499 = vpack.c.b16 %v495, %v495
  %v500 = vpack.c.b16 %v496, %v496
  %v501 = vpack.c.b16 %v497, %v497
  %v502 = vpack.c.b16 %v498, %v498
  %507 = vst [vmem:[%s6] sm:$0xf] %v499
  %508 = vst [vmem:[%s6 + $0x4] sm:$0xf] %v500
  %509 = vst [vmem:[%s6 + $0x8] sm:$0xf] %v501
  %510 = vst [vmem:[%s6 + $0xc] sm:$0xf] %v502
  // Predicated region
  $region26: #{classifier_forward.4} parent=0 // pred_check
    _
  $region27: #{classifier_forward.4} parent=0 // pred_check_branch
    %512 = sbr.rel (0) target = $region29
  $region28: #{classifier_forward.4} parent=0 // pred_region
    _
  $region29: #{classifier_forward.4} parent=0 // pred_fallthru
    _
  // Predicated region
  $region30: #{classifier_forward.4} parent=0 // pred_check
    _
  $region31: #{classifier_forward.4} parent=0 // pred_check_branch
    %514 = sbr.rel (0) target = $region33
  $region32: #{classifier_forward.4} parent=0 // pred_region
    _
  $region33: #{classifier_forward.4} parent=0 // pred_fallthru
    _

// kernel: classifier_forward.5
$region0: #{classifier_forward.5}
  #allocation0 [shape = 'u32[]', space=smem, size = 0x4, offset = 0x4, fixed_abs, tag = 'smem constant byte address 0x4 - core index']
  #allocation1 [shape = 'u32[144,128]{1,0:T(1,128)}', space=vmem, size = 0x12000, scoped, tag = 'internal scratch']
  %s0 = inlined_call_operand.vmem [shape: bf16[8,2048], index: 0, kind: input, shape index: {}]
  %s1 = inlined_call_operand.vmem [shape: bf16[2048,128], index: 1, kind: input, shape index: {}]
  %s2 = inlined_call_operand.vmem [shape: f32[1,128], index: 2, kind: input, shape index: {}]
  %s3 = inlined_call_operand.vmem [shape: bf16[128,128], index: 3, kind: input, shape index: {}]
  %s4 = inlined_call_operand.vmem [shape: f32[1,128], index: 4, kind: input, shape index: {}]
  %s5 = inlined_call_operand.vmem [shape: f32[8,128], index: 5, kind: output, shape index: {}]
  %s6 = sld [smem:[#allocation0]]
  $region30: #{classifier_forward.5} parent=0
    _
  %s8 = ssub.s32 1, %s6
  %s9 = scalar_select 0, %s8, %s6
  // Predicated region
  $region2: #{classifier_forward.5} parent=0 // pred_check
    _
  $region3: #{classifier_forward.5} parent=0 // pred_check_branch
    %11 = sbr.rel (0) target = $region5
  $region4: #{classifier_forward.5} parent=0 // pred_region
    _
  $region5: #{classifier_forward.5} parent=0 // pred_fallthru
    _
  // Predicated region
  $region6: #{classifier_forward.5} parent=0 // pred_check
    _
  $region7: #{classifier_forward.5} parent=0 // pred_check_branch
    %13 = sbr.rel (0) target = $region9
  $region8: #{classifier_forward.5} parent=0 // pred_region
    _
  $region9: #{classifier_forward.5} parent=0 // pred_fallthru
    _
  // Predicated region
  $region10: #{classifier_forward.5} parent=0 // pred_check
    _
  $region11: #{classifier_forward.5} parent=0 // pred_check_branch
    %15 = sbr.rel (0) target = $region13
  $region12: #{classifier_forward.5} parent=0 // pred_region
    _
  $region13: #{classifier_forward.5} parent=0 // pred_fallthru
    _
  // Predicated region
  $region14: #{classifier_forward.5} parent=0 // pred_check
    _
  $region15: #{classifier_forward.5} parent=0 // pred_check_branch
    %17 = sbr.rel (0) target = $region17
  $region16: #{classifier_forward.5} parent=0 // pred_region
    _
  $region17: #{classifier_forward.5} parent=0 // pred_fallthru
    _
  // Predicated region
  $region18: #{classifier_forward.5} parent=0 // pred_check
    _
  $region19: #{classifier_forward.5} parent=0 // pred_check_branch
    %19 = sbr.rel (0) target = $region21
  $region20: #{classifier_forward.5} parent=0 // pred_region
    _
  $region21: #{classifier_forward.5} parent=0 // pred_fallthru
    _
  %v21 = vld [vmem:[%s0] sm:$0xff]
  %v22 = vld [vmem:[%s0 + $0x8] sm:$0xff]
  %v23 = vld [vmem:[%s0 + $0x10] sm:$0xff]
  %v24 = vld [vmem:[%s0 + $0x18] sm:$0xff]
  %v25 = vld [vmem:[%s0 + $0x20] sm:$0xff]
  %v26 = vld [vmem:[%s0 + $0x28] sm:$0xff]
  %v27 = vld [vmem:[%s0 + $0x30] sm:$0xff]
  %v28 = vld [vmem:[%s0 + $0x38] sm:$0xff]
  %v29 = vld [vmem:[%s1] sm:$0xf]
  %v30 = vld [vmem:[%s1 + $0x4] sm:$0xf]
  %v31 = vld [vmem:[%s1 + $0x8] sm:$0xf]
  %v32 = vld [vmem:[%s1 + $0xc] sm:$0xf]
  %v33 = vld [vmem:[%s1 + $0x10] sm:$0xf]
  %v34 = vld [vmem:[%s1 + $0x14] sm:$0xf]
  %v35 = vld [vmem:[%s1 + $0x18] sm:$0xf]
  %v36 = vld [vmem:[%s1 + $0x1c] sm:$0xf]
  %v37 = vld [vmem:[%s1 + $0x20] sm:$0xf]
  %v38 = vld [vmem:[%s1 + $0x24] sm:$0xf]
  %v39 = vld [vmem:[%s1 + $0x28] sm:$0xf]
  %v40 = vld [vmem:[%s1 + $0x2c] sm:$0xf]
  %v41 = vld [vmem:[%s1 + $0x30] sm:$0xf]
  %v42 = vld [vmem:[%s1 + $0x34] sm:$0xf]
  %v43 = vld [vmem:[%s1 + $0x38] sm:$0xf]
  %v44 = vld [vmem:[%s1 + $0x3c] sm:$0xf]
  %v45 = vld [vmem:[%s1 + $0x40] sm:$0xf]
  %v46 = vld [vmem:[%s1 + $0x44] sm:$0xf]
  %v47 = vld [vmem:[%s1 + $0x48] sm:$0xf]
  %v48 = vld [vmem:[%s1 + $0x4c] sm:$0xf]
  %v49 = vld [vmem:[%s1 + $0x50] sm:$0xf]
  %v50 = vld [vmem:[%s1 + $0x54] sm:$0xf]
  %v51 = vld [vmem:[%s1 + $0x58] sm:$0xf]
  %v52 = vld [vmem:[%s1 + $0x5c] sm:$0xf]
  %v53 = vld [vmem:[%s1 + $0x60] sm:$0xf]
  %v54 = vld [vmem:[%s1 + $0x64] sm:$0xf]
  %v55 = vld [vmem:[%s1 + $0x68] sm:$0xf]
  %v56 = vld [vmem:[%s1 + $0x6c] sm:$0xf]
  %v57 = vld [vmem:[%s1 + $0x70] sm:$0xf]
  %v58 = vld [vmem:[%s1 + $0x74] sm:$0xf]
  %v59 = vld [vmem:[%s1 + $0x78] sm:$0xf]
  %v60 = vld [vmem:[%s1 + $0x7c] sm:$0xf]
  %v61 = vld [vmem:[%s1 + $0x80] sm:$0xf]
  %v62 = vld [vmem:[%s1 + $0x84] sm:$0xf]
  %v63 = vld [vmem:[%s1 + $0x88] sm:$0xf]
  %v64 = vld [vmem:[%s1 + $0x8c] sm:$0xf]
  %v65 = vld [vmem:[%s1 + $0x90] sm:$0xf]
  %v66 = vld [vmem:[%s1 + $0x94] sm:$0xf]
  %v67 = vld [vmem:[%s1 + $0x98] sm:$0xf]
  %v68 = vld [vmem:[%s1 + $0x9c] sm:$0xf]
  %v69 = vld [vmem:[%s1 + $0xa0] sm:$0xf]
  %v70 = vld [vmem:[%s1 + $0xa4] sm:$0xf]
  %v71 = vld [vmem:[%s1 + $0xa8] sm:$0xf]
  %v72 = vld [vmem:[%s1 + $0xac] sm:$0xf]
  %v73 = vld [vmem:[%s1 + $0xb0] sm:$0xf]
  %v74 = vld [vmem:[%s1 + $0xb4] sm:$0xf]
  %v75 = vld [vmem:[%s1 + $0xb8] sm:$0xf]
  %v76 = vld [vmem:[%s1 + $0xbc] sm:$0xf]
  %v77 = vld [vmem:[%s1 + $0xc0] sm:$0xf]
  %v78 = vld [vmem:[%s1 + $0xc4] sm:$0xf]
  %v79 = vld [vmem:[%s1 + $0xc8] sm:$0xf]
  %v80 = vld [vmem:[%s1 + $0xcc] sm:$0xf]
  %v81 = vld [vmem:[%s1 + $0xd0] sm:$0xf]
  %v82 = vld [vmem:[%s1 + $0xd4] sm:$0xf]
  %v83 = vld [vmem:[%s1 + $0xd8] sm:$0xf]
  %v84 = vld [vmem:[%s1 + $0xdc] sm:$0xf]
  %v85 = vld [vmem:[%s1 + $0xe0] sm:$0xf]
  %v86 = vld [vmem:[%s1 + $0xe4] sm:$0xf]
  %v87 = vld [vmem:[%s1 + $0xe8] sm:$0xf]
  %v88 = vld [vmem:[%s1 + $0xec] sm:$0xf]
  %v89 = vld [vmem:[%s1 + $0xf0] sm:$0xf]
  %v90 = vld [vmem:[%s1 + $0xf4] sm:$0xf]
  %v91 = vld [vmem:[%s1 + $0xf8] sm:$0xf]
  %v92 = vld [vmem:[%s1 + $0xfc] sm:$0xf]
  %v93 = vld [vmem:[%s1 + $0x100] sm:$0xf]
  %v94 = vld [vmem:[%s1 + $0x104] sm:$0xf]
  %v95 = vld [vmem:[%s1 + $0x108] sm:$0xf]
  %v96 = vld [vmem:[%s1 + $0x10c] sm:$0xf]
  %v97 = vld [vmem:[%s1 + $0x110] sm:$0xf]
  %v98 = vld [vmem:[%s1 + $0x114] sm:$0xf]
  %v99 = vld [vmem:[%s1 + $0x118] sm:$0xf]
  %v100 = vld [vmem:[%s1 + $0x11c] sm:$0xf]
  %v101 = vld [vmem:[%s1 + $0x120] sm:$0xf]
  %v102 = vld [vmem:[%s1 + $0x124] sm:$0xf]
  %v103 = vld [vmem:[%s1 + $0x128] sm:$0xf]
  %v104 = vld [vmem:[%s1 + $0x12c] sm:$0xf]
  %v105 = vld [vmem:[%s1 + $0x130] sm:$0xf]
  %v106 = vld [vmem:[%s1 + $0x134] sm:$0xf]
  %v107 = vld [vmem:[%s1 + $0x138] sm:$0xf]
  %v108 = vld [vmem:[%s1 + $0x13c] sm:$0xf]
  %v109 = vld [vmem:[%s1 + $0x140] sm:$0xf]
  %v110 = vld [vmem:[%s1 + $0x144] sm:$0xf]
  %v111 = vld [vmem:[%s1 + $0x148] sm:$0xf]
  %v112 = vld [vmem:[%s1 + $0x14c] sm:$0xf]
  %v113 = vld [vmem:[%s1 + $0x150] sm:$0xf]
  %v114 = vld [vmem:[%s1 + $0x154] sm:$0xf]
  %v115 = vld [vmem:[%s1 + $0x158] sm:$0xf]
  %v116 = vld [vmem:[%s1 + $0x15c] sm:$0xf]
  %v117 = vld [vmem:[%s1 + $0x160] sm:$0xf]
  %v118 = vld [vmem:[%s1 + $0x164] sm:$0xf]
  %v119 = vld [vmem:[%s1 + $0x168] sm:$0xf]
  %v120 = vld [vmem:[%s1 + $0x16c] sm:$0xf]
  %v121 = vld [vmem:[%s1 + $0x170] sm:$0xf]
  %v122 = vld [vmem:[%s1 + $0x174] sm:$0xf]
  %v123 = vld [vmem:[%s1 + $0x178] sm:$0xf]
  %v124 = vld [vmem:[%s1 + $0x17c] sm:$0xf]
  %v125 = vld [vmem:[%s1 + $0x180] sm:$0xf]
  %v126 = vld [vmem:[%s1 + $0x184] sm:$0xf]
  %v127 = vld [vmem:[%s1 + $0x188] sm:$0xf]
  %v128 = vld [vmem:[%s1 + $0x18c] sm:$0xf]
  %v129 = vld [vmem:[%s1 + $0x190] sm:$0xf]
  %v130 = vld [vmem:[%s1 + $0x194] sm:$0xf]
  %v131 = vld [vmem:[%s1 + $0x198] sm:$0xf]
  %v132 = vld [vmem:[%s1 + $0x19c] sm:$0xf]
  %v133 = vld [vmem:[%s1 + $0x1a0] sm:$0xf]
  %v134 = vld [vmem:[%s1 + $0x1a4] sm:$0xf]
  %v135 = vld [vmem:[%s1 + $0x1a8] sm:$0xf]
  %v136 = vld [vmem:[%s1 + $0x1ac] sm:$0xf]
  %v137 = vld [vmem:[%s1 + $0x1b0] sm:$0xf]
  %v138 = vld [vmem:[%s1 + $0x1b4] sm:$0xf]
  %v139 = vld [vmem:[%s1 + $0x1b8] sm:$0xf]
  %v140 = vld [vmem:[%s1 + $0x1bc] sm:$0xf]
  %v141 = vld [vmem:[%s1 + $0x1c0] sm:$0xf]
  %v142 = vld [vmem:[%s1 + $0x1c4] sm:$0xf]
  %v143 = vld [vmem:[%s1 + $0x1c8] sm:$0xf]
  %v144 = vld [vmem:[%s1 + $0x1cc] sm:$0xf]
  %v145 = vld [vmem:[%s1 + $0x1d0] sm:$0xf]
  %v146 = vld [vmem:[%s1 + $0x1d4] sm:$0xf]
  %v147 = vld [vmem:[%s1 + $0x1d8] sm:$0xf]
  %v148 = vld [vmem:[%s1 + $0x1dc] sm:$0xf]
  %v149 = vld [vmem:[%s1 + $0x1e0] sm:$0xf]
  %v150 = vld [vmem:[%s1 + $0x1e4] sm:$0xf]
  %v151 = vld [vmem:[%s1 + $0x1e8] sm:$0xf]
  %v152 = vld [vmem:[%s1 + $0x1ec] sm:$0xf]
  %v153 = vld [vmem:[%s1 + $0x1f0] sm:$0xf]
  %v154 = vld [vmem:[%s1 + $0x1f4] sm:$0xf]
  %v155 = vld [vmem:[%s1 + $0x1f8] sm:$0xf]
  %v156 = vld [vmem:[%s1 + $0x1fc] sm:$0xf]
  %v157 = vld [vmem:[%s1 + $0x200] sm:$0xf]
  %v158 = vld [vmem:[%s1 + $0x204] sm:$0xf]
  %v159 = vld [vmem:[%s1 + $0x208] sm:$0xf]
  %v160 = vld [vmem:[%s1 + $0x20c] sm:$0xf]
  %v161 = vld [vmem:[%s1 + $0x210] sm:$0xf]
  %v162 = vld [vmem:[%s1 + $0x214] sm:$0xf]
  %v163 = vld [vmem:[%s1 + $0x218] sm:$0xf]
  %v164 = vld [vmem:[%s1 + $0x21c] sm:$0xf]
  %v165 = vld [vmem:[%s1 + $0x220] sm:$0xf]
  %v166 = vld [vmem:[%s1 + $0x224] sm:$0xf]
  %v167 = vld [vmem:[%s1 + $0x228] sm:$0xf]
  %v168 = vld [vmem:[%s1 + $0x22c] sm:$0xf]
  %v169 = vld [vmem:[%s1 + $0x230] sm:$0xf]
  %v170 = vld [vmem:[%s1 + $0x234] sm:$0xf]
  %v171 = vld [vmem:[%s1 + $0x238] sm:$0xf]
  %v172 = vld [vmem:[%s1 + $0x23c] sm:$0xf]
  %v173 = vld [vmem:[%s1 + $0x240] sm:$0xf]
  %v174 = vld [vmem:[%s1 + $0x244] sm:$0xf]
  %v175 = vld [vmem:[%s1 + $0x248] sm:$0xf]
  %v176 = vld [vmem:[%s1 + $0x24c] sm:$0xf]
  %v177 = vld [vmem:[%s1 + $0x250] sm:$0xf]
  %v178 = vld [vmem:[%s1 + $0x254] sm:$0xf]
  %v179 = vld [vmem:[%s1 + $0x258] sm:$0xf]
  %v180 = vld [vmem:[%s1 + $0x25c] sm:$0xf]
  %v181 = vld [vmem:[%s1 + $0x260] sm:$0xf]
  %v182 = vld [vmem:[%s1 + $0x264] sm:$0xf]
  %v183 = vld [vmem:[%s1 + $0x268] sm:$0xf]
  %v184 = vld [vmem:[%s1 + $0x26c] sm:$0xf]
  %v185 = vld [vmem:[%s1 + $0x270] sm:$0xf]
  %v186 = vld [vmem:[%s1 + $0x274] sm:$0xf]
  %v187 = vld [vmem:[%s1 + $0x278] sm:$0xf]
  %v188 = vld [vmem:[%s1 + $0x27c] sm:$0xf]
  %v189 = vld [vmem:[%s1 + $0x280] sm:$0xf]
  %v190 = vld [vmem:[%s1 + $0x284] sm:$0xf]
  %v191 = vld [vmem:[%s1 + $0x288] sm:$0xf]
  %v192 = vld [vmem:[%s1 + $0x28c] sm:$0xf]
  %v193 = vld [vmem:[%s1 + $0x290] sm:$0xf]
  %v194 = vld [vmem:[%s1 + $0x294] sm:$0xf]
  %v195 = vld [vmem:[%s1 + $0x298] sm:$0xf]
  %v196 = vld [vmem:[%s1 + $0x29c] sm:$0xf]
  %v197 = vld [vmem:[%s1 + $0x2a0] sm:$0xf]
  %v198 = vld [vmem:[%s1 + $0x2a4] sm:$0xf]
  %v199 = vld [vmem:[%s1 + $0x2a8] sm:$0xf]
  %v200 = vld [vmem:[%s1 + $0x2ac] sm:$0xf]
  %v201 = vld [vmem:[%s1 + $0x2b0] sm:$0xf]
  %v202 = vld [vmem:[%s1 + $0x2b4] sm:$0xf]
  %v203 = vld [vmem:[%s1 + $0x2b8] sm:$0xf]
  %v204 = vld [vmem:[%s1 + $0x2bc] sm:$0xf]
  %v205 = vld [vmem:[%s1 + $0x2c0] sm:$0xf]
  %v206 = vld [vmem:[%s1 + $0x2c4] sm:$0xf]
  %v207 = vld [vmem:[%s1 + $0x2c8] sm:$0xf]
  %v208 = vld [vmem:[%s1 + $0x2cc] sm:$0xf]
  %v209 = vld [vmem:[%s1 + $0x2d0] sm:$0xf]
  %v210 = vld [vmem:[%s1 + $0x2d4] sm:$0xf]
  %v211 = vld [vmem:[%s1 + $0x2d8] sm:$0xf]
  %v212 = vld [vmem:[%s1 + $0x2dc] sm:$0xf]
  %v213 = vld [vmem:[%s1 + $0x2e0] sm:$0xf]
  %v214 = vld [vmem:[%s1 + $0x2e4] sm:$0xf]
  %v215 = vld [vmem:[%s1 + $0x2e8] sm:$0xf]
  %v216 = vld [vmem:[%s1 + $0x2ec] sm:$0xf]
  %v217 = vld [vmem:[%s1 + $0x2f0] sm:$0xf]
  %v218 = vld [vmem:[%s1 + $0x2f4] sm:$0xf]
  %v219 = vld [vmem:[%s1 + $0x2f8] sm:$0xf]
  %v220 = vld [vmem:[%s1 + $0x2fc] sm:$0xf]
  %v221 = vld [vmem:[%s1 + $0x300] sm:$0xf]
  %v222 = vld [vmem:[%s1 + $0x304] sm:$0xf]
  %v223 = vld [vmem:[%s1 + $0x308] sm:$0xf]
  %v224 = vld [vmem:[%s1 + $0x30c] sm:$0xf]
  %v225 = vld [vmem:[%s1 + $0x310] sm:$0xf]
  %v226 = vld [vmem:[%s1 + $0x314] sm:$0xf]
  %v227 = vld [vmem:[%s1 + $0x318] sm:$0xf]
  %v228 = vld [vmem:[%s1 + $0x31c] sm:$0xf]
  %v229 = vld [vmem:[%s1 + $0x320] sm:$0xf]
  %v230 = vld [vmem:[%s1 + $0x324] sm:$0xf]
  %v231 = vld [vmem:[%s1 + $0x328] sm:$0xf]
  %v232 = vld [vmem:[%s1 + $0x32c] sm:$0xf]
  %v233 = vld [vmem:[%s1 + $0x330] sm:$0xf]
  %v234 = vld [vmem:[%s1 + $0x334] sm:$0xf]
  %v235 = vld [vmem:[%s1 + $0x338] sm:$0xf]
  %v236 = vld [vmem:[%s1 + $0x33c] sm:$0xf]
  %v237 = vld [vmem:[%s1 + $0x340] sm:$0xf]
  %v238 = vld [vmem:[%s1 + $0x344] sm:$0xf]
  %v239 = vld [vmem:[%s1 + $0x348] sm:$0xf]
  %v240 = vld [vmem:[%s1 + $0x34c] sm:$0xf]
  %v241 = vld [vmem:[%s1 + $0x350] sm:$0xf]
  %v242 = vld [vmem:[%s1 + $0x354] sm:$0xf]
  %v243 = vld [vmem:[%s1 + $0x358] sm:$0xf]
  %v244 = vld [vmem:[%s1 + $0x35c] sm:$0xf]
  %v245 = vld [vmem:[%s1 + $0x360] sm:$0xf]
  %v246 = vld [vmem:[%s1 + $0x364] sm:$0xf]
  %v247 = vld [vmem:[%s1 + $0x368] sm:$0xf]
  %v248 = vld [vmem:[%s1 + $0x36c] sm:$0xf]
  %v249 = vld [vmem:[%s1 + $0x370] sm:$0xf]
  %v250 = vld [vmem:[%s1 + $0x374] sm:$0xf]
  %v251 = vld [vmem:[%s1 + $0x378] sm:$0xf]
  %v252 = vld [vmem:[%s1 + $0x37c] sm:$0xf]
  %v253 = vld [vmem:[%s1 + $0x380] sm:$0xf]
  %v254 = vld [vmem:[%s1 + $0x384] sm:$0xf]
  %v255 = vld [vmem:[%s1 + $0x388] sm:$0xf]
  %v256 = vld [vmem:[%s1 + $0x38c] sm:$0xf]
  %v257 = vld [vmem:[%s1 + $0x390] sm:$0xf]
  %v258 = vld [vmem:[%s1 + $0x394] sm:$0xf]
  %v259 = vld [vmem:[%s1 + $0x398] sm:$0xf]
  %v260 = vld [vmem:[%s1 + $0x39c] sm:$0xf]
  %v261 = vld [vmem:[%s1 + $0x3a0] sm:$0xf]
  %v262 = vld [vmem:[%s1 + $0x3a4] sm:$0xf]
  %v263 = vld [vmem:[%s1 + $0x3a8] sm:$0xf]
  %v264 = vld [vmem:[%s1 + $0x3ac] sm:$0xf]
  %v265 = vld [vmem:[%s1 + $0x3b0] sm:$0xf]
  %v266 = vld [vmem:[%s1 + $0x3b4] sm:$0xf]
  %v267 = vld [vmem:[%s1 + $0x3b8] sm:$0xf]
  %v268 = vld [vmem:[%s1 + $0x3bc] sm:$0xf]
  %v269 = vld [vmem:[%s1 + $0x3c0] sm:$0xf]
  %v270 = vld [vmem:[%s1 + $0x3c4] sm:$0xf]
  %v271 = vld [vmem:[%s1 + $0x3c8] sm:$0xf]
  %v272 = vld [vmem:[%s1 + $0x3cc] sm:$0xf]
  %v273 = vld [vmem:[%s1 + $0x3d0] sm:$0xf]
  %v274 = vld [vmem:[%s1 + $0x3d4] sm:$0xf]
  %v275 = vld [vmem:[%s1 + $0x3d8] sm:$0xf]
  %v276 = vld [vmem:[%s1 + $0x3dc] sm:$0xf]
  %v277 = vld [vmem:[%s1 + $0x3e0] sm:$0xf]
  %v278 = vld [vmem:[%s1 + $0x3e4] sm:$0xf]
  %v279 = vld [vmem:[%s1 + $0x3e8] sm:$0xf]
  %v280 = vld [vmem:[%s1 + $0x3ec] sm:$0xf]
  %v281 = vld [vmem:[%s1 + $0x3f0] sm:$0xf]
  %v282 = vld [vmem:[%s1 + $0x3f4] sm:$0xf]
  %v283 = vld [vmem:[%s1 + $0x3f8] sm:$0xf]
  %v284 = vld [vmem:[%s1 + $0x3fc] sm:$0xf]
  %v285 = vld [vmem:[%s2] sm:$0x1]
  %v287 = vlaneseq
  %v288 = vshrl.u32 %v287, 7
  %v289 = vsub.s32 0, %v288
  %v290 = vrot.slane %v285, %v289
  %v300 = vunpack.c.l.b16 %v21
  %v301 = vunpack.c.h.b16 %v21
  %v302 = vunpack.c.l.b16 %v22
  %v303 = vunpack.c.h.b16 %v22
  %v304 = vunpack.c.l.b16 %v23
  %v305 = vunpack.c.h.b16 %v23
  %v306 = vunpack.c.l.b16 %v24
  %v307 = vunpack.c.h.b16 %v24
  %v308 = vunpack.c.l.b16 %v25
  %v309 = vunpack.c.h.b16 %v25
  %v310 = vunpack.c.l.b16 %v26
  %v311 = vunpack.c.h.b16 %v26
  %v312 = vunpack.c.l.b16 %v27
  %v313 = vunpack.c.h.b16 %v27
  %v314 = vunpack.c.l.b16 %v28
  %v315 = vunpack.c.h.b16 %v28
  %v316 = vpack.c.b16 %v300, %v300
  %v317 = vpack.c.b16 %v301, %v301
  %v318 = vpack.c.b16 %v302, %v302
  %v319 = vpack.c.b16 %v303, %v303
  %v320 = vpack.c.b16 %v304, %v304
  %v321 = vpack.c.b16 %v305, %v305
  %v322 = vpack.c.b16 %v306, %v306
  %v323 = vpack.c.b16 %v307, %v307
  %v324 = vpack.c.b16 %v308, %v308
  %v325 = vpack.c.b16 %v309, %v309
  %v326 = vpack.c.b16 %v310, %v310
  %v327 = vpack.c.b16 %v311, %v311
  %v328 = vpack.c.b16 %v312, %v312
  %v329 = vpack.c.b16 %v313, %v313
  %v330 = vpack.c.b16 %v314, %v314
  %v331 = vpack.c.b16 %v315, %v315
  %v604 = vunpack.c.l.b16 %v29
  %v605 = vunpack.c.l.b16 %v30
  %v606 = vunpack.c.l.b16 %v31
  %v607 = vunpack.c.l.b16 %v32
  %v608 = vunpack.c.l.b16 %v33
  %v609 = vunpack.c.l.b16 %v34
  %v610 = vunpack.c.l.b16 %v35
  %v611 = vunpack.c.l.b16 %v36
  %v612 = vunpack.c.l.b16 %v37
  %v613 = vunpack.c.l.b16 %v38
  %v614 = vunpack.c.l.b16 %v39
  %v615 = vunpack.c.l.b16 %v40
  %v616 = vunpack.c.l.b16 %v41
  %v617 = vunpack.c.l.b16 %v42
  %v618 = vunpack.c.l.b16 %v43
  %v619 = vunpack.c.l.b16 %v44
  %v620 = vunpack.c.l.b16 %v45
  %v621 = vunpack.c.l.b16 %v46
  %v622 = vunpack.c.l.b16 %v47
  %v623 = vunpack.c.l.b16 %v48
  %v624 = vunpack.c.l.b16 %v49
  %v625 = vunpack.c.l.b16 %v50
  %v626 = vunpack.c.l.b16 %v51
  %v627 = vunpack.c.l.b16 %v52
  %v628 = vunpack.c.l.b16 %v53
  %v629 = vunpack.c.l.b16 %v54
  %v630 = vunpack.c.l.b16 %v55
  %v631 = vunpack.c.l.b16 %v56
  %v632 = vunpack.c.l.b16 %v57
  %v633 = vunpack.c.l.b16 %v58
  %v634 = vunpack.c.l.b16 %v59
  %v635 = vunpack.c.l.b16 %v60
  %v636 = vunpack.c.l.b16 %v61
  %v637 = vunpack.c.l.b16 %v62
  %v638 = vunpack.c.l.b16 %v63
  %v639 = vunpack.c.l.b16 %v64
  %v640 = vunpack.c.l.b16 %v65
  %v641 = vunpack.c.l.b16 %v66
  %v642 = vunpack.c.l.b16 %v67
  %v643 = vunpack.c.l.b16 %v68
  %v644 = vunpack.c.l.b16 %v69
  %v645 = vunpack.c.l.b16 %v70
  %v646 = vunpack.c.l.b16 %v71
  %v647 = vunpack.c.l.b16 %v72
  %v648 = vunpack.c.l.b16 %v73
  %v649 = vunpack.c.l.b16 %v74
  %v650 = vunpack.c.l.b16 %v75
  %v651 = vunpack.c.l.b16 %v76
  %v652 = vunpack.c.l.b16 %v77
  %v653 = vunpack.c.l.b16 %v78
  %v654 = vunpack.c.l.b16 %v79
  %v655 = vunpack.c.l.b16 %v80
  %v656 = vunpack.c.l.b16 %v81
  %v657 = vunpack.c.l.b16 %v82
  %v658 = vunpack.c.l.b16 %v83
  %v659 = vunpack.c.l.b16 %v84
  %v660 = vunpack.c.l.b16 %v85
  %v661 = vunpack.c.l.b16 %v86
  %v662 = vunpack.c.l.b16 %v87
  %v663 = vunpack.c.l.b16 %v88
  %v664 = vunpack.c.l.b16 %v89
  %v665 = vunpack.c.l.b16 %v90
  %v666 = vunpack.c.l.b16 %v91
  %v667 = vunpack.c.l.b16 %v92
  %v668 = vunpack.c.l.b16 %v93
  %v669 = vunpack.c.l.b16 %v94
  %v670 = vunpack.c.l.b16 %v95
  %v671 = vunpack.c.l.b16 %v96
  %v672 = vunpack.c.l.b16 %v97
  %v673 = vunpack.c.l.b16 %v98
  %v674 = vunpack.c.l.b16 %v99
  %v675 = vunpack.c.l.b16 %v100
  %v676 = vunpack.c.l.b16 %v101
  %v677 = vunpack.c.l.b16 %v102
  %v678 = vunpack.c.l.b16 %v103
  %v679 = vunpack.c.l.b16 %v104
  %v680 = vunpack.c.l.b16 %v105
  %v681 = vunpack.c.l.b16 %v106
  %v682 = vunpack.c.l.b16 %v107
  %v683 = vunpack.c.l.b16 %v108
  %v684 = vunpack.c.l.b16 %v109
  %v685 = vunpack.c.l.b16 %v110
  %v686 = vunpack.c.l.b16 %v111
  %v687 = vunpack.c.l.b16 %v112
  %v688 = vunpack.c.l.b16 %v113
  %v689 = vunpack.c.l.b16 %v114
  %v690 = vunpack.c.l.b16 %v115
  %v691 = vunpack.c.l.b16 %v116
  %v692 = vunpack.c.l.b16 %v117
  %v693 = vunpack.c.l.b16 %v118
  %v694 = vunpack.c.l.b16 %v119
  %v695 = vunpack.c.l.b16 %v120
  %v696 = vunpack.c.l.b16 %v121
  %v697 = vunpack.c.l.b16 %v122
  %v698 = vunpack.c.l.b16 %v123
  %v699 = vunpack.c.l.b16 %v124
  %v700 = vunpack.c.l.b16 %v125
  %v701 = vunpack.c.l.b16 %v126
  %v702 = vunpack.c.l.b16 %v127
  %v703 = vunpack.c.l.b16 %v128
  %v704 = vunpack.c.l.b16 %v129
  %v705 = vunpack.c.l.b16 %v130
  %v706 = vunpack.c.l.b16 %v131
  %v707 = vunpack.c.l.b16 %v132
  %v708 = vunpack.c.l.b16 %v133
  %v709 = vunpack.c.l.b16 %v134
  %v710 = vunpack.c.l.b16 %v135
  %v711 = vunpack.c.l.b16 %v136
  %v712 = vunpack.c.l.b16 %v137
  %v713 = vunpack.c.l.b16 %v138
  %v714 = vunpack.c.l.b16 %v139
  %v715 = vunpack.c.l.b16 %v140
  %v716 = vunpack.c.l.b16 %v141
  %v717 = vunpack.c.l.b16 %v142
  %v718 = vunpack.c.l.b16 %v143
  %v719 = vunpack.c.l.b16 %v144
  %v720 = vunpack.c.l.b16 %v145
  %v721 = vunpack.c.l.b16 %v146
  %v722 = vunpack.c.l.b16 %v147
  %v723 = vunpack.c.l.b16 %v148
  %v724 = vunpack.c.l.b16 %v149
  %v725 = vunpack.c.l.b16 %v150
  %v726 = vunpack.c.l.b16 %v151
  %v727 = vunpack.c.l.b16 %v152
  %v728 = vunpack.c.l.b16 %v153
  %v729 = vunpack.c.l.b16 %v154
  %v730 = vunpack.c.l.b16 %v155
  %v731 = vunpack.c.l.b16 %v156
  %v732 = vunpack.c.l.b16 %v157
  %v733 = vunpack.c.l.b16 %v158
  %v734 = vunpack.c.l.b16 %v159
  %v735 = vunpack.c.l.b16 %v160
  %v736 = vunpack.c.l.b16 %v161
  %v737 = vunpack.c.l.b16 %v162
  %v738 = vunpack.c.l.b16 %v163
  %v739 = vunpack.c.l.b16 %v164
  %v740 = vunpack.c.l.b16 %v165
  %v741 = vunpack.c.l.b16 %v166
  %v742 = vunpack.c.l.b16 %v167
  %v743 = vunpack.c.l.b16 %v168
  %v744 = vunpack.c.l.b16 %v169
  %v745 = vunpack.c.l.b16 %v170
  %v746 = vunpack.c.l.b16 %v171
  %v747 = vunpack.c.l.b16 %v172
  %v748 = vunpack.c.l.b16 %v173
  %v749 = vunpack.c.l.b16 %v174
  %v750 = vunpack.c.l.b16 %v175
  %v751 = vunpack.c.l.b16 %v176
  %v752 = vunpack.c.l.b16 %v177
  %v753 = vunpack.c.l.b16 %v178
  %v754 = vunpack.c.l.b16 %v179
  %v755 = vunpack.c.l.b16 %v180
  %v756 = vunpack.c.l.b16 %v181
  %v757 = vunpack.c.l.b16 %v182
  %v758 = vunpack.c.l.b16 %v183
  %v759 = vunpack.c.l.b16 %v184
  %v760 = vunpack.c.l.b16 %v185
  %v761 = vunpack.c.l.b16 %v186
  %v762 = vunpack.c.l.b16 %v187
  %v763 = vunpack.c.l.b16 %v188
  %v764 = vunpack.c.l.b16 %v189
  %v765 = vunpack.c.l.b16 %v190
  %v766 = vunpack.c.l.b16 %v191
  %v767 = vunpack.c.l.b16 %v192
  %v768 = vunpack.c.l.b16 %v193
  %v769 = vunpack.c.l.b16 %v194
  %v770 = vunpack.c.l.b16 %v195
  %v771 = vunpack.c.l.b16 %v196
  %v772 = vunpack.c.l.b16 %v197
  %v773 = vunpack.c.l.b16 %v198
  %v774 = vunpack.c.l.b16 %v199
  %v775 = vunpack.c.l.b16 %v200
  %v776 = vunpack.c.l.b16 %v201
  %v777 = vunpack.c.l.b16 %v202
  %v778 = vunpack.c.l.b16 %v203
  %v779 = vunpack.c.l.b16 %v204
  %v780 = vunpack.c.l.b16 %v205
  %v781 = vunpack.c.l.b16 %v206
  %v782 = vunpack.c.l.b16 %v207
  %v783 = vunpack.c.l.b16 %v208
  %v784 = vunpack.c.l.b16 %v209
  %v785 = vunpack.c.l.b16 %v210
  %v786 = vunpack.c.l.b16 %v211
  %v787 = vunpack.c.l.b16 %v212
  %v788 = vunpack.c.l.b16 %v213
  %v789 = vunpack.c.l.b16 %v214
  %v790 = vunpack.c.l.b16 %v215
  %v791 = vunpack.c.l.b16 %v216
  %v792 = vunpack.c.l.b16 %v217
  %v793 = vunpack.c.l.b16 %v218
  %v794 = vunpack.c.l.b16 %v219
  %v795 = vunpack.c.l.b16 %v220
  %v796 = vunpack.c.l.b16 %v221
  %v797 = vunpack.c.l.b16 %v222
  %v798 = vunpack.c.l.b16 %v223
  %v799 = vunpack.c.l.b16 %v224
  %v800 = vunpack.c.l.b16 %v225
  %v801 = vunpack.c.l.b16 %v226
  %v802 = vunpack.c.l.b16 %v227
  %v803 = vunpack.c.l.b16 %v228
  %v804 = vunpack.c.l.b16 %v229
  %v805 = vunpack.c.l.b16 %v230
  %v806 = vunpack.c.l.b16 %v231
  %v807 = vunpack.c.l.b16 %v232
  %v808 = vunpack.c.l.b16 %v233
  %v809 = vunpack.c.l.b16 %v234
  %v810 = vunpack.c.l.b16 %v235
  %v811 = vunpack.c.l.b16 %v236
  %v812 = vunpack.c.l.b16 %v237
  %v813 = vunpack.c.l.b16 %v238
  %v814 = vunpack.c.l.b16 %v239
  %v815 = vunpack.c.l.b16 %v240
  %v816 = vunpack.c.l.b16 %v241
  %v817 = vunpack.c.l.b16 %v242
  %v818 = vunpack.c.l.b16 %v243
  %v819 = vunpack.c.l.b16 %v244
  %v820 = vunpack.c.l.b16 %v245
  %v821 = vunpack.c.l.b16 %v246
  %v822 = vunpack.c.l.b16 %v247
  %v823 = vunpack.c.l.b16 %v248
  %v824 = vunpack.c.l.b16 %v249
  %v825 = vunpack.c.l.b16 %v250
  %v826 = vunpack.c.l.b16 %v251
  %v827 = vunpack.c.l.b16 %v252
  %v828 = vunpack.c.l.b16 %v253
  %v829 = vunpack.c.l.b16 %v254
  %v830 = vunpack.c.l.b16 %v255
  %v831 = vunpack.c.l.b16 %v256
  %v832 = vunpack.c.l.b16 %v257
  %v833 = vunpack.c.l.b16 %v258
  %v834 = vunpack.c.l.b16 %v259
  %v835 = vunpack.c.l.b16 %v260
  %v836 = vunpack.c.l.b16 %v261
  %v837 = vunpack.c.l.b16 %v262
  %v838 = vunpack.c.l.b16 %v263
  %v839 = vunpack.c.l.b16 %v264
  %v840 = vunpack.c.l.b16 %v265
  %v841 = vunpack.c.l.b16 %v266
  %v842 = vunpack.c.l.b16 %v267
  %v843 = vunpack.c.l.b16 %v268
  %v844 = vunpack.c.l.b16 %v269
  %v845 = vunpack.c.l.b16 %v270
  %v846 = vunpack.c.l.b16 %v271
  %v847 = vunpack.c.l.b16 %v272
  %v848 = vunpack.c.l.b16 %v273
  %v849 = vunpack.c.l.b16 %v274
  %v850 = vunpack.c.l.b16 %v275
  %v851 = vunpack.c.l.b16 %v276
  %v852 = vunpack.c.l.b16 %v277
  %v853 = vunpack.c.l.b16 %v278
  %v854 = vunpack.c.l.b16 %v279
  %v855 = vunpack.c.l.b16 %v280
  %v856 = vunpack.c.l.b16 %v281
  %v857 = vunpack.c.l.b16 %v282
  %v858 = vunpack.c.l.b16 %v283
  %v859 = vunpack.c.l.b16 %v284
  %v860 = vpack.c.b16 %v605, %v604
  %v861 = vpack.c.b16 %v607, %v606
  %v862 = vpack.c.b16 %v609, %v608
  %v863 = vpack.c.b16 %v611, %v610
  %v864 = vpack.c.b16 %v613, %v612
  %v865 = vpack.c.b16 %v615, %v614
  %v866 = vpack.c.b16 %v617, %v616
  %v867 = vpack.c.b16 %v619, %v618
  %v868 = vpack.c.b16 %v621, %v620
  %v869 = vpack.c.b16 %v623, %v622
  %v870 = vpack.c.b16 %v625, %v624
  %v871 = vpack.c.b16 %v627, %v626
  %v872 = vpack.c.b16 %v629, %v628
  %v873 = vpack.c.b16 %v631, %v630
  %v874 = vpack.c.b16 %v633, %v632
  %v875 = vpack.c.b16 %v635, %v634
  %v876 = vpack.c.b16 %v637, %v636
  %v877 = vpack.c.b16 %v639, %v638
  %v878 = vpack.c.b16 %v641, %v640
  %v879 = vpack.c.b16 %v643, %v642
  %v880 = vpack.c.b16 %v645, %v644
  %v881 = vpack.c.b16 %v647, %v646
  %v882 = vpack.c.b16 %v649, %v648
  %v883 = vpack.c.b16 %v651, %v650
  %v884 = vpack.c.b16 %v653, %v652
  %v885 = vpack.c.b16 %v655, %v654
  %v886 = vpack.c.b16 %v657, %v656
  %v887 = vpack.c.b16 %v659, %v658
  %v888 = vpack.c.b16 %v661, %v660
  %v889 = vpack.c.b16 %v663, %v662
  %v890 = vpack.c.b16 %v665, %v664
  %v891 = vpack.c.b16 %v667, %v666
  %v892 = vpack.c.b16 %v669, %v668
  %v893 = vpack.c.b16 %v671, %v670
  %v894 = vpack.c.b16 %v673, %v672
  %v895 = vpack.c.b16 %v675, %v674
  %v896 = vpack.c.b16 %v677, %v676
  %v897 = vpack.c.b16 %v679, %v678
  %v898 = vpack.c.b16 %v681, %v680
  %v899 = vpack.c.b16 %v683, %v682
  %v900 = vpack.c.b16 %v685, %v684
  %v901 = vpack.c.b16 %v687, %v686
  %v902 = vpack.c.b16 %v689, %v688
  %v903 = vpack.c.b16 %v691, %v690
  %v904 = vpack.c.b16 %v693, %v692
  %v905 = vpack.c.b16 %v695, %v694
  %v906 = vpack.c.b16 %v697, %v696
  %v907 = vpack.c.b16 %v699, %v698
  %v908 = vpack.c.b16 %v701, %v700
  %v909 = vpack.c.b16 %v703, %v702
  %v910 = vpack.c.b16 %v705, %v704
  %v911 = vpack.c.b16 %v707, %v706
  %v912 = vpack.c.b16 %v709, %v708
  %v913 = vpack.c.b16 %v711, %v710
  %v914 = vpack.c.b16 %v713, %v712
  %v915 = vpack.c.b16 %v715, %v714
  %v916 = vpack.c.b16 %v717, %v716
  %v917 = vpack.c.b16 %v719, %v718
  %v918 = vpack.c.b16 %v721, %v720
  %v919 = vpack.c.b16 %v723, %v722
  %v920 = vpack.c.b16 %v725, %v724
  %v921 = vpack.c.b16 %v727, %v726
  %v922 = vpack.c.b16 %v729, %v728
  %v923 = vpack.c.b16 %v731, %v730
  %v924 = vpack.c.b16 %v733, %v732
  %v925 = vpack.c.b16 %v735, %v734
  %v926 = vpack.c.b16 %v737, %v736
  %v927 = vpack.c.b16 %v739, %v738
  %v928 = vpack.c.b16 %v741, %v740
  %v929 = vpack.c.b16 %v743, %v742
  %v930 = vpack.c.b16 %v745, %v744
  %v931 = vpack.c.b16 %v747, %v746
  %v932 = vpack.c.b16 %v749, %v748
  %v933 = vpack.c.b16 %v751, %v750
  %v934 = vpack.c.b16 %v753, %v752
  %v935 = vpack.c.b16 %v755, %v754
  %v936 = vpack.c.b16 %v757, %v756
  %v937 = vpack.c.b16 %v759, %v758
  %v938 = vpack.c.b16 %v761, %v760
  %v939 = vpack.c.b16 %v763, %v762
  %v940 = vpack.c.b16 %v765, %v764
  %v941 = vpack.c.b16 %v767, %v766
  %v942 = vpack.c.b16 %v769, %v768
  %v943 = vpack.c.b16 %v771, %v770
  %v944 = vpack.c.b16 %v773, %v772
  %v945 = vpack.c.b16 %v775, %v774
  %v946 = vpack.c.b16 %v777, %v776
  %v947 = vpack.c.b16 %v779, %v778
  %v948 = vpack.c.b16 %v781, %v780
  %v949 = vpack.c.b16 %v783, %v782
  %v950 = vpack.c.b16 %v785, %v784
  %v951 = vpack.c.b16 %v787, %v786
  %v952 = vpack.c.b16 %v789, %v788
  %v953 = vpack.c.b16 %v791, %v790
  %v954 = vpack.c.b16 %v793, %v792
  %v955 = vpack.c.b16 %v795, %v794
  %v956 = vpack.c.b16 %v797, %v796
  %v957 = vpack.c.b16 %v799, %v798
  %v958 = vpack.c.b16 %v801, %v800
  %v959 = vpack.c.b16 %v803, %v802
  %v960 = vpack.c.b16 %v805, %v804
  %v961 = vpack.c.b16 %v807, %v806
  %v962 = vpack.c.b16 %v809, %v808
  %v963 = vpack.c.b16 %v811, %v810
  %v964 = vpack.c.b16 %v813, %v812
  %v965 = vpack.c.b16 %v815, %v814
  %v966 = vpack.c.b16 %v817, %v816
  %v967 = vpack.c.b16 %v819, %v818
  %v968 = vpack.c.b16 %v821, %v820
  %v969 = vpack.c.b16 %v823, %v822
  %v970 = vpack.c.b16 %v825, %v824
  %v971 = vpack.c.b16 %v827, %v826
  %v972 = vpack.c.b16 %v829, %v828
  %v973 = vpack.c.b16 %v831, %v830
  %v974 = vpack.c.b16 %v833, %v832
  %v975 = vpack.c.b16 %v835, %v834
  %v976 = vpack.c.b16 %v837, %v836
  %v977 = vpack.c.b16 %v839, %v838
  %v978 = vpack.c.b16 %v841, %v840
  %v979 = vpack.c.b16 %v843, %v842
  %v980 = vpack.c.b16 %v845, %v844
  %v981 = vpack.c.b16 %v847, %v846
  %v982 = vpack.c.b16 %v849, %v848
  %v983 = vpack.c.b16 %v851, %v850
  %v984 = vpack.c.b16 %v853, %v852
  %v985 = vpack.c.b16 %v855, %v854
  %v986 = vpack.c.b16 %v857, %v856
  %v987 = vpack.c.b16 %v859, %v858
  %1116 = vmatprep.subr.bf16.mxu0 0
  %1117 = vmatpush1.bf16.msra.mxu0 %v867
  %1118 = vmatprep.subr.bf16.mxu0 0
  %1119 = vmatpush1.bf16.msra.mxu0 %v866
  %1120 = vmatprep.subr.bf16.mxu0 0
  %1121 = vmatpush1.bf16.msra.mxu0 %v865
  %1122 = vmatprep.subr.bf16.mxu0 0
  %1123 = vmatpush1.bf16.msra.mxu0 %v864
  %1124 = vmatprep.subr.bf16.mxu0 0
  %1125 = vmatpush1.bf16.msra.mxu0 %v863
  %1126 = vmatprep.subr.bf16.mxu0 0
  %1127 = vmatpush1.bf16.msra.mxu0 %v862
  %1128 = vmatprep.subr.bf16.mxu0 0
  %1129 = vmatpush1.bf16.msra.mxu0 %v861
  %1130 = vmatprep.subr.bf16.mxu0 0
  %1131 = vmatpush1.bf16.msra.mxu0 %v860
  %1132 = vmatprep.subr.bf16.mxu0 0
  %1133 = vmatpush2.bf16.msra.mxu0 %v875
  %1134 = vmatprep.subr.bf16.mxu0 0
  %1135 = vmatpush2.bf16.msra.mxu0 %v874
  %1136 = vmatprep.subr.bf16.mxu0 0
  %1137 = vmatpush2.bf16.msra.mxu0 %v873
  %1138 = vmatprep.subr.bf16.mxu0 0
  %1139 = vmatpush2.bf16.msra.mxu0 %v872
  %1140 = vmatprep.subr.bf16.mxu0 0
  %1141 = vmatpush2.bf16.msra.mxu0 %v871
  %1142 = vmatprep.subr.bf16.mxu0 0
  %1143 = vmatpush2.bf16.msra.mxu0 %v870
  %1144 = vmatprep.subr.bf16.mxu0 0
  %1145 = vmatpush2.bf16.msra.mxu0 %v869
  %1146 = vmatprep.subr.bf16.mxu0 0
  %1147 = vmatpush2.bf16.msra.mxu0 %v868
  %1148 = vmatprep.mubr.bf16.mxu0 %v317
  %1149 = vmatmul.mubr.bf16.gmra.mxu0 %v316
  %v1150 = vpop.f32.mrf.mxu0
  %v1151 = vadd.f32 %v290, %v1150
  %v1152 = vpop.f32.mrf.mxu0
  %v1153 = vpop.f32.mrf.mxu0
  %v1154 = vpop.f32.mrf.mxu0
  %1155 = vdwg.mxu0
  %1156 = vmatprep.subr.bf16.mxu0 0
  %1157 = vmatpush1.bf16.msra.mxu0 %v883
  %1158 = vmatprep.subr.bf16.mxu0 0
  %1159 = vmatpush1.bf16.msra.mxu0 %v882
  %1160 = vmatprep.subr.bf16.mxu0 0
  %1161 = vmatpush1.bf16.msra.mxu0 %v881
  %1162 = vmatprep.subr.bf16.mxu0 0
  %1163 = vmatpush1.bf16.msra.mxu0 %v880
  %1164 = vmatprep.subr.bf16.mxu0 0
  %1165 = vmatpush1.bf16.msra.mxu0 %v879
  %1166 = vmatprep.subr.bf16.mxu0 0
  %1167 = vmatpush1.bf16.msra.mxu0 %v878
  %1168 = vmatprep.subr.bf16.mxu0 0
  %1169 = vmatpush1.bf16.msra.mxu0 %v877
  %1170 = vmatprep.subr.bf16.mxu0 0
  %1171 = vmatpush1.bf16.msra.mxu0 %v876
  %1172 = vmatprep.subr.bf16.mxu0 0
  %1173 = vmatpush2.bf16.msra.mxu0 %v891
  %1174 = vmatprep.subr.bf16.mxu0 0
  %1175 = vmatpush2.bf16.msra.mxu0 %v890
  %1176 = vmatprep.subr.bf16.mxu0 0
  %1177 = vmatpush2.bf16.msra.mxu0 %v889
  %1178 = vmatprep.subr.bf16.mxu0 0
  %1179 = vmatpush2.bf16.msra.mxu0 %v888
  %1180 = vmatprep.subr.bf16.mxu0 0
  %1181 = vmatpush2.bf16.msra.mxu0 %v887
  %1182 = vmatprep.subr.bf16.mxu0 0
  %1183 = vmatpush2.bf16.msra.mxu0 %v886
  %1184 = vmatprep.subr.bf16.mxu0 0
  %1185 = vmatpush2.bf16.msra.mxu0 %v885
  %1186 = vmatprep.subr.bf16.mxu0 0
  %1187 = vmatpush2.bf16.msra.mxu0 %v884
  %1188 = vmatprep.mubr.bf16.mxu0 %v319
  %1189 = vmatmul.mubr.bf16.gmra.mxu0 %v318
  %v1190 = vpop.f32.mrf.mxu0
  %v1191 = vadd.f32 %v1151, %v1190
  %v1192 = vpop.f32.mrf.mxu0
  %v1193 = vpop.f32.mrf.mxu0
  %v1194 = vpop.f32.mrf.mxu0
  %1195 = vdwg.mxu0
  %1196 = vmatprep.subr.bf16.mxu0 0
  %1197 = vmatpush1.bf16.msra.mxu0 %v899
  %1198 = vmatprep.subr.bf16.mxu0 0
  %1199 = vmatpush1.bf16.msra.mxu0 %v898
  %1200 = vmatprep.subr.bf16.mxu0 0
  %1201 = vmatpush1.bf16.msra.mxu0 %v897
  %1202 = vmatprep.subr.bf16.mxu0 0
  %1203 = vmatpush1.bf16.msra.mxu0 %v896
  %1204 = vmatprep.subr.bf16.mxu0 0
  %1205 = vmatpush1.bf16.msra.mxu0 %v895
  %1206 = vmatprep.subr.bf16.mxu0 0
  %1207 = vmatpush1.bf16.msra.mxu0 %v894
  %1208 = vmatprep.subr.bf16.mxu0 0
  %1209 = vmatpush1.bf16.msra.mxu0 %v893
  %1210 = vmatprep.subr.bf16.mxu0 0
  %1211 = vmatpush1.bf16.msra.mxu0 %v892
  %1212 = vmatprep.subr.bf16.mxu0 0
  %1213 = vmatpush2.bf16.msra.mxu0 %v907
  %1214 = vmatprep.subr.bf16.mxu0 0
  %1215 = vmatpush2.bf16.msra.mxu0 %v906
  %1216 = vmatprep.subr.bf16.mxu0 0
  %1217 = vmatpush2.bf16.msra.mxu0 %v905
  %1218 = vmatprep.subr.bf16.mxu0 0
  %1219 = vmatpush2.bf16.msra.mxu0 %v904
  %1220 = vmatprep.subr.bf16.mxu0 0
  %1221 = vmatpush2.bf16.msra.mxu0 %v903
  %1222 = vmatprep.subr.bf16.mxu0 0
  %1223 = vmatpush2.bf16.msra.mxu0 %v902
  %1224 = vmatprep.subr.bf16.mxu0 0
  %1225 = vmatpush2.bf16.msra.mxu0 %v901
  %1226 = vmatprep.subr.bf16.mxu0 0
  %1227 = vmatpush2.bf16.msra.mxu0 %v900
  %1228 = vmatprep.mubr.bf16.mxu0 %v321
  %1229 = vmatmul.mubr.bf16.gmra.mxu0 %v320
  %v1230 = vpop.f32.mrf.mxu0
  %v1231 = vadd.f32 %v1191, %v1230
  %v1232 = vpop.f32.mrf.mxu0
  %v1233 = vpop.f32.mrf.mxu0
  %v1234 = vpop.f32.mrf.mxu0
  %1235 = vdwg.mxu0
  %1236 = vmatprep.subr.bf16.mxu0 0
  %1237 = vmatpush1.bf16.msra.mxu0 %v915
  %1238 = vmatprep.subr.bf16.mxu0 0
  %1239 = vmatpush1.bf16.msra.mxu0 %v914
  %1240 = vmatprep.subr.bf16.mxu0 0
  %1241 = vmatpush1.bf16.msra.mxu0 %v913
  %1242 = vmatprep.subr.bf16.mxu0 0
  %1243 = vmatpush1.bf16.msra.mxu0 %v912
  %1244 = vmatprep.subr.bf16.mxu0 0
  %1245 = vmatpush1.bf16.msra.mxu0 %v911
  %1246 = vmatprep.subr.bf16.mxu0 0
  %1247 = vmatpush1.bf16.msra.mxu0 %v910
  %1248 = vmatprep.subr.bf16.mxu0 0
  %1249 = vmatpush1.bf16.msra.mxu0 %v909
  %1250 = vmatprep.subr.bf16.mxu0 0
  %1251 = vmatpush1.bf16.msra.mxu0 %v908
  %1252 = vmatprep.subr.bf16.mxu0 0
  %1253 = vmatpush2.bf16.msra.mxu0 %v923
  %1254 = vmatprep.subr.bf16.mxu0 0
  %1255 = vmatpush2.bf16.msra.mxu0 %v922
  %1256 = vmatprep.subr.bf16.mxu0 0
  %1257 = vmatpush2.bf16.msra.mxu0 %v921
  %1258 = vmatprep.subr.bf16.mxu0 0
  %1259 = vmatpush2.bf16.msra.mxu0 %v920
  %1260 = vmatprep.subr.bf16.mxu0 0
  %1261 = vmatpush2.bf16.msra.mxu0 %v919
  %1262 = vmatprep.subr.bf16.mxu0 0
  %1263 = vmatpush2.bf16.msra.mxu0 %v918
  %1264 = vmatprep.subr.bf16.mxu0 0
  %1265 = vmatpush2.bf16.msra.mxu0 %v917
  %1266 = vmatprep.subr.bf16.mxu0 0
  %1267 = vmatpush2.bf16.msra.mxu0 %v916
  %1268 = vmatprep.mubr.bf16.mxu0 %v323
  %1269 = vmatmul.mubr.bf16.gmra.mxu0 %v322
  %v1270 = vpop.f32.mrf.mxu0
  %v1271 = vadd.f32 %v1231, %v1270
  %v1272 = vpop.f32.mrf.mxu0
  %v1273 = vpop.f32.mrf.mxu0
  %v1274 = vpop.f32.mrf.mxu0
  %1275 = vdwg.mxu0
  %1276 = vmatprep.subr.bf16.mxu0 0
  %1277 = vmatpush1.bf16.msra.mxu0 %v931
  %1278 = vmatprep.subr.bf16.mxu0 0
  %1279 = vmatpush1.bf16.msra.mxu0 %v930
  %1280 = vmatprep.subr.bf16.mxu0 0
  %1281 = vmatpush1.bf16.msra.mxu0 %v929
  %1282 = vmatprep.subr.bf16.mxu0 0
  %1283 = vmatpush1.bf16.msra.mxu0 %v928
  %1284 = vmatprep.subr.bf16.mxu0 0
  %1285 = vmatpush1.bf16.msra.mxu0 %v927
  %1286 = vmatprep.subr.bf16.mxu0 0
  %1287 = vmatpush1.bf16.msra.mxu0 %v926
  %1288 = vmatprep.subr.bf16.mxu0 0
  %1289 = vmatpush1.bf16.msra.mxu0 %v925
  %1290 = vmatprep.subr.bf16.mxu0 0
  %1291 = vmatpush1.bf16.msra.mxu0 %v924
  %1292 = vmatprep.subr.bf16.mxu0 0
  %1293 = vmatpush2.bf16.msra.mxu0 %v939
  %1294 = vmatprep.subr.bf16.mxu0 0
  %1295 = vmatpush2.bf16.msra.mxu0 %v938
  %1296 = vmatprep.subr.bf16.mxu0 0
  %1297 = vmatpush2.bf16.msra.mxu0 %v937
  %1298 = vmatprep.subr.bf16.mxu0 0
  %1299 = vmatpush2.bf16.msra.mxu0 %v936
  %1300 = vmatprep.subr.bf16.mxu0 0
  %1301 = vmatpush2.bf16.msra.mxu0 %v935
  %1302 = vmatprep.subr.bf16.mxu0 0
  %1303 = vmatpush2.bf16.msra.mxu0 %v934
  %1304 = vmatprep.subr.bf16.mxu0 0
  %1305 = vmatpush2.bf16.msra.mxu0 %v933
  %1306 = vmatprep.subr.bf16.mxu0 0
  %1307 = vmatpush2.bf16.msra.mxu0 %v932
  %1308 = vmatprep.mubr.bf16.mxu0 %v325
  %1309 = vmatmul.mubr.bf16.gmra.mxu0 %v324
  %v1310 = vpop.f32.mrf.mxu0
  %v1311 = vadd.f32 %v1271, %v1310
  %v1312 = vpop.f32.mrf.mxu0
  %v1313 = vpop.f32.mrf.mxu0
  %v1314 = vpop.f32.mrf.mxu0
  %1315 = vdwg.mxu0
  %1316 = vmatprep.subr.bf16.mxu0 0
  %1317 = vmatpush1.bf16.msra.mxu0 %v947
  %1318 = vmatprep.subr.bf16.mxu0 0
  %1319 = vmatpush1.bf16.msra.mxu0 %v946
  %1320 = vmatprep.subr.bf16.mxu0 0
  %1321 = vmatpush1.bf16.msra.mxu0 %v945
  %1322 = vmatprep.subr.bf16.mxu0 0
  %1323 = vmatpush1.bf16.msra.mxu0 %v944
  %1324 = vmatprep.subr.bf16.mxu0 0
  %1325 = vmatpush1.bf16.msra.mxu0 %v943
  %1326 = vmatprep.subr.bf16.mxu0 0
  %1327 = vmatpush1.bf16.msra.mxu0 %v942
  %1328 = vmatprep.subr.bf16.mxu0 0
  %1329 = vmatpush1.bf16.msra.mxu0 %v941
  %1330 = vmatprep.subr.bf16.mxu0 0
  %1331 = vmatpush1.bf16.msra.mxu0 %v940
  %1332 = vmatprep.subr.bf16.mxu0 0
  %1333 = vmatpush2.bf16.msra.mxu0 %v955
  %1334 = vmatprep.subr.bf16.mxu0 0
  %1335 = vmatpush2.bf16.msra.mxu0 %v954
  %1336 = vmatprep.subr.bf16.mxu0 0
  %1337 = vmatpush2.bf16.msra.mxu0 %v953
  %1338 = vmatprep.subr.bf16.mxu0 0
  %1339 = vmatpush2.bf16.msra.mxu0 %v952
  %1340 = vmatprep.subr.bf16.mxu0 0
  %1341 = vmatpush2.bf16.msra.mxu0 %v951
  %1342 = vmatprep.subr.bf16.mxu0 0
  %1343 = vmatpush2.bf16.msra.mxu0 %v950
  %1344 = vmatprep.subr.bf16.mxu0 0
  %1345 = vmatpush2.bf16.msra.mxu0 %v949
  %1346 = vmatprep.subr.bf16.mxu0 0
  %1347 = vmatpush2.bf16.msra.mxu0 %v948
  %1348 = vmatprep.mubr.bf16.mxu0 %v327
  %1349 = vmatmul.mubr.bf16.gmra.mxu0 %v326
  %v1350 = vpop.f32.mrf.mxu0
  %v1351 = vadd.f32 %v1311, %v1350
  %v1352 = vpop.f32.mrf.mxu0
  %v1353 = vpop.f32.mrf.mxu0
  %v1354 = vpop.f32.mrf.mxu0
  %1355 = vdwg.mxu0
  %1356 = vmatprep.subr.bf16.mxu0 0
  %1357 = vmatpush1.bf16.msra.mxu0 %v963
  %1358 = vmatprep.subr.bf16.mxu0 0
  %1359 = vmatpush1.bf16.msra.mxu0 %v962
  %1360 = vmatprep.subr.bf16.mxu0 0
  %1361 = vmatpush1.bf16.msra.mxu0 %v961
  %1362 = vmatprep.subr.bf16.mxu0 0
  %1363 = vmatpush1.bf16.msra.mxu0 %v960
  %1364 = vmatprep.subr.bf16.mxu0 0
  %1365 = vmatpush1.bf16.msra.mxu0 %v959
  %1366 = vmatprep.subr.bf16.mxu0 0
  %1367 = vmatpush1.bf16.msra.mxu0 %v958
  %1368 = vmatprep.subr.bf16.mxu0 0
  %1369 = vmatpush1.bf16.msra.mxu0 %v957
  %1370 = vmatprep.subr.bf16.mxu0 0
  %1371 = vmatpush1.bf16.msra.mxu0 %v956
  %1372 = vmatprep.subr.bf16.mxu0 0
  %1373 = vmatpush2.bf16.msra.mxu0 %v971
  %1374 = vmatprep.subr.bf16.mxu0 0
  %1375 = vmatpush2.bf16.msra.mxu0 %v970
  %1376 = vmatprep.subr.bf16.mxu0 0
  %1377 = vmatpush2.bf16.msra.mxu0 %v969
  %1378 = vmatprep.subr.bf16.mxu0 0
  %1379 = vmatpush2.bf16.msra.mxu0 %v968
  %1380 = vmatprep.subr.bf16.mxu0 0
  %1381 = vmatpush2.bf16.msra.mxu0 %v967
  %1382 = vmatprep.subr.bf16.mxu0 0
  %1383 = vmatpush2.bf16.msra.mxu0 %v966
  %1384 = vmatprep.subr.bf16.mxu0 0
  %1385 = vmatpush2.bf16.msra.mxu0 %v965
  %1386 = vmatprep.subr.bf16.mxu0 0
  %1387 = vmatpush2.bf16.msra.mxu0 %v964
  %1388 = vmatprep.mubr.bf16.mxu0 %v329
  %1389 = vmatmul.mubr.bf16.gmra.mxu0 %v328
  %v1390 = vpop.f32.mrf.mxu0
  %v1391 = vadd.f32 %v1351, %v1390
  %v1392 = vpop.f32.mrf.mxu0
  %v1393 = vpop.f32.mrf.mxu0
  %v1394 = vpop.f32.mrf.mxu0
  %1395 = vdwg.mxu0
  %1396 = vmatprep.subr.bf16.mxu0 0
  %1397 = vmatpush1.bf16.msra.mxu0 %v979
  %1398 = vmatprep.subr.bf16.mxu0 0
  %1399 = vmatpush1.bf16.msra.mxu0 %v978
  %1400 = vmatprep.subr.bf16.mxu0 0
  %1401 = vmatpush1.bf16.msra.mxu0 %v977
  %1402 = vmatprep.subr.bf16.mxu0 0
  %1403 = vmatpush1.bf16.msra.mxu0 %v976
  %1404 = vmatprep.subr.bf16.mxu0 0
  %1405 = vmatpush1.bf16.msra.mxu0 %v975
  %1406 = vmatprep.subr.bf16.mxu0 0
  %1407 = vmatpush1.bf16.msra.mxu0 %v974
  %1408 = vmatprep.subr.bf16.mxu0 0
  %1409 = vmatpush1.bf16.msra.mxu0 %v973
  %1410 = vmatprep.subr.bf16.mxu0 0
  %1411 = vmatpush1.bf16.msra.mxu0 %v972
  %1412 = vmatprep.subr.bf16.mxu0 0
  %1413 = vmatpush2.bf16.msra.mxu0 %v987
  %1414 = vmatprep.subr.bf16.mxu0 0
  %1415 = vmatpush2.bf16.msra.mxu0 %v986
  %1416 = vmatprep.subr.bf16.mxu0 0
  %1417 = vmatpush2.bf16.msra.mxu0 %v985
  %1418 = vmatprep.subr.bf16.mxu0 0
  %1419 = vmatpush2.bf16.msra.mxu0 %v984
  %1420 = vmatprep.subr.bf16.mxu0 0
  %1421 = vmatpush2.bf16.msra.mxu0 %v983
  %1422 = vmatprep.subr.bf16.mxu0 0
  %1423 = vmatpush2.bf16.msra.mxu0 %v982
  %1424 = vmatprep.subr.bf16.mxu0 0
  %1425 = vmatpush2.bf16.msra.mxu0 %v981
  %1426 = vmatprep.subr.bf16.mxu0 0
  %1427 = vmatpush2.bf16.msra.mxu0 %v980
  %1428 = vmatprep.mubr.bf16.mxu0 %v331
  %1429 = vmatmul.mubr.bf16.gmra.mxu0 %v330
  %v1430 = vpop.f32.mrf.mxu0
  %v1431 = vadd.f32 %v1391, %v1430
  %v1432 = vpop.f32.mrf.mxu0
  %v1433 = vpop.f32.mrf.mxu0
  %v1434 = vpop.f32.mrf.mxu0
  %1435 = vdwg.mxu0
  %v1436 = vmax.f32 %v1431, 0.0
  %v1437 = vpack.c.bf16 %v1436, %v1436
  %v1438 = vld [vmem:[%s3] sm:$0xf]
  %v1439 = vld [vmem:[%s3 + $0x4] sm:$0xf]
  %v1440 = vld [vmem:[%s3 + $0x8] sm:$0xf]
  %v1441 = vld [vmem:[%s3 + $0xc] sm:$0xf]
  %v1442 = vld [vmem:[%s3 + $0x10] sm:$0xf]
  %v1443 = vld [vmem:[%s3 + $0x14] sm:$0xf]
  %v1444 = vld [vmem:[%s3 + $0x18] sm:$0xf]
  %v1445 = vld [vmem:[%s3 + $0x1c] sm:$0xf]
  %v1446 = vld [vmem:[%s3 + $0x20] sm:$0xf]
  %v1447 = vld [vmem:[%s3 + $0x24] sm:$0xf]
  %v1448 = vld [vmem:[%s3 + $0x28] sm:$0xf]
  %v1449 = vld [vmem:[%s3 + $0x2c] sm:$0xf]
  %v1450 = vld [vmem:[%s3 + $0x30] sm:$0xf]
  %v1451 = vld [vmem:[%s3 + $0x34] sm:$0xf]
  %v1452 = vld [vmem:[%s3 + $0x38] sm:$0xf]
  %v1453 = vld [vmem:[%s3 + $0x3c] sm:$0xf]
  %v1454 = vld [vmem:[%s4] sm:$0x1]
  %v1456 = vlaneseq
  %v1457 = vshrl.u32 %v1456, 7
  %v1458 = vsub.s32 0, %v1457
  %v1459 = vrot.slane %v1454, %v1458
  %v1477 = vunpack.c.l.b16 %v1438
  %v1478 = vunpack.c.l.b16 %v1439
  %v1479 = vunpack.c.l.b16 %v1440
  %v1480 = vunpack.c.l.b16 %v1441
  %v1481 = vunpack.c.l.b16 %v1442
  %v1482 = vunpack.c.l.b16 %v1443
  %v1483 = vunpack.c.l.b16 %v1444
  %v1484 = vunpack.c.l.b16 %v1445
  %v1485 = vunpack.c.l.b16 %v1446
  %v1486 = vunpack.c.l.b16 %v1447
  %v1487 = vunpack.c.l.b16 %v1448
  %v1488 = vunpack.c.l.b16 %v1449
  %v1489 = vunpack.c.l.b16 %v1450
  %v1490 = vunpack.c.l.b16 %v1451
  %v1491 = vunpack.c.l.b16 %v1452
  %v1492 = vunpack.c.l.b16 %v1453
  %v1493 = vpack.c.b16 %v1478, %v1477
  %v1494 = vpack.c.b16 %v1480, %v1479
  %v1495 = vpack.c.b16 %v1482, %v1481
  %v1496 = vpack.c.b16 %v1484, %v1483
  %v1497 = vpack.c.b16 %v1486, %v1485
  %v1498 = vpack.c.b16 %v1488, %v1487
  %v1499 = vpack.c.b16 %v1490, %v1489
  %v1500 = vpack.c.b16 %v1492, %v1491
  %1509 = vmatprep.subr.bf16.mxu0 0
  %1510 = vmatpush1.bf16.msra.mxu0 %v1500
  %1511 = vmatprep.subr.bf16.mxu0 0
  %1512 = vmatpush1.bf16.msra.mxu0 %v1499
  %1513 = vmatprep.subr.bf16.mxu0 0
  %1514 = vmatpush1.bf16.msra.mxu0 %v1498
  %1515 = vmatprep.subr.bf16.mxu0 0
  %1516 = vmatpush1.bf16.msra.mxu0 %v1497
  %1517 = vmatprep.subr.bf16.mxu0 0
  %1518 = vmatpush1.bf16.msra.mxu0 %v1496
  %1519 = vmatprep.subr.bf16.mxu0 0
  %1520 = vmatpush1.bf16.msra.mxu0 %v1495
  %1521 = vmatprep.subr.bf16.mxu0 0
  %1522 = vmatpush1.bf16.msra.mxu0 %v1494
  %1523 = vmatprep.subr.bf16.mxu0 0
  %1524 = vmatpush1.bf16.msra.mxu0 %v1493
  %1525 = vmatprep.subr.bf16.mxu0 0
  %1526 = vmatpush2.bf16.msra.mxu0 0
  %1527 = vmatprep.subr.bf16.mxu0 0
  %1528 = vmatpush2.bf16.msra.mxu0 0
  %1529 = vmatprep.subr.bf16.mxu0 0
  %1530 = vmatpush2.bf16.msra.mxu0 0
  %1531 = vmatprep.subr.bf16.mxu0 0
  %1532 = vmatpush2.bf16.msra.mxu0 0
  %1533 = vmatprep.subr.bf16.mxu0 0
  %1534 = vmatpush2.bf16.msra.mxu0 0
  %1535 = vmatprep.subr.bf16.mxu0 0
  %1536 = vmatpush2.bf16.msra.mxu0 0
  %1537 = vmatprep.subr.bf16.mxu0 0
  %1538 = vmatpush2.bf16.msra.mxu0 0
  %1539 = vmatprep.subr.bf16.mxu0 0
  %1540 = vmatpush2.bf16.msra.mxu0 0
  %1541 = vmatprep.mubr.bf16.mxu0 0
  %1542 = vmatmul.mubr.bf16.gmra.mxu0 %v1437
  %v1543 = vpop.f32.mrf.mxu0
  %v1544 = vadd.f32 %v1459, %v1543
  %v1545 = vpop.f32.mrf.mxu0
  %v1546 = vpop.f32.mrf.mxu0
  %v1547 = vpop.f32.mrf.mxu0
  %1548 = vdwg.mxu0
  %1549 = vst [vmem:[%s5] sm:$0xff] %v1544
  // Predicated region
  $region22: #{classifier_forward.5} parent=0 // pred_check
    _
  $region23: #{classifier_forward.5} parent=0 // pred_check_branch
    %1551 = sbr.rel (0) target = $region25
  $region24: #{classifier_forward.5} parent=0 // pred_region
    _
  $region25: #{classifier_forward.5} parent=0 // pred_fallthru
    _
  // Predicated region
  $region26: #{classifier_forward.5} parent=0 // pred_check
    _
  $region27: #{classifier_forward.5} parent=0 // pred_check_branch
    %1553 = sbr.rel (0) target = $region29
  $region28: #{classifier_forward.5} parent=0 // pred_region
    _
  $region29: #{classifier_forward.5} parent=0 // pred_fallthru
    _

</llo_original>
